<compile_context>
chip_gen: v7x
topology: tpu7x:2x2x1
jax: 0.10.0
libtpu: 0.0.40
codegen_flags: <defaults>
</compile_context>

<pallas_src>
import math

import jax
import jax.numpy as jnp
from jax import lax
from jax.experimental import pallas as pl
from jax.experimental.pallas import tpu as pltpu


def _pick_tile(dim: int, target: int, align: int) -> int:
    """Largest multiple of `align` <= target that divides `dim`, else the full dim."""
    t = min(target, dim)
    t = (t // align) * align
    while t >= align:
        if dim % t == 0:
            return t
        t -= align
    return dim


# ----------------------------------------------------------------------------
# Kernel 1: GPT-2 Conv1D (y = x @ W + b), K-tiled, bf16 operands / f32 accumulator
# ----------------------------------------------------------------------------
def _conv1d_kernel(x_ref, w_ref, b_ref, o_ref, acc_ref):
    k = pl.program_id(2)

    @pl.when(k == 0)
    def _init():
        acc_ref[...] = jnp.zeros_like(acc_ref)

    acc_ref[...] += jnp.dot(x_ref[...], w_ref[...], preferred_element_type=jnp.float32)

    @pl.when(k == pl.num_programs(2) - 1)
    def _finalize():
        o_ref[...] = (acc_ref[...] + b_ref[...]).astype(o_ref.dtype)


def conv1d(x2d, w, b, *, out_dtype=None, tm=512, tn=512, tk=512):
    """x2d: (M, K), w: (K, N), b: (N,) -> (M, N) of out_dtype (default x2d.dtype)."""
    M, K = x2d.shape
    K2, N = w.shape
    assert K == K2
    out_dtype = x2d.dtype if out_dtype is None else out_dtype

    # bf16 operands for MXU peak + halved HBM traffic; f32 bias / accumulation.
    x_bf = x2d.astype(jnp.bfloat16)
    w_bf = w.astype(jnp.bfloat16)
    b_f32 = b.astype(jnp.float32).reshape(1, N)

    tm = _pick_tile(M, tm, 8)
    tn = _pick_tile(N, tn, 128)
    tk = _pick_tile(K, tk, 128)
    grid = (M // tm, N // tn, K // tk)

    out_isz = jnp.dtype(out_dtype).itemsize
    cost = pl.CostEstimate(
        flops=2 * M * N * K,
        transcendentals=0,
        bytes_accessed=2 * (M * K + K * N) + 4 * N + out_isz * M * N,
    )
    return pl.pallas_call(
        _conv1d_kernel,
        out_shape=jax.ShapeDtypeStruct((M, N), out_dtype),
        grid=grid,
        in_specs=[
            pl.BlockSpec((tm, tk), lambda i, j, k: (i, k)),
            pl.BlockSpec((tk, tn), lambda i, j, k: (k, j)),
            pl.BlockSpec((1, tn), lambda i, j, k: (0, j)),
        ],
        out_specs=pl.BlockSpec((tm, tn), lambda i, j, k: (i, j)),
        scratch_shapes=[pltpu.VMEM((tm, tn), jnp.float32)],
        compiler_params=pltpu.CompilerParams(
            dimension_semantics=("parallel", "parallel", "arbitrary"),
            vmem_limit_bytes=32 * 1024 * 1024,
        ),
        cost_estimate=cost,
    )(x_bf, w_bf, b_f32)


# ----------------------------------------------------------------------------
# Kernel 2: multi-head causal flash attention over the (B, S, 3E) qkv slab.
# Grid = (batch, head_group, lower-triangular (q_blk, kv_blk) table).
# ----------------------------------------------------------------------------
def _head_group(E: int, n_head: int):
    """Lane-aligned head grouping: group width, heads per group, number of groups."""
    assert E % n_head == 0
    d_head = E // n_head
    if d_head >= 128:
        assert d_head % 128 == 0, "d_head >= 128 must be a multiple of 128"
        gw = d_head
    else:
        assert 128 % d_head == 0 and E % 128 == 0, (
            "need 128 % d_head == 0 and n_embd % 128 == 0 for lane-aligned head groups"
        )
        gw = 128
    return gw, gw // d_head, E // gw


def _make_flash_kernel(hpg: int, d_head: int, tq: int, gw: int):
    scale = 1.0 / math.sqrt(d_head)   # Python float: folded into q, no captured constant
    NEG = -1e30                       # Python float (compile fix: was jnp.float32 scalar)

    def kernel(qi_tbl, ki_tbl, q_ref, k_ref, v_ref, o_ref, m_sc, l_sc, acc_sc):
        # q_ref/k_ref/v_ref/o_ref: (1, tq, gw) bf16 head-group tiles.
        t = pl.program_id(2)
        qi = qi_tbl[t]
        ki = ki_tbl[t]

        @pl.when(ki == 0)          # first kv block of this q row
        def _init():
            m_sc[...] = jnp.full_like(m_sc, NEG)
            l_sc[...] = jnp.zeros_like(l_sc)
            acc_sc[...] = jnp.zeros_like(acc_sc)

        def update(apply_mask: bool):
            # Fold 1/sqrt(d) into q once per (tq, gw) tile (cheaper than scaling scores).
            q = (q_ref[0] * scale).astype(jnp.bfloat16)
            k = k_ref[0].astype(jnp.bfloat16)
            v = v_ref[0].astype(jnp.bfloat16)
            if apply_mask:
                # Diagonal block: q_start == k_start and tq == tk -> local indices suffice.
                row = lax.broadcasted_iota(jnp.int32, (tq, tq), 0)
                col = lax.broadcasted_iota(jnp.int32, (tq, tq), 1)
                keep = row >= col
            for h in range(hpg):
                sl = slice(h * d_head, (h + 1) * d_head)
                # QK^T contracting both last dims: MXU bf16, f32 accumulation.
                s = lax.dot_general(
                    q[:, sl], k[:, sl], (((1,), (1,)), ((), ())),
                    preferred_element_type=jnp.float32,
                )
                if apply_mask:
                    s = jnp.where(keep, s, NEG)
                m_prev = m_sc[h]
                m_new = jnp.maximum(m_prev, jnp.max(s, axis=-1, keepdims=True))
                alpha = jnp.exp(m_prev - m_new)
                p = jnp.exp(s - m_new)
                l_sc[h] = alpha * l_sc[h] + jnp.sum(p, axis=-1, keepdims=True)
                acc_sc[:, sl] = alpha * acc_sc[:, sl] + lax.dot_general(
                    p.astype(jnp.bfloat16), v[:, sl], (((1,), (0,)), ((), ())),
                    preferred_element_type=jnp.float32,
                )
                m_sc[h] = m_new

        @pl.when(ki != qi)        # strictly below the diagonal: fully visible, no mask
        def _():
            update(apply_mask=False)

        @pl.when(ki == qi)        # diagonal block: apply the causal mask
        def _():
            update(apply_mask=True)

        @pl.when(ki == qi)        # the diagonal block is the last kv block of this q row
        def _finalize():
            for h in range(hpg):
                sl = slice(h * d_head, (h + 1) * d_head)
                # Exact division (once per q row; approx reciprocal not needed here).
                acc_sc[:, sl] = acc_sc[:, sl] / l_sc[h]
            o_ref[0] = acc_sc[...].astype(o_ref.dtype)   # single lane-dense (tq, gw) store

    return kernel


def flash_causal_mha(qkv, n_head, *, tq=256):
    """qkv: (B, S, 3E) output of c_attn (bf16 preferred). Returns (B, S, E) merged heads."""
    B, S, E3 = qkv.shape
    E = E3 // 3
    assert 3 * E == E3
    gw, hpg, n_groups = _head_group(E, n_head)
    d_head = E // n_head
    tq = _pick_tile(S, tq, 8)
    nq = S // tq

    # Lower-triangular (q_block, kv_block) table: upper-triangular blocks are never
    # fetched or iterated. kv index ascends within each q row (required for the
    # online-softmax init/finalize conditions), so keep this grid axis innermost
    # and "arbitrary".
    qis, kis = [], []
    for q_i in range(nq):
        for k_i in range(q_i + 1):
            qis.append(q_i)
            kis.append(k_i)
    T = len(qis)
    qi_tbl = jnp.asarray(qis, dtype=jnp.int32)
    ki_tbl = jnp.asarray(kis, dtype=jnp.int32)

    kernel = _make_flash_kernel(hpg, d_head, tq, gw)
    ngE = E // gw   # last-axis block offset between the Q / K / V thirds of the slab

    isz = jnp.dtype(qkv.dtype).itemsize
    cost = pl.CostEstimate(
        flops=4 * B * n_head * T * tq * tq * d_head,            # QK^T + PV, triangular
        transcendentals=B * n_head * T * tq * tq,               # exp, triangular
        bytes_accessed=isz * (B * n_groups * (nq + 2 * T) * tq * gw + B * S * E),
    )
    return pl.pallas_call(
        kernel,
        out_shape=jax.ShapeDtypeStruct((B, S, E), qkv.dtype),
        grid_spec=pltpu.PrefetchScalarGridSpec(
            num_scalar_prefetch=2,
            grid=(B, n_groups, T),
            in_specs=[
                pl.BlockSpec((1, tq, gw), lambda b, g, t, qt, kt: (b, qt[t], g)),
                pl.BlockSpec((1, tq, gw), lambda b, g, t, qt, kt: (b, kt[t], ngE + g)),
                pl.BlockSpec((1, tq, gw), lambda b, g, t, qt, kt: (b, kt[t], 2 * ngE + g)),
            ],
            out_specs=pl.BlockSpec((1, tq, gw), lambda b, g, t, qt, kt: (b, qt[t], g)),
            scratch_shapes=[
                pltpu.VMEM((hpg, tq, 1), jnp.float32),   # running max m (per head)
                pltpu.VMEM((hpg, tq, 1), jnp.float32),   # running sum l (per head)
                pltpu.VMEM((tq, gw), jnp.float32),       # lane-dense f32 output accumulator
            ],
        ),
        compiler_params=pltpu.CompilerParams(
            dimension_semantics=("parallel", "parallel", "arbitrary"),
            vmem_limit_bytes=32 * 1024 * 1024,
        ),
        cost_estimate=cost,
    )(qi_tbl, ki_tbl, qkv, qkv, qkv)


# ----------------------------------------------------------------------------
# Full Attention.forward (eval mode, no attention_mask, no output_attentions)
# ----------------------------------------------------------------------------
def attention_forward(x, w_attn, b_attn, w_proj, b_proj, n_head, *, q_block=256):
    B, S, E = x.shape
    # c_attn -> bf16 qkv slab (halves HBM traffic into the attention kernel)
    qkv = conv1d(x.reshape(B * S, E), w_attn, b_attn, out_dtype=jnp.bfloat16)
    qkv = qkv.reshape(B, S, 3 * E)
    # Heads are taken straight out of the qkv slab inside the attention kernel
    # (no split_heads / merge_heads transposes in XLA); output is merged-heads bf16.
    y = flash_causal_mha(qkv, n_head, tq=q_block)
    # c_proj back to the input dtype
    out = conv1d(y.reshape(B * S, E), w_proj, b_proj, out_dtype=x.dtype)
    # TODO(synk): attn_dropout / proj_dropout are identity in eval mode (p only in training).
    return out.reshape(B, S, E)


# ----------------------------------------------------------------------------
# Pure-JAX reference (f32) for validation
# ----------------------------------------------------------------------------
def attention_reference(x, w_attn, b_attn, w_proj, b_proj, n_head):
    B, S, E = x.shape
    D = E // n_head
    qkv = x.reshape(B * S, E) @ w_attn + b_attn
    qkv = qkv.reshape(B, S, 3 * E)
    q, k, v = jnp.split(qkv, 3, axis=2)
    sh = lambda t: t.reshape(B, S, n_head, D).transpose(0, 2, 1, 3)
    q, k, v = sh(q), sh(k), sh(v)
    scores = jnp.einsum("bhqd,bhkd->bhqk", q, k) / math.sqrt(D)
    mask = jnp.tril(jnp.ones((S, S), dtype=bool))
    scores = jnp.where(mask, scores, -1e9)
    w = jax.nn.softmax(scores, axis=-1)
    o = jnp.einsum("bhqk,bhkd->bhqd", w, v)
    o = o.transpose(0, 2, 1, 3).reshape(B, S, E)
    return (o.reshape(B * S, E) @ w_proj + b_proj.reshape(1, -1)).reshape(B, S, E)


if __name__ == "__main__":
    # GPT-2-like small config: d_head=64 (2 heads per 128-lane group), 2 head groups,
    # and q_block=128 so the triangular grid has several q rows (nq=4, 10 kv blocks).
    batch, seq_len, n_embd, n_head = 2, 512, 256, 4

    key = jax.random.PRNGKey(0)
    k_x, k_wa, k_ba, k_wp, k_bp = jax.random.split(key, 5)

    x = jax.random.normal(k_x, (batch, seq_len, n_embd), dtype=jnp.float32)
    w_attn = 0.02 * jax.random.normal(k_wa, (n_embd, 3 * n_embd), dtype=jnp.float32)
    b_attn = 0.01 * jax.random.normal(k_ba, (3 * n_embd,), dtype=jnp.float32)
    w_proj = 0.02 * jax.random.normal(k_wp, (n_embd, n_embd), dtype=jnp.float32)
    b_proj = 0.01 * jax.random.normal(k_bp, (n_embd,), dtype=jnp.float32)

    out = attention_forward(x, w_attn, b_attn, w_proj, b_proj, n_head, q_block=128)
    out = jax.block_until_ready(out)

    ref = attention_reference(x, w_attn, b_attn, w_proj, b_proj, n_head)
    assert out.shape == (batch, seq_len, n_embd)
    max_err = float(jnp.max(jnp.abs(out.astype(jnp.float32) - ref)))
    # bf16 matmuls / bf16 qkv storage vs f32 reference -> bf16-level tolerance.
    assert jnp.allclose(out.astype(jnp.float32), ref, atol=1e-2, rtol=5e-2), max_err

    print("KERNEL_OK")
</pallas_src>

<mosaic_0001>
module attributes {stable_mosaic.version = 11 : i64} {
  func.func @_conv1d_kernel(%arg0: i32, %arg1: i32, %arg2: i32, %arg3: memref<512x256xbf16, #tpu.memory_space<vmem>>, %arg4: memref<256x384xbf16, #tpu.memory_space<vmem>>, %arg5: memref<1x384xf32, #tpu.memory_space<vmem>>, %arg6: memref<512x384xbf16, #tpu.memory_space<vmem>>, %arg7: memref<512x384xf32, #tpu.memory_space<vmem>>) attributes {dimension_semantics = [#tpu.dimension_semantics<parallel>, #tpu.dimension_semantics<parallel>, #tpu.dimension_semantics<arbitrary>], iteration_bounds = array<i64: 2, 2, 1>, scalar_prefetch = 0 : i64, scratch_operands = 1 : i64, tpu.core_type = #tpu.core_type<tc>, window_params = [{transform_indices = @transform_0, window_bounds = array<i64: 512, 256>}, {transform_indices = @transform_1, window_bounds = array<i64: 256, 384>}, {transform_indices = @transform_2, window_bounds = array<i64: 1, 384>}, {transform_indices = @transform_3, window_bounds = array<i64: 512, 384>}]} {
    %c0_i32 = arith.constant 0 : i32
    %0 = arith.cmpi eq, %arg2, %c0_i32 : i32
    %1 = arith.extui %0 : i1 to i32
    %c0_i32_0 = arith.constant 0 : i32
    %2 = arith.cmpi ne, %1, %c0_i32_0 : i32
    scf.if %2 {
      %cst_10 = arith.constant 0.000000e+00 : f32
      %12 = vector.broadcast %cst_10 : f32 to vector<512x384xf32>
      %c0_11 = arith.constant 0 : index
      %c0_12 = arith.constant 0 : index
      %13 = vector.load %arg7[%c0_11, %c0_12] : memref<512x384xf32, #tpu.memory_space<vmem>>, vector<512x384xf32>
      tpu.vector_store %arg7[%c0_11, %c0_12], %12 {strides = array<i32>} : memref<512x384xf32, #tpu.memory_space<vmem>>, vector<512x384xf32>,
    } else {
    }
    %c0 = arith.constant 0 : index
    %c0_1 = arith.constant 0 : index
    %3 = vector.load %arg7[%c0, %c0_1] : memref<512x384xf32, #tpu.memory_space<vmem>>, vector<512x384xf32>
    %c0_2 = arith.constant 0 : index
    %c0_3 = arith.constant 0 : index
    %4 = vector.load %arg3[%c0_2, %c0_3] : memref<512x256xbf16, #tpu.memory_space<vmem>>, vector<512x256xbf16>
    %c0_4 = arith.constant 0 : index
    %c0_5 = arith.constant 0 : index
    %5 = vector.load %arg4[%c0_4, %c0_5] : memref<256x384xbf16, #tpu.memory_space<vmem>>, vector<256x384xbf16>
    %cst = arith.constant dense<0.000000e+00> : vector<512x384xf32>
    %6 = tpu.matmul %4, %5, %cst {dimension_numbers = #tpu.dot_dimension_numbers<[1], [0], [0], [1], [0, 0, 1, 1], [], []>} : vector<512x256xbf16>, vector<256x384xbf16>, vector<512x384xf32> -> vector<512x384xf32>
    %7 = arith.addf %3, %6 : vector<512x384xf32>
    %c0_6 = arith.constant 0 : index
    %c0_7 = arith.constant 0 : index
    %8 = vector.load %arg7[%c0_6, %c0_7] : memref<512x384xf32, #tpu.memory_space<vmem>>, vector<512x384xf32>
    tpu.vector_store %arg7[%c0_6, %c0_7], %7 {strides = array<i32>} : memref<512x384xf32, #tpu.memory_space<vmem>>, vector<512x384xf32>,
    %c0_i32_8 = arith.constant 0 : i32
    %9 = arith.cmpi eq, %arg2, %c0_i32_8 : i32
    %10 = arith.extui %9 : i1 to i32
    %c0_i32_9 = arith.constant 0 : i32
    %11 = arith.cmpi ne, %10, %c0_i32_9 : i32
    scf.if %11 {
      %c0_10 = arith.constant 0 : index
      %c0_11 = arith.constant 0 : index
      %12 = vector.load %arg7[%c0_10, %c0_11] : memref<512x384xf32, #tpu.memory_space<vmem>>, vector<512x384xf32>
      %c0_12 = arith.constant 0 : index
      %c0_13 = arith.constant 0 : index
      %13 = vector.load %arg5[%c0_12, %c0_13] : memref<1x384xf32, #tpu.memory_space<vmem>>, vector<1x384xf32>
      %14 = vector.broadcast %13 : vector<1x384xf32> to vector<512x384xf32>
      %15 = arith.addf %12, %14 : vector<512x384xf32>
      %16 = arith.truncf %15 : vector<512x384xf32> to vector<512x384xbf16>
      %c0_14 = arith.constant 0 : index
      %c0_15 = arith.constant 0 : index
      %17 = vector.load %arg6[%c0_14, %c0_15] : memref<512x384xbf16, #tpu.memory_space<vmem>>, vector<512x384xbf16>
      tpu.vector_store %arg6[%c0_14, %c0_15], %16 {strides = array<i32>} : memref<512x384xbf16, #tpu.memory_space<vmem>>, vector<512x384xbf16>,
    } else {
    }
    return
  }
  func.func @transform_0(%arg0: i32, %arg1: i32, %arg2: i32) -> (i32, i32) {
    %c0_i32 = arith.constant 0 : i32
    return %arg0, %arg2 : i32, i32
  }
  func.func @transform_1(%arg0: i32, %arg1: i32, %arg2: i32) -> (i32, i32) {
    %c0_i32 = arith.constant 0 : i32
    return %arg2, %arg1 : i32, i32
  }
  func.func @transform_2(%arg0: i32, %arg1: i32, %arg2: i32) -> (i32, i32) {
    %c0_i32 = arith.constant 0 : i32
    %c0_i32_0 = arith.constant 0 : i32
    return %c0_i32, %arg1 : i32, i32
  }
  func.func @transform_3(%arg0: i32, %arg1: i32, %arg2: i32) -> (i32, i32) {
    %c0_i32 = arith.constant 0 : i32
    return %arg0, %arg1 : i32, i32
  }
}

</mosaic_0001>

<llo_original>
// kernel: tpu_custom_call.1
$region0: #{tpu_custom_call.1}
  #allocation0 [shape = 'u32[]', space=smem, size = 0x4, offset = 0x4, fixed_abs, tag = 'smem constant byte address 0x4 - core index']
  #allocation1 [shape = 'u32[144,128]{1,0:T(1,128)}', space=vmem, size = 0x12000, scoped, tag = 'internal scratch']
  #allocation2 [shape = 'f32[512,384]{1,0:T(8,128)}', space=vmem, size = 0xc0000, scoped, tag = 'scratch operand']
  %s0 = inlined_call_operand.hbm [shape: bf16[1024,256], index: 0, kind: input, shape index: {}]
  %s1 = inlined_call_operand.hbm [shape: bf16[256,768], index: 1, kind: input, shape index: {}]
  %s2 = inlined_call_operand.hbm [shape: f32[1,768], index: 2, kind: input, shape index: {}]
  %s3 = inlined_call_operand.hbm [shape: bf16[1024,768], index: 3, kind: output, shape index: {}]
  %s4 = sld [smem:[#allocation0]]
  $region65: #{tpu_custom_call.1} parent=0
    _
  %s6 = ssub.s32 1, %s4
  %s7 = scalar_select 0, %s6, %s4
  $region1: #{tpu_custom_call.1} parent=0
    #allocation3 [shape = 'u8[524288]{0}', space=vmem, size = 0x80000, scoped, tag = 'input window, operand 0']
    #allocation4 [shape = 's32[2]{0}', space=sflag, size = 0x8, scoped, tag = 'scoped memory for tpu_custom_call.1']
    #allocation5 [shape = 's32[2]{0}', space=sflag, size = 0x8, scoped, tag = 'scoped memory for tpu_custom_call.1']
    #allocation6 [shape = 'u8[393216]{0}', space=vmem, size = 0x60000, scoped, tag = 'input window, operand 1']
    #allocation7 [shape = 's32[2]{0}', space=sflag, size = 0x8, scoped, tag = 'scoped memory for tpu_custom_call.1']
    #allocation8 [shape = 'u8[3072]{0}', space=vmem, size = 0xc00, scoped, tag = 'input window, operand 2']
    #allocation9 [shape = 'u8[786432]{0}', space=vmem, size = 0xc0000, scoped, tag = 'output window, operand 0']
    %8 = vsyncpa [#allocation4], 0
    %s9 = scalar_lea.sflag [#allocation4], 1
    %10 = vsyncpa %s9, 0
    %11 = vsyncpa [#allocation7], 0
    %s12 = scalar_lea.sflag [#allocation7], 1
    %13 = vsyncpa %s12, 0
    %14 = vsyncpa [#allocation5], 0
    %s15 = scalar_lea.sflag [#allocation5], 1
    %16 = vsyncpa %s15, 0
    loop: start=0, step=1, limit=6
    $region2: #{tpu_custom_call.1} parent=1 // loop_pre_header
      _
    $region3: #{tpu_custom_call.1} parent=1 // loop_header
      %s18 = sphi 0, %s22
      %p19 = scmp.ge.s32.totalorder %s18, 6
      %s25 = sphi 0, %s44
      %s26 = sphi 0, %s40
      %s27 = sphi 0, %s36
      %s28 = sphi 0, %s25
      %s29 = sphi 0, %s26
      %s30 = sphi 0, %s27
      %s31 = sphi 0, %s28
      %s32 = sphi 0, %s29
      %s33 = sphi 0, %s30
      %s49 = sphi 0, %s51
      %s52 = sphi 0, %s49
      %s53 = sphi 0, %s52
      %s69 = sphi 0, %s53
      %s77 = sphi 0, %s79
      %s80 = sphi 0, %s77
      %s81 = sphi 0, %s80
      %s97 = sphi 0, %s81
      %s103 = sphi 0, %s105
      %s106 = sphi 0, %s103
      %s107 = sphi 0, %s106
      %s123 = sphi 0, %s107
      %s131 = sphi 0, %s133
      %s134 = sphi 0, %s131
      %s135 = sphi 0, %s134
      %s151 = sphi 0, %s135
    $region4: #{tpu_custom_call.1} parent=1 // loop_header_branch
      %21 = sbr.rel (%p19) target = $region8
    $region5: #{tpu_custom_call.1} parent=1 // loop_body
      %s23 = ssub.s32 %s18, 1
      %s24 = ssub.s32 %s18, 2
      %s34 = sadd.s32 1, %s27
      %p35 = scmp.ge.s32.totalorder %s34, 1
      %s36 = scalar_select %p35, 0, %s34
      %s37 = sadd.s32 1, %s26
      %s38 = scalar_select %p35, %s37, %s26
      %p39 = scmp.ge.s32.totalorder %s38, 2
      %s40 = scalar_select %p39, 0, %s38
      %s41 = sadd.s32 1, %s25
      %s42 = scalar_select %p39, %s41, %s25
      %p43 = scmp.ge.s32.totalorder %s42, 2
      %s44 = scalar_select %p43, 0, %s42
      %s45 = ssub.s32 %s25, %s44
      %s46 = ssub.s32 %s27, %s36
      %s47 = sor.u32 %s45, %s46
      %p48 = scmp.eq.s32.totalorder %s47, 0
      %s50 = sadd.s32 %s49, 1
      %s51 = scalar_select %p48, %s49, %s50
      %p54 = pneg %p48
      %p55 = scmp.eq.s32.totalorder %s18, 3
      %p56 = por %p54, %p55
      %p57 = scmp.ne.s32.totalorder %s49, %s52
      %p58 = scmp.eq.s32.totalorder %s18, 0
      %p59 = por %p57, %p58
      %p60 = scmp.ne.s32.totalorder %s49, %s52
      %p61 = scmp.eq.s32.totalorder %s23, 3
      %p62 = por %p60, %p61
      %p63 = scmp.ne.s32.totalorder %s52, %s53
      %p64 = scmp.eq.s32.totalorder %s23, 0
      %p65 = por %p63, %p64
      %p66 = scmp.ne.s32.totalorder %s52, %s53
      %p67 = scmp.eq.s32.totalorder %s24, 3
      %p68 = por %p66, %p67
      %p70 = scmp.ne.s32.totalorder %s53, %s69
      %p71 = scmp.eq.s32.totalorder %s24, 0
      %p72 = por %p70, %p71
      %s73 = ssub.s32 %s27, %s36
      %s74 = ssub.s32 %s26, %s40
      %s75 = sor.u32 %s73, %s74
      %p76 = scmp.eq.s32.totalorder %s75, 0
      %s78 = sadd.s32 %s77, 1
      %s79 = scalar_select %p76, %s77, %s78
      %p82 = pneg %p76
      %p83 = scmp.eq.s32.totalorder %s18, 3
      %p84 = por %p82, %p83
      %p85 = scmp.ne.s32.totalorder %s77, %s80
      %p86 = scmp.eq.s32.totalorder %s18, 0
      %p87 = por %p85, %p86
      %p88 = scmp.ne.s32.totalorder %s77, %s80
      %p89 = scmp.eq.s32.totalorder %s23, 3
      %p90 = por %p88, %p89
      %p91 = scmp.ne.s32.totalorder %s80, %s81
      %p92 = scmp.eq.s32.totalorder %s23, 0
      %p93 = por %p91, %p92
      %p94 = scmp.ne.s32.totalorder %s80, %s81
      %p95 = scmp.eq.s32.totalorder %s24, 3
      %p96 = por %p94, %p95
      %p98 = scmp.ne.s32.totalorder %s81, %s97
      %p99 = scmp.eq.s32.totalorder %s24, 0
      %p100 = por %p98, %p99
      %s101 = ssub.s32 %s26, %s40
      %p102 = scmp.eq.s32.totalorder %s101, 0
      %s104 = sadd.s32 %s103, 1
      %s105 = scalar_select %p102, %s103, %s104
      %p108 = pneg %p102
      %p109 = scmp.eq.s32.totalorder %s18, 3
      %p110 = por %p108, %p109
      %p111 = scmp.ne.s32.totalorder %s103, %s106
      %p112 = scmp.eq.s32.totalorder %s18, 0
      %p113 = por %p111, %p112
      %p114 = scmp.ne.s32.totalorder %s103, %s106
      %p115 = scmp.eq.s32.totalorder %s23, 3
      %p116 = por %p114, %p115
      %p117 = scmp.ne.s32.totalorder %s106, %s107
      %p118 = scmp.eq.s32.totalorder %s23, 0
      %p119 = por %p117, %p118
      %p120 = scmp.ne.s32.totalorder %s106, %s107
      %p121 = scmp.eq.s32.totalorder %s24, 3
      %p122 = por %p120, %p121
      %p124 = scmp.ne.s32.totalorder %s107, %s123
      %p125 = scmp.eq.s32.totalorder %s24, 0
      %p126 = por %p124, %p125
      %s127 = ssub.s32 %s25, %s44
      %s128 = ssub.s32 %s26, %s40
      %s129 = sor.u32 %s127, %s128
      %p130 = scmp.eq.s32.totalorder %s129, 0
      %s132 = sadd.s32 %s131, 1
      %s133 = scalar_select %p130, %s131, %s132
      %p136 = pneg %p130
      %p137 = scmp.eq.s32.totalorder %s18, 3
      %p138 = por %p136, %p137
      %p139 = scmp.ne.s32.totalorder %s131, %s134
      %p140 = scmp.eq.s32.totalorder %s18, 0
      %p141 = por %p139, %p140
      %p142 = scmp.ne.s32.totalorder %s131, %s134
      %p143 = scmp.eq.s32.totalorder %s23, 3
      %p144 = por %p142, %p143
      %p145 = scmp.ne.s32.totalorder %s134, %s135
      %p146 = scmp.eq.s32.totalorder %s23, 0
      %p147 = por %p145, %p146
      %p148 = scmp.ne.s32.totalorder %s134, %s135
      %p149 = scmp.eq.s32.totalorder %s24, 3
      %p150 = por %p148, %p149
      %p152 = scmp.ne.s32.totalorder %s135, %s151
      %p153 = scmp.eq.s32.totalorder %s24, 0
      %p154 = por %p152, %p153
      %p155 = scmp.le.s32.totalorder 1, %s18
      %p156 = scmp.lt.s32.totalorder %s18, 5
      %p157 = pnand %p155, %p156
      %p158 = pneg %p157
      // Predicated region
      $region9: #{tpu_custom_call.1} parent=5 // pred_check
        _
      $region10: #{tpu_custom_call.1} parent=5 // pred_check_branch
        %160 = sbr.rel (%p157) target = $region12
      $region11: #{tpu_custom_call.1} parent=5 // pred_region
        %s161 = ssub.s32 %s18, 1
      $region12: #{tpu_custom_call.1} parent=5 // pred_fallthru
        _
      %p162 = scmp.lt.s32.totalorder %s18, 4
      // Predicated region
      $region13: #{tpu_custom_call.1} parent=5 // pred_check
        %p163 = pneg %p162
      $region14: #{tpu_custom_call.1} parent=5 // pred_check_branch
        %165 = sbr.rel (%p163) target = $region16
      $region15: #{tpu_custom_call.1} parent=5 // pred_region
        // Predicated region
        $region17: #{tpu_custom_call.1} parent=15 // pred_check
          %p166 = pneg %p59
        $region18: #{tpu_custom_call.1} parent=15 // pred_check_branch
          %168 = sbr.rel (%p166) target = $region20
        $region19: #{tpu_custom_call.1} parent=15 // pred_region
          %s169 = sand.u32 %s49, 1
          %s170 = scalar_lea.sflag [#allocation4], %s169
          %s171 = sand.u32 %s49, 1
          %s172 = smul.addr %s171, 512
          %s173 = scalar_lea.vmem [#allocation3], %s172
          %s174 = smul.u32 64, %s25
          %s175 = smul.u32 2, %s27
          %s177 = ssub.s32 8192, 8192
          %178 = vsyncadd %s170, %s177
          %s179 = smul.addr %s174, 2
          %s180 = sadd.s32 %s175, %s179
          %s181 = smul.addr %s180, 64
          %s182 = scalar_lea.hbm %s0, %s181
          %s183 = sshll.u32 %s173, 4
          %s184 = int_to_ptr.vmem [resolvable:$true] %s183
          %189 = dma.hbm_to_vmem [thread:$0]  %s182, 8192, %s184, %s170, 128, 128, 8
        $region20: #{tpu_custom_call.1} parent=15 // pred_fallthru
          _
        // Predicated region
        $region21: #{tpu_custom_call.1} parent=15 // pred_check
          %p190 = pneg %p87
        $region22: #{tpu_custom_call.1} parent=15 // pred_check_branch
          %192 = sbr.rel (%p190) target = $region24
        $region23: #{tpu_custom_call.1} parent=15 // pred_region
          %s193 = sand.u32 %s18, 1
          %s194 = scalar_lea.sflag [#allocation7], %s193
          %s195 = sand.u32 %s77, 1
          %s196 = smul.addr %s195, 384
          %s197 = scalar_lea.vmem [#allocation6], %s196
          %s198 = smul.u32 32, %s27
          %s199 = smul.u32 3, %s26
          %s201 = ssub.s32 6144, 6144
          %202 = vsyncadd %s194, %s201
          %s203 = smul.addr %s198, 6
          %s204 = sadd.s32 %s199, %s203
          %s205 = smul.addr %s204, 64
          %s206 = scalar_lea.hbm %s1, %s205
          %s207 = sshll.u32 %s197, 4
          %s208 = int_to_ptr.vmem [resolvable:$true] %s207
          %213 = dma.hbm_to_vmem [thread:$0]  %s206, 6144, %s208, %s194, 384, 192, 12
        $region24: #{tpu_custom_call.1} parent=15 // pred_fallthru
          _
        // Predicated region
        $region25: #{tpu_custom_call.1} parent=15 // pred_check
          %p214 = pneg %p113
        $region26: #{tpu_custom_call.1} parent=15 // pred_check_branch
          %216 = sbr.rel (%p214) target = $region28
        $region27: #{tpu_custom_call.1} parent=15 // pred_region
          %s217 = sand.u32 %s18, 1
          %s218 = scalar_lea.sflag [#allocation7], %s217
          %s219 = sand.u32 %s103, 1
          %s220 = smul.addr %s219, 3
          %s221 = scalar_lea.vmem [#allocation8], %s220
          %s222 = smul.u32 3, %s26
          %s224 = ssub.s32 48, 48
          %225 = vsyncadd %s218, %s224
          %s226 = smul.addr %s222, 16
          %s227 = scalar_lea.hbm %s2, %s226
          %s229 = sshll.u32 %s221, 4
          %s230 = int_to_ptr.vmem [resolvable:$true] %s229
          %232 = dma.hbm_to_vmem [thread:$0]  %s227, 48, %s230, %s218
        $region28: #{tpu_custom_call.1} parent=15 // pred_fallthru
          _
      $region16: #{tpu_custom_call.1} parent=5 // pred_fallthru
        _
      %p233 = scmp.le.s32.totalorder 1, %s18
      %p234 = scmp.lt.s32.totalorder %s18, 5
      %p235 = pnand %p233, %p234
      %p236 = pneg %p235
      // Predicated region
      $region29: #{tpu_custom_call.1} parent=5 // pred_check
        _
      $region30: #{tpu_custom_call.1} parent=5 // pred_check_branch
        %238 = sbr.rel (%p235) target = $region32
      $region31: #{tpu_custom_call.1} parent=5 // pred_region
        %s239 = ssub.s32 %s18, 1
        %s240 = sand.u32 %s52, 1
        %s241 = scalar_lea.sflag [#allocation4], %s240
        %s242 = sand.u32 %s52, 1
        %s243 = smul.addr %s242, 512
        %s244 = scalar_lea.vmem [#allocation3], %s243
        // Predicated region
        $region33: #{tpu_custom_call.1} parent=31 // pred_check
          %p245 = pneg %p65
        $region34: #{tpu_custom_call.1} parent=31 // pred_check_branch
          %247 = sbr.rel (%p245) target = $region36
        $region35: #{tpu_custom_call.1} parent=31 // pred_region
          %248 = dma.done %s241, 8192
        $region36: #{tpu_custom_call.1} parent=31 // pred_fallthru
          _
        %s249 = sand.u32 %s23, 1
        %s250 = scalar_lea.sflag [#allocation7], %s249
        %s251 = sand.u32 %s80, 1
        %s252 = smul.addr %s251, 384
        %s253 = scalar_lea.vmem [#allocation6], %s252
        // Predicated region
        $region37: #{tpu_custom_call.1} parent=31 // pred_check
          %p254 = pneg %p93
        $region38: #{tpu_custom_call.1} parent=31 // pred_check_branch
          %256 = sbr.rel (%p254) target = $region40
        $region39: #{tpu_custom_call.1} parent=31 // pred_region
          %257 = dma.done %s250, 6144
        $region40: #{tpu_custom_call.1} parent=31 // pred_fallthru
          _
        %s258 = sand.u32 %s23, 1
        %s259 = scalar_lea.sflag [#allocation7], %s258
        %s260 = sand.u32 %s106, 1
        %s261 = smul.addr %s260, 3
        %s262 = scalar_lea.vmem [#allocation8], %s261
        // Predicated region
        $region41: #{tpu_custom_call.1} parent=31 // pred_check
          %p263 = pneg %p119
        $region42: #{tpu_custom_call.1} parent=31 // pred_check_branch
          %265 = sbr.rel (%p263) target = $region44
        $region43: #{tpu_custom_call.1} parent=31 // pred_region
          %266 = dma.done %s259, 48
        $region44: #{tpu_custom_call.1} parent=31 // pred_fallthru
          _
        %s267 = sand.u32 %s52, 1
        %s268 = scalar_lea.sflag [#allocation4], %s267
        %s269 = sand.u32 %s52, 1
        %s270 = smul.addr %s269, 512
        %s271 = scalar_lea.vmem [#allocation3], %s270
        %p272 = pneg %p65
        %p273 = pneg %p62
        %s274 = sand.u32 %s23, 1
        %s275 = scalar_lea.sflag [#allocation7], %s274
        %s276 = sand.u32 %s80, 1
        %s277 = smul.addr %s276, 384
        %s278 = scalar_lea.vmem [#allocation6], %s277
        %p279 = pneg %p93
        %p280 = pneg %p90
        %s281 = sand.u32 %s23, 1
        %s282 = scalar_lea.sflag [#allocation7], %s281
        %s283 = sand.u32 %s106, 1
        %s284 = smul.addr %s283, 3
        %s285 = scalar_lea.vmem [#allocation8], %s284
        %p286 = pneg %p119
        %p287 = pneg %p116
        %p288 = pneg %p147
        %p289 = pneg %p144
        %s290 = sand.u32 %s134, 1
        %s291 = scalar_lea.sflag [#allocation5], %s290
        %s292 = sand.u32 %s134, 1
        %s293 = smul.addr %s292, 768
        %s294 = scalar_lea.vmem [#allocation9], %s293
        %s295 = smul.u32 64, %s28
        %s296 = smul.u32 2, %s30
        %s297 = smul.u32 32, %s30
        %s298 = smul.u32 3, %s29
        %s299 = smul.u32 3, %s29
        %s300 = smul.u32 64, %s28
        %s301 = smul.u32 3, %s29
        %p303 = scmp.eq.s32.totalorder %s30, 0
        // Predicated region
        $region45: #{tpu_custom_call.1} parent=31 // pred_check
          %p304 = pneg %p303
        $region46: #{tpu_custom_call.1} parent=31 // pred_check_branch
          %306 = sbr.rel (%p304) target = $region48
        $region47: #{tpu_custom_call.1} parent=31 // pred_region
          %307 = vst [vmem:[#allocation2] sm:$0xff] 0.0
          %308 = vst [vmem:[#allocation2 + $0x8] sm:$0xff] 0.0
          %309 = vst [vmem:[#allocation2 + $0x10] sm:$0xff] 0.0
          %310 = vst [vmem:[#allocation2 + $0x18] sm:$0xff] 0.0
          %311 = vst [vmem:[#allocation2 + $0x20] sm:$0xff] 0.0
          %312 = vst [vmem:[#allocation2 + $0x28] sm:$0xff] 0.0
          %313 = vst [vmem:[#allocation2 + $0x30] sm:$0xff] 0.0
          %314 = vst [vmem:[#allocation2 + $0x38] sm:$0xff] 0.0
          %315 = vst [vmem:[#allocation2 + $0x40] sm:$0xff] 0.0
          %316 = vst [vmem:[#allocation2 + $0x48] sm:$0xff] 0.0
          %317 = vst [vmem:[#allocation2 + $0x50] sm:$0xff] 0.0
          %318 = vst [vmem:[#allocation2 + $0x58] sm:$0xff] 0.0
          %319 = vst [vmem:[#allocation2 + $0x60] sm:$0xff] 0.0
          %320 = vst [vmem:[#allocation2 + $0x68] sm:$0xff] 0.0
          %321 = vst [vmem:[#allocation2 + $0x70] sm:$0xff] 0.0
          %322 = vst [vmem:[#allocation2 + $0x78] sm:$0xff] 0.0
          %323 = vst [vmem:[#allocation2 + $0x80] sm:$0xff] 0.0
          %324 = vst [vmem:[#allocation2 + $0x88] sm:$0xff] 0.0
          %325 = vst [vmem:[#allocation2 + $0x90] sm:$0xff] 0.0
          %326 = vst [vmem:[#allocation2 + $0x98] sm:$0xff] 0.0
          %327 = vst [vmem:[#allocation2 + $0xa0] sm:$0xff] 0.0
          %328 = vst [vmem:[#allocation2 + $0xa8] sm:$0xff] 0.0
          %329 = vst [vmem:[#allocation2 + $0xb0] sm:$0xff] 0.0
          %330 = vst [vmem:[#allocation2 + $0xb8] sm:$0xff] 0.0
          %331 = vst [vmem:[#allocation2 + $0xc0] sm:$0xff] 0.0
          %332 = vst [vmem:[#allocation2 + $0xc8] sm:$0xff] 0.0
          %333 = vst [vmem:[#allocation2 + $0xd0] sm:$0xff] 0.0
          %334 = vst [vmem:[#allocation2 + $0xd8] sm:$0xff] 0.0
          %335 = vst [vmem:[#allocation2 + $0xe0] sm:$0xff] 0.0
          %336 = vst [vmem:[#allocation2 + $0xe8] sm:$0xff] 0.0
          %337 = vst [vmem:[#allocation2 + $0xf0] sm:$0xff] 0.0
          %338 = vst [vmem:[#allocation2 + $0xf8] sm:$0xff] 0.0
          %339 = vst [vmem:[#allocation2 + $0x100] sm:$0xff] 0.0
          %340 = vst [vmem:[#allocation2 + $0x108] sm:$0xff] 0.0
          %341 = vst [vmem:[#allocation2 + $0x110] sm:$0xff] 0.0
          %342 = vst [vmem:[#allocation2 + $0x118] sm:$0xff] 0.0
          %343 = vst [vmem:[#allocation2 + $0x120] sm:$0xff] 0.0
          %344 = vst [vmem:[#allocation2 + $0x128] sm:$0xff] 0.0
          %345 = vst [vmem:[#allocation2 + $0x130] sm:$0xff] 0.0
          %346 = vst [vmem:[#allocation2 + $0x138] sm:$0xff] 0.0
          %347 = vst [vmem:[#allocation2 + $0x140] sm:$0xff] 0.0
          %348 = vst [vmem:[#allocation2 + $0x148] sm:$0xff] 0.0
          %349 = vst [vmem:[#allocation2 + $0x150] sm:$0xff] 0.0
          %350 = vst [vmem:[#allocation2 + $0x158] sm:$0xff] 0.0
          %351 = vst [vmem:[#allocation2 + $0x160] sm:$0xff] 0.0
          %352 = vst [vmem:[#allocation2 + $0x168] sm:$0xff] 0.0
          %353 = vst [vmem:[#allocation2 + $0x170] sm:$0xff] 0.0
          %354 = vst [vmem:[#allocation2 + $0x178] sm:$0xff] 0.0
          %355 = vst [vmem:[#allocation2 + $0x180] sm:$0xff] 0.0
          %356 = vst [vmem:[#allocation2 + $0x188] sm:$0xff] 0.0
          %357 = vst [vmem:[#allocation2 + $0x190] sm:$0xff] 0.0
          %358 = vst [vmem:[#allocation2 + $0x198] sm:$0xff] 0.0
          %359 = vst [vmem:[#allocation2 + $0x1a0] sm:$0xff] 0.0
          %360 = vst [vmem:[#allocation2 + $0x1a8] sm:$0xff] 0.0
          %361 = vst [vmem:[#allocation2 + $0x1b0] sm:$0xff] 0.0
          %362 = vst [vmem:[#allocation2 + $0x1b8] sm:$0xff] 0.0
          %363 = vst [vmem:[#allocation2 + $0x1c0] sm:$0xff] 0.0
          %364 = vst [vmem:[#allocation2 + $0x1c8] sm:$0xff] 0.0
          %365 = vst [vmem:[#allocation2 + $0x1d0] sm:$0xff] 0.0
          %366 = vst [vmem:[#allocation2 + $0x1d8] sm:$0xff] 0.0
          %367 = vst [vmem:[#allocation2 + $0x1e0] sm:$0xff] 0.0
          %368 = vst [vmem:[#allocation2 + $0x1e8] sm:$0xff] 0.0
          %369 = vst [vmem:[#allocation2 + $0x1f0] sm:$0xff] 0.0
          %370 = vst [vmem:[#allocation2 + $0x1f8] sm:$0xff] 0.0
          %371 = vst [vmem:[#allocation2 + $0x200] sm:$0xff] 0.0
          %372 = vst [vmem:[#allocation2 + $0x208] sm:$0xff] 0.0
          %373 = vst [vmem:[#allocation2 + $0x210] sm:$0xff] 0.0
          %374 = vst [vmem:[#allocation2 + $0x218] sm:$0xff] 0.0
          %375 = vst [vmem:[#allocation2 + $0x220] sm:$0xff] 0.0
          %376 = vst [vmem:[#allocation2 + $0x228] sm:$0xff] 0.0
          %377 = vst [vmem:[#allocation2 + $0x230] sm:$0xff] 0.0
          %378 = vst [vmem:[#allocation2 + $0x238] sm:$0xff] 0.0
          %379 = vst [vmem:[#allocation2 + $0x240] sm:$0xff] 0.0
          %380 = vst [vmem:[#allocation2 + $0x248] sm:$0xff] 0.0
          %381 = vst [vmem:[#allocation2 + $0x250] sm:$0xff] 0.0
          %382 = vst [vmem:[#allocation2 + $0x258] sm:$0xff] 0.0
          %383 = vst [vmem:[#allocation2 + $0x260] sm:$0xff] 0.0
          %384 = vst [vmem:[#allocation2 + $0x268] sm:$0xff] 0.0
          %385 = vst [vmem:[#allocation2 + $0x270] sm:$0xff] 0.0
          %386 = vst [vmem:[#allocation2 + $0x278] sm:$0xff] 0.0
          %387 = vst [vmem:[#allocation2 + $0x280] sm:$0xff] 0.0
          %388 = vst [vmem:[#allocation2 + $0x288] sm:$0xff] 0.0
          %389 = vst [vmem:[#allocation2 + $0x290] sm:$0xff] 0.0
          %390 = vst [vmem:[#allocation2 + $0x298] sm:$0xff] 0.0
          %391 = vst [vmem:[#allocation2 + $0x2a0] sm:$0xff] 0.0
          %392 = vst [vmem:[#allocation2 + $0x2a8] sm:$0xff] 0.0
          %393 = vst [vmem:[#allocation2 + $0x2b0] sm:$0xff] 0.0
          %394 = vst [vmem:[#allocation2 + $0x2b8] sm:$0xff] 0.0
          %395 = vst [vmem:[#allocation2 + $0x2c0] sm:$0xff] 0.0
          %396 = vst [vmem:[#allocation2 + $0x2c8] sm:$0xff] 0.0
          %397 = vst [vmem:[#allocation2 + $0x2d0] sm:$0xff] 0.0
          %398 = vst [vmem:[#allocation2 + $0x2d8] sm:$0xff] 0.0
          %399 = vst [vmem:[#allocation2 + $0x2e0] sm:$0xff] 0.0
          %400 = vst [vmem:[#allocation2 + $0x2e8] sm:$0xff] 0.0
          %401 = vst [vmem:[#allocation2 + $0x2f0] sm:$0xff] 0.0
          %402 = vst [vmem:[#allocation2 + $0x2f8] sm:$0xff] 0.0
          %403 = vst [vmem:[#allocation2 + $0x300] sm:$0xff] 0.0
          %404 = vst [vmem:[#allocation2 + $0x308] sm:$0xff] 0.0
          %405 = vst [vmem:[#allocation2 + $0x310] sm:$0xff] 0.0
          %406 = vst [vmem:[#allocation2 + $0x318] sm:$0xff] 0.0
          %407 = vst [vmem:[#allocation2 + $0x320] sm:$0xff] 0.0
          %408 = vst [vmem:[#allocation2 + $0x328] sm:$0xff] 0.0
          %409 = vst [vmem:[#allocation2 + $0x330] sm:$0xff] 0.0
          %410 = vst [vmem:[#allocation2 + $0x338] sm:$0xff] 0.0
          %411 = vst [vmem:[#allocation2 + $0x340] sm:$0xff] 0.0
          %412 = vst [vmem:[#allocation2 + $0x348] sm:$0xff] 0.0
          %413 = vst [vmem:[#allocation2 + $0x350] sm:$0xff] 0.0
          %414 = vst [vmem:[#allocation2 + $0x358] sm:$0xff] 0.0
          %415 = vst [vmem:[#allocation2 + $0x360] sm:$0xff] 0.0
          %416 = vst [vmem:[#allocation2 + $0x368] sm:$0xff] 0.0
          %417 = vst [vmem:[#allocation2 + $0x370] sm:$0xff] 0.0
          %418 = vst [vmem:[#allocation2 + $0x378] sm:$0xff] 0.0
          %419 = vst [vmem:[#allocation2 + $0x380] sm:$0xff] 0.0
          %420 = vst [vmem:[#allocation2 + $0x388] sm:$0xff] 0.0
          %421 = vst [vmem:[#allocation2 + $0x390] sm:$0xff] 0.0
          %422 = vst [vmem:[#allocation2 + $0x398] sm:$0xff] 0.0
          %423 = vst [vmem:[#allocation2 + $0x3a0] sm:$0xff] 0.0
          %424 = vst [vmem:[#allocation2 + $0x3a8] sm:$0xff] 0.0
          %425 = vst [vmem:[#allocation2 + $0x3b0] sm:$0xff] 0.0
          %426 = vst [vmem:[#allocation2 + $0x3b8] sm:$0xff] 0.0
          %427 = vst [vmem:[#allocation2 + $0x3c0] sm:$0xff] 0.0
          %428 = vst [vmem:[#allocation2 + $0x3c8] sm:$0xff] 0.0
          %429 = vst [vmem:[#allocation2 + $0x3d0] sm:$0xff] 0.0
          %430 = vst [vmem:[#allocation2 + $0x3d8] sm:$0xff] 0.0
          %431 = vst [vmem:[#allocation2 + $0x3e0] sm:$0xff] 0.0
          %432 = vst [vmem:[#allocation2 + $0x3e8] sm:$0xff] 0.0
          %433 = vst [vmem:[#allocation2 + $0x3f0] sm:$0xff] 0.0
          %434 = vst [vmem:[#allocation2 + $0x3f8] sm:$0xff] 0.0
          %435 = vst [vmem:[#allocation2 + $0x400] sm:$0xff] 0.0
          %436 = vst [vmem:[#allocation2 + $0x408] sm:$0xff] 0.0
          %437 = vst [vmem:[#allocation2 + $0x410] sm:$0xff] 0.0
          %438 = vst [vmem:[#allocation2 + $0x418] sm:$0xff] 0.0
          %439 = vst [vmem:[#allocation2 + $0x420] sm:$0xff] 0.0
          %440 = vst [vmem:[#allocation2 + $0x428] sm:$0xff] 0.0
          %441 = vst [vmem:[#allocation2 + $0x430] sm:$0xff] 0.0
          %442 = vst [vmem:[#allocation2 + $0x438] sm:$0xff] 0.0
          %443 = vst [vmem:[#allocation2 + $0x440] sm:$0xff] 0.0
          %444 = vst [vmem:[#allocation2 + $0x448] sm:$0xff] 0.0
          %445 = vst [vmem:[#allocation2 + $0x450] sm:$0xff] 0.0
          %446 = vst [vmem:[#allocation2 + $0x458] sm:$0xff] 0.0
          %447 = vst [vmem:[#allocation2 + $0x460] sm:$0xff] 0.0
          %448 = vst [vmem:[#allocation2 + $0x468] sm:$0xff] 0.0
          %449 = vst [vmem:[#allocation2 + $0x470] sm:$0xff] 0.0
          %450 = vst [vmem:[#allocation2 + $0x478] sm:$0xff] 0.0
          %451 = vst [vmem:[#allocation2 + $0x480] sm:$0xff] 0.0
          %452 = vst [vmem:[#allocation2 + $0x488] sm:$0xff] 0.0
          %453 = vst [vmem:[#allocation2 + $0x490] sm:$0xff] 0.0
          %454 = vst [vmem:[#allocation2 + $0x498] sm:$0xff] 0.0
          %455 = vst [vmem:[#allocation2 + $0x4a0] sm:$0xff] 0.0
          %456 = vst [vmem:[#allocation2 + $0x4a8] sm:$0xff] 0.0
          %457 = vst [vmem:[#allocation2 + $0x4b0] sm:$0xff] 0.0
          %458 = vst [vmem:[#allocation2 + $0x4b8] sm:$0xff] 0.0
          %459 = vst [vmem:[#allocation2 + $0x4c0] sm:$0xff] 0.0
          %460 = vst [vmem:[#allocation2 + $0x4c8] sm:$0xff] 0.0
          %461 = vst [vmem:[#allocation2 + $0x4d0] sm:$0xff] 0.0
          %462 = vst [vmem:[#allocation2 + $0x4d8] sm:$0xff] 0.0
          %463 = vst [vmem:[#allocation2 + $0x4e0] sm:$0xff] 0.0
          %464 = vst [vmem:[#allocation2 + $0x4e8] sm:$0xff] 0.0
          %465 = vst [vmem:[#allocation2 + $0x4f0] sm:$0xff] 0.0
          %466 = vst [vmem:[#allocation2 + $0x4f8] sm:$0xff] 0.0
          %467 = vst [vmem:[#allocation2 + $0x500] sm:$0xff] 0.0
          %468 = vst [vmem:[#allocation2 + $0x508] sm:$0xff] 0.0
          %469 = vst [vmem:[#allocation2 + $0x510] sm:$0xff] 0.0
          %470 = vst [vmem:[#allocation2 + $0x518] sm:$0xff] 0.0
          %471 = vst [vmem:[#allocation2 + $0x520] sm:$0xff] 0.0
          %472 = vst [vmem:[#allocation2 + $0x528] sm:$0xff] 0.0
          %473 = vst [vmem:[#allocation2 + $0x530] sm:$0xff] 0.0
          %474 = vst [vmem:[#allocation2 + $0x538] sm:$0xff] 0.0
          %475 = vst [vmem:[#allocation2 + $0x540] sm:$0xff] 0.0
          %476 = vst [vmem:[#allocation2 + $0x548] sm:$0xff] 0.0
          %477 = vst [vmem:[#allocation2 + $0x550] sm:$0xff] 0.0
          %478 = vst [vmem:[#allocation2 + $0x558] sm:$0xff] 0.0
          %479 = vst [vmem:[#allocation2 + $0x560] sm:$0xff] 0.0
          %480 = vst [vmem:[#allocation2 + $0x568] sm:$0xff] 0.0
          %481 = vst [vmem:[#allocation2 + $0x570] sm:$0xff] 0.0
          %482 = vst [vmem:[#allocation2 + $0x578] sm:$0xff] 0.0
          %483 = vst [vmem:[#allocation2 + $0x580] sm:$0xff] 0.0
          %484 = vst [vmem:[#allocation2 + $0x588] sm:$0xff] 0.0
          %485 = vst [vmem:[#allocation2 + $0x590] sm:$0xff] 0.0
          %486 = vst [vmem:[#allocation2 + $0x598] sm:$0xff] 0.0
          %487 = vst [vmem:[#allocation2 + $0x5a0] sm:$0xff] 0.0
          %488 = vst [vmem:[#allocation2 + $0x5a8] sm:$0xff] 0.0
          %489 = vst [vmem:[#allocation2 + $0x5b0] sm:$0xff] 0.0
          %490 = vst [vmem:[#allocation2 + $0x5b8] sm:$0xff] 0.0
          %491 = vst [vmem:[#allocation2 + $0x5c0] sm:$0xff] 0.0
          %492 = vst [vmem:[#allocation2 + $0x5c8] sm:$0xff] 0.0
          %493 = vst [vmem:[#allocation2 + $0x5d0] sm:$0xff] 0.0
          %494 = vst [vmem:[#allocation2 + $0x5d8] sm:$0xff] 0.0
          %495 = vst [vmem:[#allocation2 + $0x5e0] sm:$0xff] 0.0
          %496 = vst [vmem:[#allocation2 + $0x5e8] sm:$0xff] 0.0
          %497 = vst [vmem:[#allocation2 + $0x5f0] sm:$0xff] 0.0
          %498 = vst [vmem:[#allocation2 + $0x5f8] sm:$0xff] 0.0
        $region48: #{tpu_custom_call.1} parent=31 // pred_fallthru
          _
        %v499 = vld [vmem:[#allocation2] sm:$0xff]
        %v500 = vld [vmem:[#allocation2 + $0x8] sm:$0xff]
        %v501 = vld [vmem:[#allocation2 + $0x10] sm:$0xff]
        %v502 = vld [vmem:[#allocation2 + $0x18] sm:$0xff]
        %v503 = vld [vmem:[#allocation2 + $0x20] sm:$0xff]
        %v504 = vld [vmem:[#allocation2 + $0x28] sm:$0xff]
        %v505 = vld [vmem:[#allocation2 + $0x30] sm:$0xff]
        %v506 = vld [vmem:[#allocation2 + $0x38] sm:$0xff]
        %v507 = vld [vmem:[#allocation2 + $0x40] sm:$0xff]
        %v508 = vld [vmem:[#allocation2 + $0x48] sm:$0xff]
        %v509 = vld [vmem:[#allocation2 + $0x50] sm:$0xff]
        %v510 = vld [vmem:[#allocation2 + $0x58] sm:$0xff]
        %v511 = vld [vmem:[#allocation2 + $0x60] sm:$0xff]
        %v512 = vld [vmem:[#allocation2 + $0x68] sm:$0xff]
        %v513 = vld [vmem:[#allocation2 + $0x70] sm:$0xff]
        %v514 = vld [vmem:[#allocation2 + $0x78] sm:$0xff]
        %v515 = vld [vmem:[#allocation2 + $0x80] sm:$0xff]
        %v516 = vld [vmem:[#allocation2 + $0x88] sm:$0xff]
        %v517 = vld [vmem:[#allocation2 + $0x90] sm:$0xff]
        %v518 = vld [vmem:[#allocation2 + $0x98] sm:$0xff]
        %v519 = vld [vmem:[#allocation2 + $0xa0] sm:$0xff]
        %v520 = vld [vmem:[#allocation2 + $0xa8] sm:$0xff]
        %v521 = vld [vmem:[#allocation2 + $0xb0] sm:$0xff]
        %v522 = vld [vmem:[#allocation2 + $0xb8] sm:$0xff]
        %v523 = vld [vmem:[#allocation2 + $0xc0] sm:$0xff]
        %v524 = vld [vmem:[#allocation2 + $0xc8] sm:$0xff]
        %v525 = vld [vmem:[#allocation2 + $0xd0] sm:$0xff]
        %v526 = vld [vmem:[#allocation2 + $0xd8] sm:$0xff]
        %v527 = vld [vmem:[#allocation2 + $0xe0] sm:$0xff]
        %v528 = vld [vmem:[#allocation2 + $0xe8] sm:$0xff]
        %v529 = vld [vmem:[#allocation2 + $0xf0] sm:$0xff]
        %v530 = vld [vmem:[#allocation2 + $0xf8] sm:$0xff]
        %v531 = vld [vmem:[#allocation2 + $0x100] sm:$0xff]
        %v532 = vld [vmem:[#allocation2 + $0x108] sm:$0xff]
        %v533 = vld [vmem:[#allocation2 + $0x110] sm:$0xff]
        %v534 = vld [vmem:[#allocation2 + $0x118] sm:$0xff]
        %v535 = vld [vmem:[#allocation2 + $0x120] sm:$0xff]
        %v536 = vld [vmem:[#allocation2 + $0x128] sm:$0xff]
        %v537 = vld [vmem:[#allocation2 + $0x130] sm:$0xff]
        %v538 = vld [vmem:[#allocation2 + $0x138] sm:$0xff]
        %v539 = vld [vmem:[#allocation2 + $0x140] sm:$0xff]
        %v540 = vld [vmem:[#allocation2 + $0x148] sm:$0xff]
        %v541 = vld [vmem:[#allocation2 + $0x150] sm:$0xff]
        %v542 = vld [vmem:[#allocation2 + $0x158] sm:$0xff]
        %v543 = vld [vmem:[#allocation2 + $0x160] sm:$0xff]
        %v544 = vld [vmem:[#allocation2 + $0x168] sm:$0xff]
        %v545 = vld [vmem:[#allocation2 + $0x170] sm:$0xff]
        %v546 = vld [vmem:[#allocation2 + $0x178] sm:$0xff]
        %v547 = vld [vmem:[#allocation2 + $0x180] sm:$0xff]
        %v548 = vld [vmem:[#allocation2 + $0x188] sm:$0xff]
        %v549 = vld [vmem:[#allocation2 + $0x190] sm:$0xff]
        %v550 = vld [vmem:[#allocation2 + $0x198] sm:$0xff]
        %v551 = vld [vmem:[#allocation2 + $0x1a0] sm:$0xff]
        %v552 = vld [vmem:[#allocation2 + $0x1a8] sm:$0xff]
        %v553 = vld [vmem:[#allocation2 + $0x1b0] sm:$0xff]
        %v554 = vld [vmem:[#allocation2 + $0x1b8] sm:$0xff]
        %v555 = vld [vmem:[#allocation2 + $0x1c0] sm:$0xff]
        %v556 = vld [vmem:[#allocation2 + $0x1c8] sm:$0xff]
        %v557 = vld [vmem:[#allocation2 + $0x1d0] sm:$0xff]
        %v558 = vld [vmem:[#allocation2 + $0x1d8] sm:$0xff]
        %v559 = vld [vmem:[#allocation2 + $0x1e0] sm:$0xff]
        %v560 = vld [vmem:[#allocation2 + $0x1e8] sm:$0xff]
        %v561 = vld [vmem:[#allocation2 + $0x1f0] sm:$0xff]
        %v562 = vld [vmem:[#allocation2 + $0x1f8] sm:$0xff]
        %v563 = vld [vmem:[#allocation2 + $0x200] sm:$0xff]
        %v564 = vld [vmem:[#allocation2 + $0x208] sm:$0xff]
        %v565 = vld [vmem:[#allocation2 + $0x210] sm:$0xff]
        %v566 = vld [vmem:[#allocation2 + $0x218] sm:$0xff]
        %v567 = vld [vmem:[#allocation2 + $0x220] sm:$0xff]
        %v568 = vld [vmem:[#allocation2 + $0x228] sm:$0xff]
        %v569 = vld [vmem:[#allocation2 + $0x230] sm:$0xff]
        %v570 = vld [vmem:[#allocation2 + $0x238] sm:$0xff]
        %v571 = vld [vmem:[#allocation2 + $0x240] sm:$0xff]
        %v572 = vld [vmem:[#allocation2 + $0x248] sm:$0xff]
        %v573 = vld [vmem:[#allocation2 + $0x250] sm:$0xff]
        %v574 = vld [vmem:[#allocation2 + $0x258] sm:$0xff]
        %v575 = vld [vmem:[#allocation2 + $0x260] sm:$0xff]
        %v576 = vld [vmem:[#allocation2 + $0x268] sm:$0xff]
        %v577 = vld [vmem:[#allocation2 + $0x270] sm:$0xff]
        %v578 = vld [vmem:[#allocation2 + $0x278] sm:$0xff]
        %v579 = vld [vmem:[#allocation2 + $0x280] sm:$0xff]
        %v580 = vld [vmem:[#allocation2 + $0x288] sm:$0xff]
        %v581 = vld [vmem:[#allocation2 + $0x290] sm:$0xff]
        %v582 = vld [vmem:[#allocation2 + $0x298] sm:$0xff]
        %v583 = vld [vmem:[#allocation2 + $0x2a0] sm:$0xff]
        %v584 = vld [vmem:[#allocation2 + $0x2a8] sm:$0xff]
        %v585 = vld [vmem:[#allocation2 + $0x2b0] sm:$0xff]
        %v586 = vld [vmem:[#allocation2 + $0x2b8] sm:$0xff]
        %v587 = vld [vmem:[#allocation2 + $0x2c0] sm:$0xff]
        %v588 = vld [vmem:[#allocation2 + $0x2c8] sm:$0xff]
        %v589 = vld [vmem:[#allocation2 + $0x2d0] sm:$0xff]
        %v590 = vld [vmem:[#allocation2 + $0x2d8] sm:$0xff]
        %v591 = vld [vmem:[#allocation2 + $0x2e0] sm:$0xff]
        %v592 = vld [vmem:[#allocation2 + $0x2e8] sm:$0xff]
        %v593 = vld [vmem:[#allocation2 + $0x2f0] sm:$0xff]
        %v594 = vld [vmem:[#allocation2 + $0x2f8] sm:$0xff]
        %v595 = vld [vmem:[#allocation2 + $0x300] sm:$0xff]
        %v596 = vld [vmem:[#allocation2 + $0x308] sm:$0xff]
        %v597 = vld [vmem:[#allocation2 + $0x310] sm:$0xff]
        %v598 = vld [vmem:[#allocation2 + $0x318] sm:$0xff]
        %v599 = vld [vmem:[#allocation2 + $0x320] sm:$0xff]
        %v600 = vld [vmem:[#allocation2 + $0x328] sm:$0xff]
        %v601 = vld [vmem:[#allocation2 + $0x330] sm:$0xff]
        %v602 = vld [vmem:[#allocation2 + $0x338] sm:$0xff]
        %v603 = vld [vmem:[#allocation2 + $0x340] sm:$0xff]
        %v604 = vld [vmem:[#allocation2 + $0x348] sm:$0xff]
        %v605 = vld [vmem:[#allocation2 + $0x350] sm:$0xff]
        %v606 = vld [vmem:[#allocation2 + $0x358] sm:$0xff]
        %v607 = vld [vmem:[#allocation2 + $0x360] sm:$0xff]
        %v608 = vld [vmem:[#allocation2 + $0x368] sm:$0xff]
        %v609 = vld [vmem:[#allocation2 + $0x370] sm:$0xff]
        %v610 = vld [vmem:[#allocation2 + $0x378] sm:$0xff]
        %v611 = vld [vmem:[#allocation2 + $0x380] sm:$0xff]
        %v612 = vld [vmem:[#allocation2 + $0x388] sm:$0xff]
        %v613 = vld [vmem:[#allocation2 + $0x390] sm:$0xff]
        %v614 = vld [vmem:[#allocation2 + $0x398] sm:$0xff]
        %v615 = vld [vmem:[#allocation2 + $0x3a0] sm:$0xff]
        %v616 = vld [vmem:[#allocation2 + $0x3a8] sm:$0xff]
        %v617 = vld [vmem:[#allocation2 + $0x3b0] sm:$0xff]
        %v618 = vld [vmem:[#allocation2 + $0x3b8] sm:$0xff]
        %v619 = vld [vmem:[#allocation2 + $0x3c0] sm:$0xff]
        %v620 = vld [vmem:[#allocation2 + $0x3c8] sm:$0xff]
        %v621 = vld [vmem:[#allocation2 + $0x3d0] sm:$0xff]
        %v622 = vld [vmem:[#allocation2 + $0x3d8] sm:$0xff]
        %v623 = vld [vmem:[#allocation2 + $0x3e0] sm:$0xff]
        %v624 = vld [vmem:[#allocation2 + $0x3e8] sm:$0xff]
        %v625 = vld [vmem:[#allocation2 + $0x3f0] sm:$0xff]
        %v626 = vld [vmem:[#allocation2 + $0x3f8] sm:$0xff]
        %v627 = vld [vmem:[#allocation2 + $0x400] sm:$0xff]
        %v628 = vld [vmem:[#allocation2 + $0x408] sm:$0xff]
        %v629 = vld [vmem:[#allocation2 + $0x410] sm:$0xff]
        %v630 = vld [vmem:[#allocation2 + $0x418] sm:$0xff]
        %v631 = vld [vmem:[#allocation2 + $0x420] sm:$0xff]
        %v632 = vld [vmem:[#allocation2 + $0x428] sm:$0xff]
        %v633 = vld [vmem:[#allocation2 + $0x430] sm:$0xff]
        %v634 = vld [vmem:[#allocation2 + $0x438] sm:$0xff]
        %v635 = vld [vmem:[#allocation2 + $0x440] sm:$0xff]
        %v636 = vld [vmem:[#allocation2 + $0x448] sm:$0xff]
        %v637 = vld [vmem:[#allocation2 + $0x450] sm:$0xff]
        %v638 = vld [vmem:[#allocation2 + $0x458] sm:$0xff]
        %v639 = vld [vmem:[#allocation2 + $0x460] sm:$0xff]
        %v640 = vld [vmem:[#allocation2 + $0x468] sm:$0xff]
        %v641 = vld [vmem:[#allocation2 + $0x470] sm:$0xff]
        %v642 = vld [vmem:[#allocation2 + $0x478] sm:$0xff]
        %v643 = vld [vmem:[#allocation2 + $0x480] sm:$0xff]
        %v644 = vld [vmem:[#allocation2 + $0x488] sm:$0xff]
        %v645 = vld [vmem:[#allocation2 + $0x490] sm:$0xff]
        %v646 = vld [vmem:[#allocation2 + $0x498] sm:$0xff]
        %v647 = vld [vmem:[#allocation2 + $0x4a0] sm:$0xff]
        %v648 = vld [vmem:[#allocation2 + $0x4a8] sm:$0xff]
        %v649 = vld [vmem:[#allocation2 + $0x4b0] sm:$0xff]
        %v650 = vld [vmem:[#allocation2 + $0x4b8] sm:$0xff]
        %v651 = vld [vmem:[#allocation2 + $0x4c0] sm:$0xff]
        %v652 = vld [vmem:[#allocation2 + $0x4c8] sm:$0xff]
        %v653 = vld [vmem:[#allocation2 + $0x4d0] sm:$0xff]
        %v654 = vld [vmem:[#allocation2 + $0x4d8] sm:$0xff]
        %v655 = vld [vmem:[#allocation2 + $0x4e0] sm:$0xff]
        %v656 = vld [vmem:[#allocation2 + $0x4e8] sm:$0xff]
        %v657 = vld [vmem:[#allocation2 + $0x4f0] sm:$0xff]
        %v658 = vld [vmem:[#allocation2 + $0x4f8] sm:$0xff]
        %v659 = vld [vmem:[#allocation2 + $0x500] sm:$0xff]
        %v660 = vld [vmem:[#allocation2 + $0x508] sm:$0xff]
        %v661 = vld [vmem:[#allocation2 + $0x510] sm:$0xff]
        %v662 = vld [vmem:[#allocation2 + $0x518] sm:$0xff]
        %v663 = vld [vmem:[#allocation2 + $0x520] sm:$0xff]
        %v664 = vld [vmem:[#allocation2 + $0x528] sm:$0xff]
        %v665 = vld [vmem:[#allocation2 + $0x530] sm:$0xff]
        %v666 = vld [vmem:[#allocation2 + $0x538] sm:$0xff]
        %v667 = vld [vmem:[#allocation2 + $0x540] sm:$0xff]
        %v668 = vld [vmem:[#allocation2 + $0x548] sm:$0xff]
        %v669 = vld [vmem:[#allocation2 + $0x550] sm:$0xff]
        %v670 = vld [vmem:[#allocation2 + $0x558] sm:$0xff]
        %v671 = vld [vmem:[#allocation2 + $0x560] sm:$0xff]
        %v672 = vld [vmem:[#allocation2 + $0x568] sm:$0xff]
        %v673 = vld [vmem:[#allocation2 + $0x570] sm:$0xff]
        %v674 = vld [vmem:[#allocation2 + $0x578] sm:$0xff]
        %v675 = vld [vmem:[#allocation2 + $0x580] sm:$0xff]
        %v676 = vld [vmem:[#allocation2 + $0x588] sm:$0xff]
        %v677 = vld [vmem:[#allocation2 + $0x590] sm:$0xff]
        %v678 = vld [vmem:[#allocation2 + $0x598] sm:$0xff]
        %v679 = vld [vmem:[#allocation2 + $0x5a0] sm:$0xff]
        %v680 = vld [vmem:[#allocation2 + $0x5a8] sm:$0xff]
        %v681 = vld [vmem:[#allocation2 + $0x5b0] sm:$0xff]
        %v682 = vld [vmem:[#allocation2 + $0x5b8] sm:$0xff]
        %v683 = vld [vmem:[#allocation2 + $0x5c0] sm:$0xff]
        %v684 = vld [vmem:[#allocation2 + $0x5c8] sm:$0xff]
        %v685 = vld [vmem:[#allocation2 + $0x5d0] sm:$0xff]
        %v686 = vld [vmem:[#allocation2 + $0x5d8] sm:$0xff]
        %v687 = vld [vmem:[#allocation2 + $0x5e0] sm:$0xff]
        %v688 = vld [vmem:[#allocation2 + $0x5e8] sm:$0xff]
        %v689 = vld [vmem:[#allocation2 + $0x5f0] sm:$0xff]
        %v690 = vld [vmem:[#allocation2 + $0x5f8] sm:$0xff]
        %v691 = vld [vmem:[%s244] sm:$0xff]
        %v692 = vld [vmem:[%s244 + $0x8] sm:$0xff]
        %v693 = vld [vmem:[%s244 + $0x10] sm:$0xff]
        %v694 = vld [vmem:[%s244 + $0x18] sm:$0xff]
        %v695 = vld [vmem:[%s244 + $0x20] sm:$0xff]
        %v696 = vld [vmem:[%s244 + $0x28] sm:$0xff]
        %v697 = vld [vmem:[%s244 + $0x30] sm:$0xff]
        %v698 = vld [vmem:[%s244 + $0x38] sm:$0xff]
        %v699 = vld [vmem:[%s244 + $0x40] sm:$0xff]
        %v700 = vld [vmem:[%s244 + $0x48] sm:$0xff]
        %v701 = vld [vmem:[%s244 + $0x50] sm:$0xff]
        %v702 = vld [vmem:[%s244 + $0x58] sm:$0xff]
        %v703 = vld [vmem:[%s244 + $0x60] sm:$0xff]
        %v704 = vld [vmem:[%s244 + $0x68] sm:$0xff]
        %v705 = vld [vmem:[%s244 + $0x70] sm:$0xff]
        %v706 = vld [vmem:[%s244 + $0x78] sm:$0xff]
        %v707 = vld [vmem:[%s244 + $0x80] sm:$0xff]
        %v708 = vld [vmem:[%s244 + $0x88] sm:$0xff]
        %v709 = vld [vmem:[%s244 + $0x90] sm:$0xff]
        %v710 = vld [vmem:[%s244 + $0x98] sm:$0xff]
        %v711 = vld [vmem:[%s244 + $0xa0] sm:$0xff]
        %v712 = vld [vmem:[%s244 + $0xa8] sm:$0xff]
        %v713 = vld [vmem:[%s244 + $0xb0] sm:$0xff]
        %v714 = vld [vmem:[%s244 + $0xb8] sm:$0xff]
        %v715 = vld [vmem:[%s244 + $0xc0] sm:$0xff]
        %v716 = vld [vmem:[%s244 + $0xc8] sm:$0xff]
        %v717 = vld [vmem:[%s244 + $0xd0] sm:$0xff]
        %v718 = vld [vmem:[%s244 + $0xd8] sm:$0xff]
        %v719 = vld [vmem:[%s244 + $0xe0] sm:$0xff]
        %v720 = vld [vmem:[%s244 + $0xe8] sm:$0xff]
        %v721 = vld [vmem:[%s244 + $0xf0] sm:$0xff]
        %v722 = vld [vmem:[%s244 + $0xf8] sm:$0xff]
        %v723 = vld [vmem:[%s244 + $0x100] sm:$0xff]
        %v724 = vld [vmem:[%s244 + $0x108] sm:$0xff]
        %v725 = vld [vmem:[%s244 + $0x110] sm:$0xff]
        %v726 = vld [vmem:[%s244 + $0x118] sm:$0xff]
        %v727 = vld [vmem:[%s244 + $0x120] sm:$0xff]
        %v728 = vld [vmem:[%s244 + $0x128] sm:$0xff]
        %v729 = vld [vmem:[%s244 + $0x130] sm:$0xff]
        %v730 = vld [vmem:[%s244 + $0x138] sm:$0xff]
        %v731 = vld [vmem:[%s244 + $0x140] sm:$0xff]
        %v732 = vld [vmem:[%s244 + $0x148] sm:$0xff]
        %v733 = vld [vmem:[%s244 + $0x150] sm:$0xff]
        %v734 = vld [vmem:[%s244 + $0x158] sm:$0xff]
        %v735 = vld [vmem:[%s244 + $0x160] sm:$0xff]
        %v736 = vld [vmem:[%s244 + $0x168] sm:$0xff]
        %v737 = vld [vmem:[%s244 + $0x170] sm:$0xff]
        %v738 = vld [vmem:[%s244 + $0x178] sm:$0xff]
        %v739 = vld [vmem:[%s244 + $0x180] sm:$0xff]
        %v740 = vld [vmem:[%s244 + $0x188] sm:$0xff]
        %v741 = vld [vmem:[%s244 + $0x190] sm:$0xff]
        %v742 = vld [vmem:[%s244 + $0x198] sm:$0xff]
        %v743 = vld [vmem:[%s244 + $0x1a0] sm:$0xff]
        %v744 = vld [vmem:[%s244 + $0x1a8] sm:$0xff]
        %v745 = vld [vmem:[%s244 + $0x1b0] sm:$0xff]
        %v746 = vld [vmem:[%s244 + $0x1b8] sm:$0xff]
        %v747 = vld [vmem:[%s244 + $0x1c0] sm:$0xff]
        %v748 = vld [vmem:[%s244 + $0x1c8] sm:$0xff]
        %v749 = vld [vmem:[%s244 + $0x1d0] sm:$0xff]
        %v750 = vld [vmem:[%s244 + $0x1d8] sm:$0xff]
        %v751 = vld [vmem:[%s244 + $0x1e0] sm:$0xff]
        %v752 = vld [vmem:[%s244 + $0x1e8] sm:$0xff]
        %v753 = vld [vmem:[%s244 + $0x1f0] sm:$0xff]
        %v754 = vld [vmem:[%s244 + $0x1f8] sm:$0xff]
        %v755 = vld [vmem:[%s253] sm:$0xff]
        %v756 = vld [vmem:[%s253 + $0x8] sm:$0xf]
        %v757 = vld [vmem:[%s253 + $0xc] sm:$0xff]
        %v758 = vld [vmem:[%s253 + $0x14] sm:$0xf]
        %v759 = vld [vmem:[%s253 + $0x18] sm:$0xff]
        %v760 = vld [vmem:[%s253 + $0x20] sm:$0xf]
        %v761 = vld [vmem:[%s253 + $0x24] sm:$0xff]
        %v762 = vld [vmem:[%s253 + $0x2c] sm:$0xf]
        %v763 = vld [vmem:[%s253 + $0x30] sm:$0xff]
        %v764 = vld [vmem:[%s253 + $0x38] sm:$0xf]
        %v765 = vld [vmem:[%s253 + $0x3c] sm:$0xff]
        %v766 = vld [vmem:[%s253 + $0x44] sm:$0xf]
        %v767 = vld [vmem:[%s253 + $0x48] sm:$0xff]
        %v768 = vld [vmem:[%s253 + $0x50] sm:$0xf]
        %v769 = vld [vmem:[%s253 + $0x54] sm:$0xff]
        %v770 = vld [vmem:[%s253 + $0x5c] sm:$0xf]
        %v771 = vld [vmem:[%s253 + $0x60] sm:$0xff]
        %v772 = vld [vmem:[%s253 + $0x68] sm:$0xf]
        %v773 = vld [vmem:[%s253 + $0x6c] sm:$0xff]
        %v774 = vld [vmem:[%s253 + $0x74] sm:$0xf]
        %v775 = vld [vmem:[%s253 + $0x78] sm:$0xff]
        %v776 = vld [vmem:[%s253 + $0x80] sm:$0xf]
        %v777 = vld [vmem:[%s253 + $0x84] sm:$0xff]
        %v778 = vld [vmem:[%s253 + $0x8c] sm:$0xf]
        %v779 = vld [vmem:[%s253 + $0x90] sm:$0xff]
        %v780 = vld [vmem:[%s253 + $0x98] sm:$0xf]
        %v781 = vld [vmem:[%s253 + $0x9c] sm:$0xff]
        %v782 = vld [vmem:[%s253 + $0xa4] sm:$0xf]
        %v783 = vld [vmem:[%s253 + $0xa8] sm:$0xff]
        %v784 = vld [vmem:[%s253 + $0xb0] sm:$0xf]
        %v785 = vld [vmem:[%s253 + $0xb4] sm:$0xff]
        %v786 = vld [vmem:[%s253 + $0xbc] sm:$0xf]
        %v787 = vld [vmem:[%s253 + $0xc0] sm:$0xff]
        %v788 = vld [vmem:[%s253 + $0xc8] sm:$0xf]
        %v789 = vld [vmem:[%s253 + $0xcc] sm:$0xff]
        %v790 = vld [vmem:[%s253 + $0xd4] sm:$0xf]
        %v791 = vld [vmem:[%s253 + $0xd8] sm:$0xff]
        %v792 = vld [vmem:[%s253 + $0xe0] sm:$0xf]
        %v793 = vld [vmem:[%s253 + $0xe4] sm:$0xff]
        %v794 = vld [vmem:[%s253 + $0xec] sm:$0xf]
        %v795 = vld [vmem:[%s253 + $0xf0] sm:$0xff]
        %v796 = vld [vmem:[%s253 + $0xf8] sm:$0xf]
        %v797 = vld [vmem:[%s253 + $0xfc] sm:$0xff]
        %v798 = vld [vmem:[%s253 + $0x104] sm:$0xf]
        %v799 = vld [vmem:[%s253 + $0x108] sm:$0xff]
        %v800 = vld [vmem:[%s253 + $0x110] sm:$0xf]
        %v801 = vld [vmem:[%s253 + $0x114] sm:$0xff]
        %v802 = vld [vmem:[%s253 + $0x11c] sm:$0xf]
        %v803 = vld [vmem:[%s253 + $0x120] sm:$0xff]
        %v804 = vld [vmem:[%s253 + $0x128] sm:$0xf]
        %v805 = vld [vmem:[%s253 + $0x12c] sm:$0xff]
        %v806 = vld [vmem:[%s253 + $0x134] sm:$0xf]
        %v807 = vld [vmem:[%s253 + $0x138] sm:$0xff]
        %v808 = vld [vmem:[%s253 + $0x140] sm:$0xf]
        %v809 = vld [vmem:[%s253 + $0x144] sm:$0xff]
        %v810 = vld [vmem:[%s253 + $0x14c] sm:$0xf]
        %v811 = vld [vmem:[%s253 + $0x150] sm:$0xff]
        %v812 = vld [vmem:[%s253 + $0x158] sm:$0xf]
        %v813 = vld [vmem:[%s253 + $0x15c] sm:$0xff]
        %v814 = vld [vmem:[%s253 + $0x164] sm:$0xf]
        %v815 = vld [vmem:[%s253 + $0x168] sm:$0xff]
        %v816 = vld [vmem:[%s253 + $0x170] sm:$0xf]
        %v817 = vld [vmem:[%s253 + $0x174] sm:$0xff]
        %v818 = vld [vmem:[%s253 + $0x17c] sm:$0xf]
        %v883 = vunpack.c.l.b16 %v691
        %v884 = vunpack.c.h.b16 %v691
        %v885 = vunpack.c.l.b16 %v692
        %v886 = vunpack.c.h.b16 %v692
        %v887 = vunpack.c.l.b16 %v693
        %v888 = vunpack.c.h.b16 %v693
        %v889 = vunpack.c.l.b16 %v694
        %v890 = vunpack.c.h.b16 %v694
        %v891 = vunpack.c.l.b16 %v695
        %v892 = vunpack.c.h.b16 %v695
        %v893 = vunpack.c.l.b16 %v696
        %v894 = vunpack.c.h.b16 %v696
        %v895 = vunpack.c.l.b16 %v697
        %v896 = vunpack.c.h.b16 %v697
        %v897 = vunpack.c.l.b16 %v698
        %v898 = vunpack.c.h.b16 %v698
        %v899 = vunpack.c.l.b16 %v699
        %v900 = vunpack.c.h.b16 %v699
        %v901 = vunpack.c.l.b16 %v700
        %v902 = vunpack.c.h.b16 %v700
        %v903 = vunpack.c.l.b16 %v701
        %v904 = vunpack.c.h.b16 %v701
        %v905 = vunpack.c.l.b16 %v702
        %v906 = vunpack.c.h.b16 %v702
        %v907 = vunpack.c.l.b16 %v703
        %v908 = vunpack.c.h.b16 %v703
        %v909 = vunpack.c.l.b16 %v704
        %v910 = vunpack.c.h.b16 %v704
        %v911 = vunpack.c.l.b16 %v705
        %v912 = vunpack.c.h.b16 %v705
        %v913 = vunpack.c.l.b16 %v706
        %v914 = vunpack.c.h.b16 %v706
        %v915 = vunpack.c.l.b16 %v707
        %v916 = vunpack.c.h.b16 %v707
        %v917 = vunpack.c.l.b16 %v708
        %v918 = vunpack.c.h.b16 %v708
        %v919 = vunpack.c.l.b16 %v709
        %v920 = vunpack.c.h.b16 %v709
        %v921 = vunpack.c.l.b16 %v710
        %v922 = vunpack.c.h.b16 %v710
        %v923 = vunpack.c.l.b16 %v711
        %v924 = vunpack.c.h.b16 %v711
        %v925 = vunpack.c.l.b16 %v712
        %v926 = vunpack.c.h.b16 %v712
        %v927 = vunpack.c.l.b16 %v713
        %v928 = vunpack.c.h.b16 %v713
        %v929 = vunpack.c.l.b16 %v714
        %v930 = vunpack.c.h.b16 %v714
        %v931 = vunpack.c.l.b16 %v715
        %v932 = vunpack.c.h.b16 %v715
        %v933 = vunpack.c.l.b16 %v716
        %v934 = vunpack.c.h.b16 %v716
        %v935 = vunpack.c.l.b16 %v717
        %v936 = vunpack.c.h.b16 %v717
        %v937 = vunpack.c.l.b16 %v718
        %v938 = vunpack.c.h.b16 %v718
        %v939 = vunpack.c.l.b16 %v719
        %v940 = vunpack.c.h.b16 %v719
        %v941 = vunpack.c.l.b16 %v720
        %v942 = vunpack.c.h.b16 %v720
        %v943 = vunpack.c.l.b16 %v721
        %v944 = vunpack.c.h.b16 %v721
        %v945 = vunpack.c.l.b16 %v722
        %v946 = vunpack.c.h.b16 %v722
        %v947 = vunpack.c.l.b16 %v723
        %v948 = vunpack.c.h.b16 %v723
        %v949 = vunpack.c.l.b16 %v724
        %v950 = vunpack.c.h.b16 %v724
        %v951 = vunpack.c.l.b16 %v725
        %v952 = vunpack.c.h.b16 %v725
        %v953 = vunpack.c.l.b16 %v726
        %v954 = vunpack.c.h.b16 %v726
        %v955 = vunpack.c.l.b16 %v727
        %v956 = vunpack.c.h.b16 %v727
        %v957 = vunpack.c.l.b16 %v728
        %v958 = vunpack.c.h.b16 %v728
        %v959 = vunpack.c.l.b16 %v729
        %v960 = vunpack.c.h.b16 %v729
        %v961 = vunpack.c.l.b16 %v730
        %v962 = vunpack.c.h.b16 %v730
        %v963 = vunpack.c.l.b16 %v731
        %v964 = vunpack.c.h.b16 %v731
        %v965 = vunpack.c.l.b16 %v732
        %v966 = vunpack.c.h.b16 %v732
        %v967 = vunpack.c.l.b16 %v733
        %v968 = vunpack.c.h.b16 %v733
        %v969 = vunpack.c.l.b16 %v734
        %v970 = vunpack.c.h.b16 %v734
        %v971 = vunpack.c.l.b16 %v735
        %v972 = vunpack.c.h.b16 %v735
        %v973 = vunpack.c.l.b16 %v736
        %v974 = vunpack.c.h.b16 %v736
        %v975 = vunpack.c.l.b16 %v737
        %v976 = vunpack.c.h.b16 %v737
        %v977 = vunpack.c.l.b16 %v738
        %v978 = vunpack.c.h.b16 %v738
        %v979 = vunpack.c.l.b16 %v739
        %v980 = vunpack.c.h.b16 %v739
        %v981 = vunpack.c.l.b16 %v740
        %v982 = vunpack.c.h.b16 %v740
        %v983 = vunpack.c.l.b16 %v741
        %v984 = vunpack.c.h.b16 %v741
        %v985 = vunpack.c.l.b16 %v742
        %v986 = vunpack.c.h.b16 %v742
        %v987 = vunpack.c.l.b16 %v743
        %v988 = vunpack.c.h.b16 %v743
        %v989 = vunpack.c.l.b16 %v744
        %v990 = vunpack.c.h.b16 %v744
        %v991 = vunpack.c.l.b16 %v745
        %v992 = vunpack.c.h.b16 %v745
        %v993 = vunpack.c.l.b16 %v746
        %v994 = vunpack.c.h.b16 %v746
        %v995 = vunpack.c.l.b16 %v747
        %v996 = vunpack.c.h.b16 %v747
        %v997 = vunpack.c.l.b16 %v748
        %v998 = vunpack.c.h.b16 %v748
        %v999 = vunpack.c.l.b16 %v749
        %v1000 = vunpack.c.h.b16 %v749
        %v1001 = vunpack.c.l.b16 %v750
        %v1002 = vunpack.c.h.b16 %v750
        %v1003 = vunpack.c.l.b16 %v751
        %v1004 = vunpack.c.h.b16 %v751
        %v1005 = vunpack.c.l.b16 %v752
        %v1006 = vunpack.c.h.b16 %v752
        %v1007 = vunpack.c.l.b16 %v753
        %v1008 = vunpack.c.h.b16 %v753
        %v1009 = vunpack.c.l.b16 %v754
        %v1010 = vunpack.c.h.b16 %v754
        %v1011 = vpack.c.b16 %v885, %v883
        %v1012 = vpack.c.b16 %v886, %v884
        %v1013 = vpack.c.b16 %v889, %v887
        %v1014 = vpack.c.b16 %v890, %v888
        %v1015 = vpack.c.b16 %v893, %v891
        %v1016 = vpack.c.b16 %v894, %v892
        %v1017 = vpack.c.b16 %v897, %v895
        %v1018 = vpack.c.b16 %v898, %v896
        %v1019 = vpack.c.b16 %v901, %v899
        %v1020 = vpack.c.b16 %v902, %v900
        %v1021 = vpack.c.b16 %v905, %v903
        %v1022 = vpack.c.b16 %v906, %v904
        %v1023 = vpack.c.b16 %v909, %v907
        %v1024 = vpack.c.b16 %v910, %v908
        %v1025 = vpack.c.b16 %v913, %v911
        %v1026 = vpack.c.b16 %v914, %v912
        %v1027 = vpack.c.b16 %v917, %v915
        %v1028 = vpack.c.b16 %v918, %v916
        %v1029 = vpack.c.b16 %v921, %v919
        %v1030 = vpack.c.b16 %v922, %v920
        %v1031 = vpack.c.b16 %v925, %v923
        %v1032 = vpack.c.b16 %v926, %v924
        %v1033 = vpack.c.b16 %v929, %v927
        %v1034 = vpack.c.b16 %v930, %v928
        %v1035 = vpack.c.b16 %v933, %v931
        %v1036 = vpack.c.b16 %v934, %v932
        %v1037 = vpack.c.b16 %v937, %v935
        %v1038 = vpack.c.b16 %v938, %v936
        %v1039 = vpack.c.b16 %v941, %v939
        %v1040 = vpack.c.b16 %v942, %v940
        %v1041 = vpack.c.b16 %v945, %v943
        %v1042 = vpack.c.b16 %v946, %v944
        %v1043 = vpack.c.b16 %v949, %v947
        %v1044 = vpack.c.b16 %v950, %v948
        %v1045 = vpack.c.b16 %v953, %v951
        %v1046 = vpack.c.b16 %v954, %v952
        %v1047 = vpack.c.b16 %v957, %v955
        %v1048 = vpack.c.b16 %v958, %v956
        %v1049 = vpack.c.b16 %v961, %v959
        %v1050 = vpack.c.b16 %v962, %v960
        %v1051 = vpack.c.b16 %v965, %v963
        %v1052 = vpack.c.b16 %v966, %v964
        %v1053 = vpack.c.b16 %v969, %v967
        %v1054 = vpack.c.b16 %v970, %v968
        %v1055 = vpack.c.b16 %v973, %v971
        %v1056 = vpack.c.b16 %v974, %v972
        %v1057 = vpack.c.b16 %v977, %v975
        %v1058 = vpack.c.b16 %v978, %v976
        %v1059 = vpack.c.b16 %v981, %v979
        %v1060 = vpack.c.b16 %v982, %v980
        %v1061 = vpack.c.b16 %v985, %v983
        %v1062 = vpack.c.b16 %v986, %v984
        %v1063 = vpack.c.b16 %v989, %v987
        %v1064 = vpack.c.b16 %v990, %v988
        %v1065 = vpack.c.b16 %v993, %v991
        %v1066 = vpack.c.b16 %v994, %v992
        %v1067 = vpack.c.b16 %v997, %v995
        %v1068 = vpack.c.b16 %v998, %v996
        %v1069 = vpack.c.b16 %v1001, %v999
        %v1070 = vpack.c.b16 %v1002, %v1000
        %v1071 = vpack.c.b16 %v1005, %v1003
        %v1072 = vpack.c.b16 %v1006, %v1004
        %v1073 = vpack.c.b16 %v1009, %v1007
        %v1074 = vpack.c.b16 %v1010, %v1008
        %v1203 = vunpack.c.l.b16 %v755
        %v1204 = vunpack.c.h.b16 %v755
        %v1205 = vunpack.c.l.b16 %v756
        %v1206 = vunpack.c.l.b16 %v757
        %v1207 = vunpack.c.h.b16 %v757
        %v1208 = vunpack.c.l.b16 %v758
        %v1209 = vunpack.c.l.b16 %v759
        %v1210 = vunpack.c.h.b16 %v759
        %v1211 = vunpack.c.l.b16 %v760
        %v1212 = vunpack.c.l.b16 %v761
        %v1213 = vunpack.c.h.b16 %v761
        %v1214 = vunpack.c.l.b16 %v762
        %v1215 = vunpack.c.l.b16 %v763
        %v1216 = vunpack.c.h.b16 %v763
        %v1217 = vunpack.c.l.b16 %v764
        %v1218 = vunpack.c.l.b16 %v765
        %v1219 = vunpack.c.h.b16 %v765
        %v1220 = vunpack.c.l.b16 %v766
        %v1221 = vunpack.c.l.b16 %v767
        %v1222 = vunpack.c.h.b16 %v767
        %v1223 = vunpack.c.l.b16 %v768
        %v1224 = vunpack.c.l.b16 %v769
        %v1225 = vunpack.c.h.b16 %v769
        %v1226 = vunpack.c.l.b16 %v770
        %v1227 = vunpack.c.l.b16 %v771
        %v1228 = vunpack.c.h.b16 %v771
        %v1229 = vunpack.c.l.b16 %v772
        %v1230 = vunpack.c.l.b16 %v773
        %v1231 = vunpack.c.h.b16 %v773
        %v1232 = vunpack.c.l.b16 %v774
        %v1233 = vunpack.c.l.b16 %v775
        %v1234 = vunpack.c.h.b16 %v775
        %v1235 = vunpack.c.l.b16 %v776
        %v1236 = vunpack.c.l.b16 %v777
        %v1237 = vunpack.c.h.b16 %v777
        %v1238 = vunpack.c.l.b16 %v778
        %v1239 = vunpack.c.l.b16 %v779
        %v1240 = vunpack.c.h.b16 %v779
        %v1241 = vunpack.c.l.b16 %v780
        %v1242 = vunpack.c.l.b16 %v781
        %v1243 = vunpack.c.h.b16 %v781
        %v1244 = vunpack.c.l.b16 %v782
        %v1245 = vunpack.c.l.b16 %v783
        %v1246 = vunpack.c.h.b16 %v783
        %v1247 = vunpack.c.l.b16 %v784
        %v1248 = vunpack.c.l.b16 %v785
        %v1249 = vunpack.c.h.b16 %v785
        %v1250 = vunpack.c.l.b16 %v786
        %v1251 = vunpack.c.l.b16 %v787
        %v1252 = vunpack.c.h.b16 %v787
        %v1253 = vunpack.c.l.b16 %v788
        %v1254 = vunpack.c.l.b16 %v789
        %v1255 = vunpack.c.h.b16 %v789
        %v1256 = vunpack.c.l.b16 %v790
        %v1257 = vunpack.c.l.b16 %v791
        %v1258 = vunpack.c.h.b16 %v791
        %v1259 = vunpack.c.l.b16 %v792
        %v1260 = vunpack.c.l.b16 %v793
        %v1261 = vunpack.c.h.b16 %v793
        %v1262 = vunpack.c.l.b16 %v794
        %v1263 = vunpack.c.l.b16 %v795
        %v1264 = vunpack.c.h.b16 %v795
        %v1265 = vunpack.c.l.b16 %v796
        %v1266 = vunpack.c.l.b16 %v797
        %v1267 = vunpack.c.h.b16 %v797
        %v1268 = vunpack.c.l.b16 %v798
        %v1269 = vunpack.c.l.b16 %v799
        %v1270 = vunpack.c.h.b16 %v799
        %v1271 = vunpack.c.l.b16 %v800
        %v1272 = vunpack.c.l.b16 %v801
        %v1273 = vunpack.c.h.b16 %v801
        %v1274 = vunpack.c.l.b16 %v802
        %v1275 = vunpack.c.l.b16 %v803
        %v1276 = vunpack.c.h.b16 %v803
        %v1277 = vunpack.c.l.b16 %v804
        %v1278 = vunpack.c.l.b16 %v805
        %v1279 = vunpack.c.h.b16 %v805
        %v1280 = vunpack.c.l.b16 %v806
        %v1281 = vunpack.c.l.b16 %v807
        %v1282 = vunpack.c.h.b16 %v807
        %v1283 = vunpack.c.l.b16 %v808
        %v1284 = vunpack.c.l.b16 %v809
        %v1285 = vunpack.c.h.b16 %v809
        %v1286 = vunpack.c.l.b16 %v810
        %v1287 = vunpack.c.l.b16 %v811
        %v1288 = vunpack.c.h.b16 %v811
        %v1289 = vunpack.c.l.b16 %v812
        %v1290 = vunpack.c.l.b16 %v813
        %v1291 = vunpack.c.h.b16 %v813
        %v1292 = vunpack.c.l.b16 %v814
        %v1293 = vunpack.c.l.b16 %v815
        %v1294 = vunpack.c.h.b16 %v815
        %v1295 = vunpack.c.l.b16 %v816
        %v1296 = vunpack.c.l.b16 %v817
        %v1297 = vunpack.c.h.b16 %v817
        %v1298 = vunpack.c.l.b16 %v818
        %v1299 = vpack.c.b16 %v1206, %v1203
        %v1300 = vpack.c.b16 %v1207, %v1204
        %v1301 = vpack.c.b16 %v1208, %v1205
        %v1302 = vpack.c.b16 %v1212, %v1209
        %v1303 = vpack.c.b16 %v1213, %v1210
        %v1304 = vpack.c.b16 %v1214, %v1211
        %v1305 = vpack.c.b16 %v1218, %v1215
        %v1306 = vpack.c.b16 %v1219, %v1216
        %v1307 = vpack.c.b16 %v1220, %v1217
        %v1308 = vpack.c.b16 %v1224, %v1221
        %v1309 = vpack.c.b16 %v1225, %v1222
        %v1310 = vpack.c.b16 %v1226, %v1223
        %v1311 = vpack.c.b16 %v1230, %v1227
        %v1312 = vpack.c.b16 %v1231, %v1228
        %v1313 = vpack.c.b16 %v1232, %v1229
        %v1314 = vpack.c.b16 %v1236, %v1233
        %v1315 = vpack.c.b16 %v1237, %v1234
        %v1316 = vpack.c.b16 %v1238, %v1235
        %v1317 = vpack.c.b16 %v1242, %v1239
        %v1318 = vpack.c.b16 %v1243, %v1240
        %v1319 = vpack.c.b16 %v1244, %v1241
        %v1320 = vpack.c.b16 %v1248, %v1245
        %v1321 = vpack.c.b16 %v1249, %v1246
        %v1322 = vpack.c.b16 %v1250, %v1247
        %v1323 = vpack.c.b16 %v1254, %v1251
        %v1324 = vpack.c.b16 %v1255, %v1252
        %v1325 = vpack.c.b16 %v1256, %v1253
        %v1326 = vpack.c.b16 %v1260, %v1257
        %v1327 = vpack.c.b16 %v1261, %v1258
        %v1328 = vpack.c.b16 %v1262, %v1259
        %v1329 = vpack.c.b16 %v1266, %v1263
        %v1330 = vpack.c.b16 %v1267, %v1264
        %v1331 = vpack.c.b16 %v1268, %v1265
        %v1332 = vpack.c.b16 %v1272, %v1269
        %v1333 = vpack.c.b16 %v1273, %v1270
        %v1334 = vpack.c.b16 %v1274, %v1271
        %v1335 = vpack.c.b16 %v1278, %v1275
        %v1336 = vpack.c.b16 %v1279, %v1276
        %v1337 = vpack.c.b16 %v1280, %v1277
        %v1338 = vpack.c.b16 %v1284, %v1281
        %v1339 = vpack.c.b16 %v1285, %v1282
        %v1340 = vpack.c.b16 %v1286, %v1283
        %v1341 = vpack.c.b16 %v1290, %v1287
        %v1342 = vpack.c.b16 %v1291, %v1288
        %v1343 = vpack.c.b16 %v1292, %v1289
        %v1344 = vpack.c.b16 %v1296, %v1293
        %v1345 = vpack.c.b16 %v1297, %v1294
        %v1346 = vpack.c.b16 %v1298, %v1295
        %1395 = vmatprep.subr.bf16.mxu0 %v1300
        %1396 = vmatpush1.bf16.msra.mxu0 %v1299
        %1397 = vmatprep.subr.bf16.mxu0 %v1303
        %1398 = vmatpush1.bf16.msra.mxu0 %v1302
        %1399 = vmatprep.subr.bf16.mxu0 %v1306
        %1400 = vmatpush1.bf16.msra.mxu0 %v1305
        %1401 = vmatprep.subr.bf16.mxu0 %v1309
        %1402 = vmatpush1.bf16.msra.mxu0 %v1308
        %1403 = vmatprep.subr.bf16.mxu0 %v1312
        %1404 = vmatpush1.bf16.msra.mxu0 %v1311
        %1405 = vmatprep.subr.bf16.mxu0 %v1315
        %1406 = vmatpush1.bf16.msra.mxu0 %v1314
        %1407 = vmatprep.subr.bf16.mxu0 %v1318
        %1408 = vmatpush1.bf16.msra.mxu0 %v1317
        %1409 = vmatprep.subr.bf16.mxu0 %v1321
        %1410 = vmatpush1.bf16.msra.mxu0 %v1320
        %1411 = vmatprep.subr.bf16.mxu0 %v1324
        %1412 = vmatpush1.bf16.msra.mxu0 %v1323
        %1413 = vmatprep.subr.bf16.mxu0 %v1327
        %1414 = vmatpush1.bf16.msra.mxu0 %v1326
        %1415 = vmatprep.subr.bf16.mxu0 %v1330
        %1416 = vmatpush1.bf16.msra.mxu0 %v1329
        %1417 = vmatprep.subr.bf16.mxu0 %v1333
        %1418 = vmatpush1.bf16.msra.mxu0 %v1332
        %1419 = vmatprep.subr.bf16.mxu0 %v1336
        %1420 = vmatpush1.bf16.msra.mxu0 %v1335
        %1421 = vmatprep.subr.bf16.mxu0 %v1339
        %1422 = vmatpush1.bf16.msra.mxu0 %v1338
        %1423 = vmatprep.subr.bf16.mxu0 %v1342
        %1424 = vmatpush1.bf16.msra.mxu0 %v1341
        %1425 = vmatprep.subr.bf16.mxu0 %v1345
        %1426 = vmatpush1.bf16.msra.mxu0 %v1344
        %1427 = vmatprep.mubr.bf16.mxu0 %v1012
        %1428 = vmatmul.mubr.bf16.gmra.mrb[0].mxu0 %v1011
        %v1429 = vpop.f32.mrb[0].mxu0
        %v1430 = vadd.f32 0.0, %v1429
        %v1431 = vpop.f32.mrb[0].mxu0
        %v1432 = vadd.f32 0.0, %v1431
        %v1433 = vpop.f32.mrb[0].mxu0
        %v1434 = vadd.f32 0.0, %v1433
        %v1435 = vpop.f32.mrb[0].mxu0
        %v1436 = vadd.f32 0.0, %v1435
        %1437 = vmatprep.mubr.bf16.mxu0 %v1014
        %1438 = vmatmul.mubr.bf16.gmra.mrb[0].mxu0 %v1013
        %v1439 = vpop.f32.mrb[0].mxu0
        %v1440 = vadd.f32 0.0, %v1439
        %v1441 = vpop.f32.mrb[0].mxu0
        %v1442 = vadd.f32 0.0, %v1441
        %v1443 = vpop.f32.mrb[0].mxu0
        %v1444 = vadd.f32 0.0, %v1443
        %v1445 = vpop.f32.mrb[0].mxu0
        %v1446 = vadd.f32 0.0, %v1445
        %1447 = vmatprep.mubr.bf16.mxu0 %v1016
        %1448 = vmatmul.mubr.bf16.gmra.mrb[0].mxu0 %v1015
        %v1449 = vpop.f32.mrb[0].mxu0
        %v1450 = vadd.f32 0.0, %v1449
        %v1451 = vpop.f32.mrb[0].mxu0
        %v1452 = vadd.f32 0.0, %v1451
        %v1453 = vpop.f32.mrb[0].mxu0
        %v1454 = vadd.f32 0.0, %v1453
        %v1455 = vpop.f32.mrb[0].mxu0
        %v1456 = vadd.f32 0.0, %v1455
        %1457 = vmatprep.mubr.bf16.mxu0 %v1018
        %1458 = vmatmul.mubr.bf16.gmra.mrb[0].mxu0 %v1017
        %v1459 = vpop.f32.mrb[0].mxu0
        %v1460 = vadd.f32 0.0, %v1459
        %v1461 = vpop.f32.mrb[0].mxu0
        %v1462 = vadd.f32 0.0, %v1461
        %v1463 = vpop.f32.mrb[0].mxu0
        %v1464 = vadd.f32 0.0, %v1463
        %v1465 = vpop.f32.mrb[0].mxu0
        %v1466 = vadd.f32 0.0, %v1465
        %1467 = vmatprep.mubr.bf16.mxu0 %v1020
        %1468 = vmatmul.mubr.bf16.gmra.mrb[0].mxu0 %v1019
        %v1469 = vpop.f32.mrb[0].mxu0
        %v1470 = vadd.f32 0.0, %v1469
        %v1471 = vpop.f32.mrb[0].mxu0
        %v1472 = vadd.f32 0.0, %v1471
        %v1473 = vpop.f32.mrb[0].mxu0
        %v1474 = vadd.f32 0.0, %v1473
        %v1475 = vpop.f32.mrb[0].mxu0
        %v1476 = vadd.f32 0.0, %v1475
        %1477 = vmatprep.mubr.bf16.mxu0 %v1022
        %1478 = vmatmul.mubr.bf16.gmra.mrb[0].mxu0 %v1021
        %v1479 = vpop.f32.mrb[0].mxu0
        %v1480 = vadd.f32 0.0, %v1479
        %v1481 = vpop.f32.mrb[0].mxu0
        %v1482 = vadd.f32 0.0, %v1481
        %v1483 = vpop.f32.mrb[0].mxu0
        %v1484 = vadd.f32 0.0, %v1483
        %v1485 = vpop.f32.mrb[0].mxu0
        %v1486 = vadd.f32 0.0, %v1485
        %1487 = vmatprep.mubr.bf16.mxu0 %v1024
        %1488 = vmatmul.mubr.bf16.gmra.mrb[0].mxu0 %v1023
        %v1489 = vpop.f32.mrb[0].mxu0
        %v1490 = vadd.f32 0.0, %v1489
        %v1491 = vpop.f32.mrb[0].mxu0
        %v1492 = vadd.f32 0.0, %v1491
        %v1493 = vpop.f32.mrb[0].mxu0
        %v1494 = vadd.f32 0.0, %v1493
        %v1495 = vpop.f32.mrb[0].mxu0
        %v1496 = vadd.f32 0.0, %v1495
        %1497 = vmatprep.mubr.bf16.mxu0 %v1026
        %1498 = vmatmul.mubr.bf16.gmra.mrb[0].mxu0 %v1025
        %v1499 = vpop.f32.mrb[0].mxu0
        %v1500 = vadd.f32 0.0, %v1499
        %v1501 = vpop.f32.mrb[0].mxu0
        %v1502 = vadd.f32 0.0, %v1501
        %v1503 = vpop.f32.mrb[0].mxu0
        %v1504 = vadd.f32 0.0, %v1503
        %v1505 = vpop.f32.mrb[0].mxu0
        %v1506 = vadd.f32 0.0, %v1505
        %1507 = vmatprep.mubr.bf16.mxu0 %v1028
        %1508 = vmatmul.mubr.bf16.gmra.mrb[0].mxu0 %v1027
        %v1509 = vpop.f32.mrb[0].mxu0
        %v1510 = vadd.f32 0.0, %v1509
        %v1511 = vpop.f32.mrb[0].mxu0
        %v1512 = vadd.f32 0.0, %v1511
        %v1513 = vpop.f32.mrb[0].mxu0
        %v1514 = vadd.f32 0.0, %v1513
        %v1515 = vpop.f32.mrb[0].mxu0
        %v1516 = vadd.f32 0.0, %v1515
        %1517 = vmatprep.mubr.bf16.mxu0 %v1030
        %1518 = vmatmul.mubr.bf16.gmra.mrb[0].mxu0 %v1029
        %v1519 = vpop.f32.mrb[0].mxu0
        %v1520 = vadd.f32 0.0, %v1519
        %v1521 = vpop.f32.mrb[0].mxu0
        %v1522 = vadd.f32 0.0, %v1521
        %v1523 = vpop.f32.mrb[0].mxu0
        %v1524 = vadd.f32 0.0, %v1523
        %v1525 = vpop.f32.mrb[0].mxu0
        %v1526 = vadd.f32 0.0, %v1525
        %1527 = vmatprep.mubr.bf16.mxu0 %v1032
        %1528 = vmatmul.mubr.bf16.gmra.mrb[0].mxu0 %v1031
        %v1529 = vpop.f32.mrb[0].mxu0
        %v1530 = vadd.f32 0.0, %v1529
        %v1531 = vpop.f32.mrb[0].mxu0
        %v1532 = vadd.f32 0.0, %v1531
        %v1533 = vpop.f32.mrb[0].mxu0
        %v1534 = vadd.f32 0.0, %v1533
        %v1535 = vpop.f32.mrb[0].mxu0
        %v1536 = vadd.f32 0.0, %v1535
        %1537 = vmatprep.mubr.bf16.mxu0 %v1034
        %1538 = vmatmul.mubr.bf16.gmra.mrb[0].mxu0 %v1033
        %v1539 = vpop.f32.mrb[0].mxu0
        %v1540 = vadd.f32 0.0, %v1539
        %v1541 = vpop.f32.mrb[0].mxu0
        %v1542 = vadd.f32 0.0, %v1541
        %v1543 = vpop.f32.mrb[0].mxu0
        %v1544 = vadd.f32 0.0, %v1543
        %v1545 = vpop.f32.mrb[0].mxu0
        %v1546 = vadd.f32 0.0, %v1545
        %1547 = vmatprep.mubr.bf16.mxu0 %v1036
        %1548 = vmatmul.mubr.bf16.gmra.mrb[0].mxu0 %v1035
        %v1549 = vpop.f32.mrb[0].mxu0
        %v1550 = vadd.f32 0.0, %v1549
        %v1551 = vpop.f32.mrb[0].mxu0
        %v1552 = vadd.f32 0.0, %v1551
        %v1553 = vpop.f32.mrb[0].mxu0
        %v1554 = vadd.f32 0.0, %v1553
        %v1555 = vpop.f32.mrb[0].mxu0
        %v1556 = vadd.f32 0.0, %v1555
        %1557 = vmatprep.mubr.bf16.mxu0 %v1038
        %1558 = vmatmul.mubr.bf16.gmra.mrb[0].mxu0 %v1037
        %v1559 = vpop.f32.mrb[0].mxu0
        %v1560 = vadd.f32 0.0, %v1559
        %v1561 = vpop.f32.mrb[0].mxu0
        %v1562 = vadd.f32 0.0, %v1561
        %v1563 = vpop.f32.mrb[0].mxu0
        %v1564 = vadd.f32 0.0, %v1563
        %v1565 = vpop.f32.mrb[0].mxu0
        %v1566 = vadd.f32 0.0, %v1565
        %1567 = vmatprep.mubr.bf16.mxu0 %v1040
        %1568 = vmatmul.mubr.bf16.gmra.mrb[0].mxu0 %v1039
        %v1569 = vpop.f32.mrb[0].mxu0
        %v1570 = vadd.f32 0.0, %v1569
        %v1571 = vpop.f32.mrb[0].mxu0
        %v1572 = vadd.f32 0.0, %v1571
        %v1573 = vpop.f32.mrb[0].mxu0
        %v1574 = vadd.f32 0.0, %v1573
        %v1575 = vpop.f32.mrb[0].mxu0
        %v1576 = vadd.f32 0.0, %v1575
        %1577 = vmatprep.mubr.bf16.mxu0 %v1042
        %1578 = vmatmul.mubr.bf16.gmra.mrb[0].mxu0 %v1041
        %v1579 = vpop.f32.mrb[0].mxu0
        %v1580 = vadd.f32 0.0, %v1579
        %v1581 = vpop.f32.mrb[0].mxu0
        %v1582 = vadd.f32 0.0, %v1581
        %v1583 = vpop.f32.mrb[0].mxu0
        %v1584 = vadd.f32 0.0, %v1583
        %v1585 = vpop.f32.mrb[0].mxu0
        %v1586 = vadd.f32 0.0, %v1585
        %1587 = vmatprep.mubr.bf16.mxu0 %v1044
        %1588 = vmatmul.mubr.bf16.gmra.mrb[0].mxu0 %v1043
        %v1589 = vpop.f32.mrb[0].mxu0
        %v1590 = vadd.f32 0.0, %v1589
        %v1591 = vpop.f32.mrb[0].mxu0
        %v1592 = vadd.f32 0.0, %v1591
        %v1593 = vpop.f32.mrb[0].mxu0
        %v1594 = vadd.f32 0.0, %v1593
        %v1595 = vpop.f32.mrb[0].mxu0
        %v1596 = vadd.f32 0.0, %v1595
        %1597 = vmatprep.mubr.bf16.mxu0 %v1046
        %1598 = vmatmul.mubr.bf16.gmra.mrb[0].mxu0 %v1045
        %v1599 = vpop.f32.mrb[0].mxu0
        %v1600 = vadd.f32 0.0, %v1599
        %v1601 = vpop.f32.mrb[0].mxu0
        %v1602 = vadd.f32 0.0, %v1601
        %v1603 = vpop.f32.mrb[0].mxu0
        %v1604 = vadd.f32 0.0, %v1603
        %v1605 = vpop.f32.mrb[0].mxu0
        %v1606 = vadd.f32 0.0, %v1605
        %1607 = vmatprep.mubr.bf16.mxu0 %v1048
        %1608 = vmatmul.mubr.bf16.gmra.mrb[0].mxu0 %v1047
        %v1609 = vpop.f32.mrb[0].mxu0
        %v1610 = vadd.f32 0.0, %v1609
        %v1611 = vpop.f32.mrb[0].mxu0
        %v1612 = vadd.f32 0.0, %v1611
        %v1613 = vpop.f32.mrb[0].mxu0
        %v1614 = vadd.f32 0.0, %v1613
        %v1615 = vpop.f32.mrb[0].mxu0
        %v1616 = vadd.f32 0.0, %v1615
        %1617 = vmatprep.mubr.bf16.mxu0 %v1050
        %1618 = vmatmul.mubr.bf16.gmra.mrb[0].mxu0 %v1049
        %v1619 = vpop.f32.mrb[0].mxu0
        %v1620 = vadd.f32 0.0, %v1619
        %v1621 = vpop.f32.mrb[0].mxu0
        %v1622 = vadd.f32 0.0, %v1621
        %v1623 = vpop.f32.mrb[0].mxu0
        %v1624 = vadd.f32 0.0, %v1623
        %v1625 = vpop.f32.mrb[0].mxu0
        %v1626 = vadd.f32 0.0, %v1625
        %1627 = vmatprep.mubr.bf16.mxu0 %v1052
        %1628 = vmatmul.mubr.bf16.gmra.mrb[0].mxu0 %v1051
        %v1629 = vpop.f32.mrb[0].mxu0
        %v1630 = vadd.f32 0.0, %v1629
        %v1631 = vpop.f32.mrb[0].mxu0
        %v1632 = vadd.f32 0.0, %v1631
        %v1633 = vpop.f32.mrb[0].mxu0
        %v1634 = vadd.f32 0.0, %v1633
        %v1635 = vpop.f32.mrb[0].mxu0
        %v1636 = vadd.f32 0.0, %v1635
        %1637 = vmatprep.mubr.bf16.mxu0 %v1054
        %1638 = vmatmul.mubr.bf16.gmra.mrb[0].mxu0 %v1053
        %v1639 = vpop.f32.mrb[0].mxu0
        %v1640 = vadd.f32 0.0, %v1639
        %v1641 = vpop.f32.mrb[0].mxu0
        %v1642 = vadd.f32 0.0, %v1641
        %v1643 = vpop.f32.mrb[0].mxu0
        %v1644 = vadd.f32 0.0, %v1643
        %v1645 = vpop.f32.mrb[0].mxu0
        %v1646 = vadd.f32 0.0, %v1645
        %1647 = vmatprep.mubr.bf16.mxu0 %v1056
        %1648 = vmatmul.mubr.bf16.gmra.mrb[0].mxu0 %v1055
        %v1649 = vpop.f32.mrb[0].mxu0
        %v1650 = vadd.f32 0.0, %v1649
        %v1651 = vpop.f32.mrb[0].mxu0
        %v1652 = vadd.f32 0.0, %v1651
        %v1653 = vpop.f32.mrb[0].mxu0
        %v1654 = vadd.f32 0.0, %v1653
        %v1655 = vpop.f32.mrb[0].mxu0
        %v1656 = vadd.f32 0.0, %v1655
        %1657 = vmatprep.mubr.bf16.mxu0 %v1058
        %1658 = vmatmul.mubr.bf16.gmra.mrb[0].mxu0 %v1057
        %v1659 = vpop.f32.mrb[0].mxu0
        %v1660 = vadd.f32 0.0, %v1659
        %v1661 = vpop.f32.mrb[0].mxu0
        %v1662 = vadd.f32 0.0, %v1661
        %v1663 = vpop.f32.mrb[0].mxu0
        %v1664 = vadd.f32 0.0, %v1663
        %v1665 = vpop.f32.mrb[0].mxu0
        %v1666 = vadd.f32 0.0, %v1665
        %1667 = vmatprep.mubr.bf16.mxu0 %v1060
        %1668 = vmatmul.mubr.bf16.gmra.mrb[0].mxu0 %v1059
        %v1669 = vpop.f32.mrb[0].mxu0
        %v1670 = vadd.f32 0.0, %v1669
        %v1671 = vpop.f32.mrb[0].mxu0
        %v1672 = vadd.f32 0.0, %v1671
        %v1673 = vpop.f32.mrb[0].mxu0
        %v1674 = vadd.f32 0.0, %v1673
        %v1675 = vpop.f32.mrb[0].mxu0
        %v1676 = vadd.f32 0.0, %v1675
        %1677 = vmatprep.mubr.bf16.mxu0 %v1062
        %1678 = vmatmul.mubr.bf16.gmra.mrb[0].mxu0 %v1061
        %v1679 = vpop.f32.mrb[0].mxu0
        %v1680 = vadd.f32 0.0, %v1679
        %v1681 = vpop.f32.mrb[0].mxu0
        %v1682 = vadd.f32 0.0, %v1681
        %v1683 = vpop.f32.mrb[0].mxu0
        %v1684 = vadd.f32 0.0, %v1683
        %v1685 = vpop.f32.mrb[0].mxu0
        %v1686 = vadd.f32 0.0, %v1685
        %1687 = vmatprep.mubr.bf16.mxu0 %v1064
        %1688 = vmatmul.mubr.bf16.gmra.mrb[0].mxu0 %v1063
        %v1689 = vpop.f32.mrb[0].mxu0
        %v1690 = vadd.f32 0.0, %v1689
        %v1691 = vpop.f32.mrb[0].mxu0
        %v1692 = vadd.f32 0.0, %v1691
        %v1693 = vpop.f32.mrb[0].mxu0
        %v1694 = vadd.f32 0.0, %v1693
        %v1695 = vpop.f32.mrb[0].mxu0
        %v1696 = vadd.f32 0.0, %v1695
        %1697 = vmatprep.mubr.bf16.mxu0 %v1066
        %1698 = vmatmul.mubr.bf16.gmra.mrb[0].mxu0 %v1065
        %v1699 = vpop.f32.mrb[0].mxu0
        %v1700 = vadd.f32 0.0, %v1699
        %v1701 = vpop.f32.mrb[0].mxu0
        %v1702 = vadd.f32 0.0, %v1701
        %v1703 = vpop.f32.mrb[0].mxu0
        %v1704 = vadd.f32 0.0, %v1703
        %v1705 = vpop.f32.mrb[0].mxu0
        %v1706 = vadd.f32 0.0, %v1705
        %1707 = vmatprep.mubr.bf16.mxu0 %v1068
        %1708 = vmatmul.mubr.bf16.gmra.mrb[0].mxu0 %v1067
        %v1709 = vpop.f32.mrb[0].mxu0
        %v1710 = vadd.f32 0.0, %v1709
        %v1711 = vpop.f32.mrb[0].mxu0
        %v1712 = vadd.f32 0.0, %v1711
        %v1713 = vpop.f32.mrb[0].mxu0
        %v1714 = vadd.f32 0.0, %v1713
        %v1715 = vpop.f32.mrb[0].mxu0
        %v1716 = vadd.f32 0.0, %v1715
        %1717 = vmatprep.mubr.bf16.mxu0 %v1070
        %1718 = vmatmul.mubr.bf16.gmra.mrb[0].mxu0 %v1069
        %v1719 = vpop.f32.mrb[0].mxu0
        %v1720 = vadd.f32 0.0, %v1719
        %v1721 = vpop.f32.mrb[0].mxu0
        %v1722 = vadd.f32 0.0, %v1721
        %v1723 = vpop.f32.mrb[0].mxu0
        %v1724 = vadd.f32 0.0, %v1723
        %v1725 = vpop.f32.mrb[0].mxu0
        %v1726 = vadd.f32 0.0, %v1725
        %1727 = vmatprep.mubr.bf16.mxu0 %v1072
        %1728 = vmatmul.mubr.bf16.gmra.mrb[0].mxu0 %v1071
        %v1729 = vpop.f32.mrb[0].mxu0
        %v1730 = vadd.f32 0.0, %v1729
        %v1731 = vpop.f32.mrb[0].mxu0
        %v1732 = vadd.f32 0.0, %v1731
        %v1733 = vpop.f32.mrb[0].mxu0
        %v1734 = vadd.f32 0.0, %v1733
        %v1735 = vpop.f32.mrb[0].mxu0
        %v1736 = vadd.f32 0.0, %v1735
        %1737 = vmatprep.mubr.bf16.mxu0 %v1074
        %1738 = vmatmul.mubr.bf16.gmra.mrb[0].mxu0 %v1073
        %v1739 = vpop.f32.mrb[0].mxu0
        %v1740 = vadd.f32 0.0, %v1739
        %v1741 = vpop.f32.mrb[0].mxu0
        %v1742 = vadd.f32 0.0, %v1741
        %v1743 = vpop.f32.mrb[0].mxu0
        %v1744 = vadd.f32 0.0, %v1743
        %v1745 = vpop.f32.mrb[0].mxu0
        %v1746 = vadd.f32 0.0, %v1745
        %1747 = vdwg.mxu0
        %1748 = vmatprep.subr.bf16.mxu0 0
        %1749 = vmatpush1.bf16.msra.mxu0 %v1301
        %1750 = vmatprep.subr.bf16.mxu0 0
        %1751 = vmatpush1.bf16.msra.mxu0 %v1304
        %1752 = vmatprep.subr.bf16.mxu0 0
        %1753 = vmatpush1.bf16.msra.mxu0 %v1307
        %1754 = vmatprep.subr.bf16.mxu0 0
        %1755 = vmatpush1.bf16.msra.mxu0 %v1310
        %1756 = vmatprep.subr.bf16.mxu0 0
        %1757 = vmatpush1.bf16.msra.mxu0 %v1313
        %1758 = vmatprep.subr.bf16.mxu0 0
        %1759 = vmatpush1.bf16.msra.mxu0 %v1316
        %1760 = vmatprep.subr.bf16.mxu0 0
        %1761 = vmatpush1.bf16.msra.mxu0 %v1319
        %1762 = vmatprep.subr.bf16.mxu0 0
        %1763 = vmatpush1.bf16.msra.mxu0 %v1322
        %1764 = vmatprep.subr.bf16.mxu0 0
        %1765 = vmatpush1.bf16.msra.mxu0 %v1325
        %1766 = vmatprep.subr.bf16.mxu0 0
        %1767 = vmatpush1.bf16.msra.mxu0 %v1328
        %1768 = vmatprep.subr.bf16.mxu0 0
        %1769 = vmatpush1.bf16.msra.mxu0 %v1331
        %1770 = vmatprep.subr.bf16.mxu0 0
        %1771 = vmatpush1.bf16.msra.mxu0 %v1334
        %1772 = vmatprep.subr.bf16.mxu0 0
        %1773 = vmatpush1.bf16.msra.mxu0 %v1337
        %1774 = vmatprep.subr.bf16.mxu0 0
        %1775 = vmatpush1.bf16.msra.mxu0 %v1340
        %1776 = vmatprep.subr.bf16.mxu0 0
        %1777 = vmatpush1.bf16.msra.mxu0 %v1343
        %1778 = vmatprep.subr.bf16.mxu0 0
        %1779 = vmatpush1.bf16.msra.mxu0 %v1346
        %1780 = vmatprep.mubr.bf16.mxu0 %v1012
        %1781 = vmatmul.mubr.bf16.gmra.mrb[0].mxu0 %v1011
        %v1782 = vpop.f32.mrb[0].mxu0
        %v1783 = vadd.f32 0.0, %v1782
        %v1784 = vpop.f32.mrb[0].mxu0
        %v1785 = vpop.f32.mrb[0].mxu0
        %v1786 = vadd.f32 0.0, %v1785
        %v1787 = vpop.f32.mrb[0].mxu0
        %1788 = vmatprep.mubr.bf16.mxu0 %v1014
        %1789 = vmatmul.mubr.bf16.gmra.mrb[0].mxu0 %v1013
        %v1790 = vpop.f32.mrb[0].mxu0
        %v1791 = vadd.f32 0.0, %v1790
        %v1792 = vpop.f32.mrb[0].mxu0
        %v1793 = vpop.f32.mrb[0].mxu0
        %v1794 = vadd.f32 0.0, %v1793
        %v1795 = vpop.f32.mrb[0].mxu0
        %1796 = vmatprep.mubr.bf16.mxu0 %v1016
        %1797 = vmatmul.mubr.bf16.gmra.mrb[0].mxu0 %v1015
        %v1798 = vpop.f32.mrb[0].mxu0
        %v1799 = vadd.f32 0.0, %v1798
        %v1800 = vpop.f32.mrb[0].mxu0
        %v1801 = vpop.f32.mrb[0].mxu0
        %v1802 = vadd.f32 0.0, %v1801
        %v1803 = vpop.f32.mrb[0].mxu0
        %1804 = vmatprep.mubr.bf16.mxu0 %v1018
        %1805 = vmatmul.mubr.bf16.gmra.mrb[0].mxu0 %v1017
        %v1806 = vpop.f32.mrb[0].mxu0
        %v1807 = vadd.f32 0.0, %v1806
        %v1808 = vpop.f32.mrb[0].mxu0
        %v1809 = vpop.f32.mrb[0].mxu0
        %v1810 = vadd.f32 0.0, %v1809
        %v1811 = vpop.f32.mrb[0].mxu0
        %1812 = vmatprep.mubr.bf16.mxu0 %v1020
        %1813 = vmatmul.mubr.bf16.gmra.mrb[0].mxu0 %v1019
        %v1814 = vpop.f32.mrb[0].mxu0
        %v1815 = vadd.f32 0.0, %v1814
        %v1816 = vpop.f32.mrb[0].mxu0
        %v1817 = vpop.f32.mrb[0].mxu0
        %v1818 = vadd.f32 0.0, %v1817
        %v1819 = vpop.f32.mrb[0].mxu0
        %1820 = vmatprep.mubr.bf16.mxu0 %v1022
        %1821 = vmatmul.mubr.bf16.gmra.mrb[0].mxu0 %v1021
        %v1822 = vpop.f32.mrb[0].mxu0
        %v1823 = vadd.f32 0.0, %v1822
        %v1824 = vpop.f32.mrb[0].mxu0
        %v1825 = vpop.f32.mrb[0].mxu0
        %v1826 = vadd.f32 0.0, %v1825
        %v1827 = vpop.f32.mrb[0].mxu0
        %1828 = vmatprep.mubr.bf16.mxu0 %v1024
        %1829 = vmatmul.mubr.bf16.gmra.mrb[0].mxu0 %v1023
        %v1830 = vpop.f32.mrb[0].mxu0
        %v1831 = vadd.f32 0.0, %v1830
        %v1832 = vpop.f32.mrb[0].mxu0
        %v1833 = vpop.f32.mrb[0].mxu0
        %v1834 = vadd.f32 0.0, %v1833
        %v1835 = vpop.f32.mrb[0].mxu0
        %1836 = vmatprep.mubr.bf16.mxu0 %v1026
        %1837 = vmatmul.mubr.bf16.gmra.mrb[0].mxu0 %v1025
        %v1838 = vpop.f32.mrb[0].mxu0
        %v1839 = vadd.f32 0.0, %v1838
        %v1840 = vpop.f32.mrb[0].mxu0
        %v1841 = vpop.f32.mrb[0].mxu0
        %v1842 = vadd.f32 0.0, %v1841
        %v1843 = vpop.f32.mrb[0].mxu0
        %1844 = vmatprep.mubr.bf16.mxu0 %v1028
        %1845 = vmatmul.mubr.bf16.gmra.mrb[0].mxu0 %v1027
        %v1846 = vpop.f32.mrb[0].mxu0
        %v1847 = vadd.f32 0.0, %v1846
        %v1848 = vpop.f32.mrb[0].mxu0
        %v1849 = vpop.f32.mrb[0].mxu0
        %v1850 = vadd.f32 0.0, %v1849
        %v1851 = vpop.f32.mrb[0].mxu0
        %1852 = vmatprep.mubr.bf16.mxu0 %v1030
        %1853 = vmatmul.mubr.bf16.gmra.mrb[0].mxu0 %v1029
        %v1854 = vpop.f32.mrb[0].mxu0
        %v1855 = vadd.f32 0.0, %v1854
        %v1856 = vpop.f32.mrb[0].mxu0
        %v1857 = vpop.f32.mrb[0].mxu0
        %v1858 = vadd.f32 0.0, %v1857
        %v1859 = vpop.f32.mrb[0].mxu0
        %1860 = vmatprep.mubr.bf16.mxu0 %v1032
        %1861 = vmatmul.mubr.bf16.gmra.mrb[0].mxu0 %v1031
        %v1862 = vpop.f32.mrb[0].mxu0
        %v1863 = vadd.f32 0.0, %v1862
        %v1864 = vpop.f32.mrb[0].mxu0
        %v1865 = vpop.f32.mrb[0].mxu0
        %v1866 = vadd.f32 0.0, %v1865
        %v1867 = vpop.f32.mrb[0].mxu0
        %1868 = vmatprep.mubr.bf16.mxu0 %v1034
        %1869 = vmatmul.mubr.bf16.gmra.mrb[0].mxu0 %v1033
        %v1870 = vpop.f32.mrb[0].mxu0
        %v1871 = vadd.f32 0.0, %v1870
        %v1872 = vpop.f32.mrb[0].mxu0
        %v1873 = vpop.f32.mrb[0].mxu0
        %v1874 = vadd.f32 0.0, %v1873
        %v1875 = vpop.f32.mrb[0].mxu0
        %1876 = vmatprep.mubr.bf16.mxu0 %v1036
        %1877 = vmatmul.mubr.bf16.gmra.mrb[0].mxu0 %v1035
        %v1878 = vpop.f32.mrb[0].mxu0
        %v1879 = vadd.f32 0.0, %v1878
        %v1880 = vpop.f32.mrb[0].mxu0
        %v1881 = vpop.f32.mrb[0].mxu0
        %v1882 = vadd.f32 0.0, %v1881
        %v1883 = vpop.f32.mrb[0].mxu0
        %1884 = vmatprep.mubr.bf16.mxu0 %v1038
        %1885 = vmatmul.mubr.bf16.gmra.mrb[0].mxu0 %v1037
        %v1886 = vpop.f32.mrb[0].mxu0
        %v1887 = vadd.f32 0.0, %v1886
        %v1888 = vpop.f32.mrb[0].mxu0
        %v1889 = vpop.f32.mrb[0].mxu0
        %v1890 = vadd.f32 0.0, %v1889
        %v1891 = vpop.f32.mrb[0].mxu0
        %1892 = vmatprep.mubr.bf16.mxu0 %v1040
        %1893 = vmatmul.mubr.bf16.gmra.mrb[0].mxu0 %v1039
        %v1894 = vpop.f32.mrb[0].mxu0
        %v1895 = vadd.f32 0.0, %v1894
        %v1896 = vpop.f32.mrb[0].mxu0
        %v1897 = vpop.f32.mrb[0].mxu0
        %v1898 = vadd.f32 0.0, %v1897
        %v1899 = vpop.f32.mrb[0].mxu0
        %1900 = vmatprep.mubr.bf16.mxu0 %v1042
        %1901 = vmatmul.mubr.bf16.gmra.mrb[0].mxu0 %v1041
        %v1902 = vpop.f32.mrb[0].mxu0
        %v1903 = vadd.f32 0.0, %v1902
        %v1904 = vpop.f32.mrb[0].mxu0
        %v1905 = vpop.f32.mrb[0].mxu0
        %v1906 = vadd.f32 0.0, %v1905
        %v1907 = vpop.f32.mrb[0].mxu0
        %1908 = vmatprep.mubr.bf16.mxu0 %v1044
        %1909 = vmatmul.mubr.bf16.gmra.mrb[0].mxu0 %v1043
        %v1910 = vpop.f32.mrb[0].mxu0
        %v1911 = vadd.f32 0.0, %v1910
        %v1912 = vpop.f32.mrb[0].mxu0
        %v1913 = vpop.f32.mrb[0].mxu0
        %v1914 = vadd.f32 0.0, %v1913
        %v1915 = vpop.f32.mrb[0].mxu0
        %1916 = vmatprep.mubr.bf16.mxu0 %v1046
        %1917 = vmatmul.mubr.bf16.gmra.mrb[0].mxu0 %v1045
        %v1918 = vpop.f32.mrb[0].mxu0
        %v1919 = vadd.f32 0.0, %v1918
        %v1920 = vpop.f32.mrb[0].mxu0
        %v1921 = vpop.f32.mrb[0].mxu0
        %v1922 = vadd.f32 0.0, %v1921
        %v1923 = vpop.f32.mrb[0].mxu0
        %1924 = vmatprep.mubr.bf16.mxu0 %v1048
        %1925 = vmatmul.mubr.bf16.gmra.mrb[0].mxu0 %v1047
        %v1926 = vpop.f32.mrb[0].mxu0
        %v1927 = vadd.f32 0.0, %v1926
        %v1928 = vpop.f32.mrb[0].mxu0
        %v1929 = vpop.f32.mrb[0].mxu0
        %v1930 = vadd.f32 0.0, %v1929
        %v1931 = vpop.f32.mrb[0].mxu0
        %1932 = vmatprep.mubr.bf16.mxu0 %v1050
        %1933 = vmatmul.mubr.bf16.gmra.mrb[0].mxu0 %v1049
        %v1934 = vpop.f32.mrb[0].mxu0
        %v1935 = vadd.f32 0.0, %v1934
        %v1936 = vpop.f32.mrb[0].mxu0
        %v1937 = vpop.f32.mrb[0].mxu0
        %v1938 = vadd.f32 0.0, %v1937
        %v1939 = vpop.f32.mrb[0].mxu0
        %1940 = vmatprep.mubr.bf16.mxu0 %v1052
        %1941 = vmatmul.mubr.bf16.gmra.mrb[0].mxu0 %v1051
        %v1942 = vpop.f32.mrb[0].mxu0
        %v1943 = vadd.f32 0.0, %v1942
        %v1944 = vpop.f32.mrb[0].mxu0
        %v1945 = vpop.f32.mrb[0].mxu0
        %v1946 = vadd.f32 0.0, %v1945
        %v1947 = vpop.f32.mrb[0].mxu0
        %1948 = vmatprep.mubr.bf16.mxu0 %v1054
        %1949 = vmatmul.mubr.bf16.gmra.mrb[0].mxu0 %v1053
        %v1950 = vpop.f32.mrb[0].mxu0
        %v1951 = vadd.f32 0.0, %v1950
        %v1952 = vpop.f32.mrb[0].mxu0
        %v1953 = vpop.f32.mrb[0].mxu0
        %v1954 = vadd.f32 0.0, %v1953
        %v1955 = vpop.f32.mrb[0].mxu0
        %1956 = vmatprep.mubr.bf16.mxu0 %v1056
        %1957 = vmatmul.mubr.bf16.gmra.mrb[0].mxu0 %v1055
        %v1958 = vpop.f32.mrb[0].mxu0
        %v1959 = vadd.f32 0.0, %v1958
        %v1960 = vpop.f32.mrb[0].mxu0
        %v1961 = vpop.f32.mrb[0].mxu0
        %v1962 = vadd.f32 0.0, %v1961
        %v1963 = vpop.f32.mrb[0].mxu0
        %1964 = vmatprep.mubr.bf16.mxu0 %v1058
        %1965 = vmatmul.mubr.bf16.gmra.mrb[0].mxu0 %v1057
        %v1966 = vpop.f32.mrb[0].mxu0
        %v1967 = vadd.f32 0.0, %v1966
        %v1968 = vpop.f32.mrb[0].mxu0
        %v1969 = vpop.f32.mrb[0].mxu0
        %v1970 = vadd.f32 0.0, %v1969
        %v1971 = vpop.f32.mrb[0].mxu0
        %1972 = vmatprep.mubr.bf16.mxu0 %v1060
        %1973 = vmatmul.mubr.bf16.gmra.mrb[0].mxu0 %v1059
        %v1974 = vpop.f32.mrb[0].mxu0
        %v1975 = vadd.f32 0.0, %v1974
        %v1976 = vpop.f32.mrb[0].mxu0
        %v1977 = vpop.f32.mrb[0].mxu0
        %v1978 = vadd.f32 0.0, %v1977
        %v1979 = vpop.f32.mrb[0].mxu0
        %1980 = vmatprep.mubr.bf16.mxu0 %v1062
        %1981 = vmatmul.mubr.bf16.gmra.mrb[0].mxu0 %v1061
        %v1982 = vpop.f32.mrb[0].mxu0
        %v1983 = vadd.f32 0.0, %v1982
        %v1984 = vpop.f32.mrb[0].mxu0
        %v1985 = vpop.f32.mrb[0].mxu0
        %v1986 = vadd.f32 0.0, %v1985
        %v1987 = vpop.f32.mrb[0].mxu0
        %1988 = vmatprep.mubr.bf16.mxu0 %v1064
        %1989 = vmatmul.mubr.bf16.gmra.mrb[0].mxu0 %v1063
        %v1990 = vpop.f32.mrb[0].mxu0
        %v1991 = vadd.f32 0.0, %v1990
        %v1992 = vpop.f32.mrb[0].mxu0
        %v1993 = vpop.f32.mrb[0].mxu0
        %v1994 = vadd.f32 0.0, %v1993
        %v1995 = vpop.f32.mrb[0].mxu0
        %1996 = vmatprep.mubr.bf16.mxu0 %v1066
        %1997 = vmatmul.mubr.bf16.gmra.mrb[0].mxu0 %v1065
        %v1998 = vpop.f32.mrb[0].mxu0
        %v1999 = vadd.f32 0.0, %v1998
        %v2000 = vpop.f32.mrb[0].mxu0
        %v2001 = vpop.f32.mrb[0].mxu0
        %v2002 = vadd.f32 0.0, %v2001
        %v2003 = vpop.f32.mrb[0].mxu0
        %2004 = vmatprep.mubr.bf16.mxu0 %v1068
        %2005 = vmatmul.mubr.bf16.gmra.mrb[0].mxu0 %v1067
        %v2006 = vpop.f32.mrb[0].mxu0
        %v2007 = vadd.f32 0.0, %v2006
        %v2008 = vpop.f32.mrb[0].mxu0
        %v2009 = vpop.f32.mrb[0].mxu0
        %v2010 = vadd.f32 0.0, %v2009
        %v2011 = vpop.f32.mrb[0].mxu0
        %2012 = vmatprep.mubr.bf16.mxu0 %v1070
        %2013 = vmatmul.mubr.bf16.gmra.mrb[0].mxu0 %v1069
        %v2014 = vpop.f32.mrb[0].mxu0
        %v2015 = vadd.f32 0.0, %v2014
        %v2016 = vpop.f32.mrb[0].mxu0
        %v2017 = vpop.f32.mrb[0].mxu0
        %v2018 = vadd.f32 0.0, %v2017
        %v2019 = vpop.f32.mrb[0].mxu0
        %2020 = vmatprep.mubr.bf16.mxu0 %v1072
        %2021 = vmatmul.mubr.bf16.gmra.mrb[0].mxu0 %v1071
        %v2022 = vpop.f32.mrb[0].mxu0
        %v2023 = vadd.f32 0.0, %v2022
        %v2024 = vpop.f32.mrb[0].mxu0
        %v2025 = vpop.f32.mrb[0].mxu0
        %v2026 = vadd.f32 0.0, %v2025
        %v2027 = vpop.f32.mrb[0].mxu0
        %2028 = vmatprep.mubr.bf16.mxu0 %v1074
        %2029 = vmatmul.mubr.bf16.gmra.mrb[0].mxu0 %v1073
        %v2030 = vpop.f32.mrb[0].mxu0
        %v2031 = vadd.f32 0.0, %v2030
        %v2032 = vpop.f32.mrb[0].mxu0
        %v2033 = vpop.f32.mrb[0].mxu0
        %v2034 = vadd.f32 0.0, %v2033
        %v2035 = vpop.f32.mrb[0].mxu0
        %2036 = vdwg.mxu0
        %v2037 = vadd.f32 %v499, %v1430
        %v2038 = vadd.f32 %v500, %v1432
        %v2039 = vadd.f32 %v501, %v1783
        %v2040 = vadd.f32 %v502, %v1434
        %v2041 = vadd.f32 %v503, %v1436
        %v2042 = vadd.f32 %v504, %v1786
        %v2043 = vadd.f32 %v505, %v1440
        %v2044 = vadd.f32 %v506, %v1442
        %v2045 = vadd.f32 %v507, %v1791
        %v2046 = vadd.f32 %v508, %v1444
        %v2047 = vadd.f32 %v509, %v1446
        %v2048 = vadd.f32 %v510, %v1794
        %v2049 = vadd.f32 %v511, %v1450
        %v2050 = vadd.f32 %v512, %v1452
        %v2051 = vadd.f32 %v513, %v1799
        %v2052 = vadd.f32 %v514, %v1454
        %v2053 = vadd.f32 %v515, %v1456
        %v2054 = vadd.f32 %v516, %v1802
        %v2055 = vadd.f32 %v517, %v1460
        %v2056 = vadd.f32 %v518, %v1462
        %v2057 = vadd.f32 %v519, %v1807
        %v2058 = vadd.f32 %v520, %v1464
        %v2059 = vadd.f32 %v521, %v1466
        %v2060 = vadd.f32 %v522, %v1810
        %v2061 = vadd.f32 %v523, %v1470
        %v2062 = vadd.f32 %v524, %v1472
        %v2063 = vadd.f32 %v525, %v1815
        %v2064 = vadd.f32 %v526, %v1474
        %v2065 = vadd.f32 %v527, %v1476
        %v2066 = vadd.f32 %v528, %v1818
        %v2067 = vadd.f32 %v529, %v1480
        %v2068 = vadd.f32 %v530, %v1482
        %v2069 = vadd.f32 %v531, %v1823
        %v2070 = vadd.f32 %v532, %v1484
        %v2071 = vadd.f32 %v533, %v1486
        %v2072 = vadd.f32 %v534, %v1826
        %v2073 = vadd.f32 %v535, %v1490
        %v2074 = vadd.f32 %v536, %v1492
        %v2075 = vadd.f32 %v537, %v1831
        %v2076 = vadd.f32 %v538, %v1494
        %v2077 = vadd.f32 %v539, %v1496
        %v2078 = vadd.f32 %v540, %v1834
        %v2079 = vadd.f32 %v541, %v1500
        %v2080 = vadd.f32 %v542, %v1502
        %v2081 = vadd.f32 %v543, %v1839
        %v2082 = vadd.f32 %v544, %v1504
        %v2083 = vadd.f32 %v545, %v1506
        %v2084 = vadd.f32 %v546, %v1842
        %v2085 = vadd.f32 %v547, %v1510
        %v2086 = vadd.f32 %v548, %v1512
        %v2087 = vadd.f32 %v549, %v1847
        %v2088 = vadd.f32 %v550, %v1514
        %v2089 = vadd.f32 %v551, %v1516
        %v2090 = vadd.f32 %v552, %v1850
        %v2091 = vadd.f32 %v553, %v1520
        %v2092 = vadd.f32 %v554, %v1522
        %v2093 = vadd.f32 %v555, %v1855
        %v2094 = vadd.f32 %v556, %v1524
        %v2095 = vadd.f32 %v557, %v1526
        %v2096 = vadd.f32 %v558, %v1858
        %v2097 = vadd.f32 %v559, %v1530
        %v2098 = vadd.f32 %v560, %v1532
        %v2099 = vadd.f32 %v561, %v1863
        %v2100 = vadd.f32 %v562, %v1534
        %v2101 = vadd.f32 %v563, %v1536
        %v2102 = vadd.f32 %v564, %v1866
        %v2103 = vadd.f32 %v565, %v1540
        %v2104 = vadd.f32 %v566, %v1542
        %v2105 = vadd.f32 %v567, %v1871
        %v2106 = vadd.f32 %v568, %v1544
        %v2107 = vadd.f32 %v569, %v1546
        %v2108 = vadd.f32 %v570, %v1874
        %v2109 = vadd.f32 %v571, %v1550
        %v2110 = vadd.f32 %v572, %v1552
        %v2111 = vadd.f32 %v573, %v1879
        %v2112 = vadd.f32 %v574, %v1554
        %v2113 = vadd.f32 %v575, %v1556
        %v2114 = vadd.f32 %v576, %v1882
        %v2115 = vadd.f32 %v577, %v1560
        %v2116 = vadd.f32 %v578, %v1562
        %v2117 = vadd.f32 %v579, %v1887
        %v2118 = vadd.f32 %v580, %v1564
        %v2119 = vadd.f32 %v581, %v1566
        %v2120 = vadd.f32 %v582, %v1890
        %v2121 = vadd.f32 %v583, %v1570
        %v2122 = vadd.f32 %v584, %v1572
        %v2123 = vadd.f32 %v585, %v1895
        %v2124 = vadd.f32 %v586, %v1574
        %v2125 = vadd.f32 %v587, %v1576
        %v2126 = vadd.f32 %v588, %v1898
        %v2127 = vadd.f32 %v589, %v1580
        %v2128 = vadd.f32 %v590, %v1582
        %v2129 = vadd.f32 %v591, %v1903
        %v2130 = vadd.f32 %v592, %v1584
        %v2131 = vadd.f32 %v593, %v1586
        %v2132 = vadd.f32 %v594, %v1906
        %v2133 = vadd.f32 %v595, %v1590
        %v2134 = vadd.f32 %v596, %v1592
        %v2135 = vadd.f32 %v597, %v1911
        %v2136 = vadd.f32 %v598, %v1594
        %v2137 = vadd.f32 %v599, %v1596
        %v2138 = vadd.f32 %v600, %v1914
        %v2139 = vadd.f32 %v601, %v1600
        %v2140 = vadd.f32 %v602, %v1602
        %v2141 = vadd.f32 %v603, %v1919
        %v2142 = vadd.f32 %v604, %v1604
        %v2143 = vadd.f32 %v605, %v1606
        %v2144 = vadd.f32 %v606, %v1922
        %v2145 = vadd.f32 %v607, %v1610
        %v2146 = vadd.f32 %v608, %v1612
        %v2147 = vadd.f32 %v609, %v1927
        %v2148 = vadd.f32 %v610, %v1614
        %v2149 = vadd.f32 %v611, %v1616
        %v2150 = vadd.f32 %v612, %v1930
        %v2151 = vadd.f32 %v613, %v1620
        %v2152 = vadd.f32 %v614, %v1622
        %v2153 = vadd.f32 %v615, %v1935
        %v2154 = vadd.f32 %v616, %v1624
        %v2155 = vadd.f32 %v617, %v1626
        %v2156 = vadd.f32 %v618, %v1938
        %v2157 = vadd.f32 %v619, %v1630
        %v2158 = vadd.f32 %v620, %v1632
        %v2159 = vadd.f32 %v621, %v1943
        %v2160 = vadd.f32 %v622, %v1634
        %v2161 = vadd.f32 %v623, %v1636
        %v2162 = vadd.f32 %v624, %v1946
        %v2163 = vadd.f32 %v625, %v1640
        %v2164 = vadd.f32 %v626, %v1642
        %v2165 = vadd.f32 %v627, %v1951
        %v2166 = vadd.f32 %v628, %v1644
        %v2167 = vadd.f32 %v629, %v1646
        %v2168 = vadd.f32 %v630, %v1954
        %v2169 = vadd.f32 %v631, %v1650
        %v2170 = vadd.f32 %v632, %v1652
        %v2171 = vadd.f32 %v633, %v1959
        %v2172 = vadd.f32 %v634, %v1654
        %v2173 = vadd.f32 %v635, %v1656
        %v2174 = vadd.f32 %v636, %v1962
        %v2175 = vadd.f32 %v637, %v1660
        %v2176 = vadd.f32 %v638, %v1662
        %v2177 = vadd.f32 %v639, %v1967
        %v2178 = vadd.f32 %v640, %v1664
        %v2179 = vadd.f32 %v641, %v1666
        %v2180 = vadd.f32 %v642, %v1970
        %v2181 = vadd.f32 %v643, %v1670
        %v2182 = vadd.f32 %v644, %v1672
        %v2183 = vadd.f32 %v645, %v1975
        %v2184 = vadd.f32 %v646, %v1674
        %v2185 = vadd.f32 %v647, %v1676
        %v2186 = vadd.f32 %v648, %v1978
        %v2187 = vadd.f32 %v649, %v1680
        %v2188 = vadd.f32 %v650, %v1682
        %v2189 = vadd.f32 %v651, %v1983
        %v2190 = vadd.f32 %v652, %v1684
        %v2191 = vadd.f32 %v653, %v1686
        %v2192 = vadd.f32 %v654, %v1986
        %v2193 = vadd.f32 %v655, %v1690
        %v2194 = vadd.f32 %v656, %v1692
        %v2195 = vadd.f32 %v657, %v1991
        %v2196 = vadd.f32 %v658, %v1694
        %v2197 = vadd.f32 %v659, %v1696
        %v2198 = vadd.f32 %v660, %v1994
        %v2199 = vadd.f32 %v661, %v1700
        %v2200 = vadd.f32 %v662, %v1702
        %v2201 = vadd.f32 %v663, %v1999
        %v2202 = vadd.f32 %v664, %v1704
        %v2203 = vadd.f32 %v665, %v1706
        %v2204 = vadd.f32 %v666, %v2002
        %v2205 = vadd.f32 %v667, %v1710
        %v2206 = vadd.f32 %v668, %v1712
        %v2207 = vadd.f32 %v669, %v2007
        %v2208 = vadd.f32 %v670, %v1714
        %v2209 = vadd.f32 %v671, %v1716
        %v2210 = vadd.f32 %v672, %v2010
        %v2211 = vadd.f32 %v673, %v1720
        %v2212 = vadd.f32 %v674, %v1722
        %v2213 = vadd.f32 %v675, %v2015
        %v2214 = vadd.f32 %v676, %v1724
        %v2215 = vadd.f32 %v677, %v1726
        %v2216 = vadd.f32 %v678, %v2018
        %v2217 = vadd.f32 %v679, %v1730
        %v2218 = vadd.f32 %v680, %v1732
        %v2219 = vadd.f32 %v681, %v2023
        %v2220 = vadd.f32 %v682, %v1734
        %v2221 = vadd.f32 %v683, %v1736
        %v2222 = vadd.f32 %v684, %v2026
        %v2223 = vadd.f32 %v685, %v1740
        %v2224 = vadd.f32 %v686, %v1742
        %v2225 = vadd.f32 %v687, %v2031
        %v2226 = vadd.f32 %v688, %v1744
        %v2227 = vadd.f32 %v689, %v1746
        %v2228 = vadd.f32 %v690, %v2034
        %2229 = vst [vmem:[#allocation2] sm:$0xff] %v2037
        %2230 = vst [vmem:[#allocation2 + $0x8] sm:$0xff] %v2038
        %2231 = vst [vmem:[#allocation2 + $0x10] sm:$0xff] %v2039
        %2232 = vst [vmem:[#allocation2 + $0x18] sm:$0xff] %v2040
        %2233 = vst [vmem:[#allocation2 + $0x20] sm:$0xff] %v2041
        %2234 = vst [vmem:[#allocation2 + $0x28] sm:$0xff] %v2042
        %2235 = vst [vmem:[#allocation2 + $0x30] sm:$0xff] %v2043
        %2236 = vst [vmem:[#allocation2 + $0x38] sm:$0xff] %v2044
        %2237 = vst [vmem:[#allocation2 + $0x40] sm:$0xff] %v2045
        %2238 = vst [vmem:[#allocation2 + $0x48] sm:$0xff] %v2046
        %2239 = vst [vmem:[#allocation2 + $0x50] sm:$0xff] %v2047
        %2240 = vst [vmem:[#allocation2 + $0x58] sm:$0xff] %v2048
        %2241 = vst [vmem:[#allocation2 + $0x60] sm:$0xff] %v2049
        %2242 = vst [vmem:[#allocation2 + $0x68] sm:$0xff] %v2050
        %2243 = vst [vmem:[#allocation2 + $0x70] sm:$0xff] %v2051
        %2244 = vst [vmem:[#allocation2 + $0x78] sm:$0xff] %v2052
        %2245 = vst [vmem:[#allocation2 + $0x80] sm:$0xff] %v2053
        %2246 = vst [vmem:[#allocation2 + $0x88] sm:$0xff] %v2054
        %2247 = vst [vmem:[#allocation2 + $0x90] sm:$0xff] %v2055
        %2248 = vst [vmem:[#allocation2 + $0x98] sm:$0xff] %v2056
        %2249 = vst [vmem:[#allocation2 + $0xa0] sm:$0xff] %v2057
        %2250 = vst [vmem:[#allocation2 + $0xa8] sm:$0xff] %v2058
        %2251 = vst [vmem:[#allocation2 + $0xb0] sm:$0xff] %v2059
        %2252 = vst [vmem:[#allocation2 + $0xb8] sm:$0xff] %v2060
        %2253 = vst [vmem:[#allocation2 + $0xc0] sm:$0xff] %v2061
        %2254 = vst [vmem:[#allocation2 + $0xc8] sm:$0xff] %v2062
        %2255 = vst [vmem:[#allocation2 + $0xd0] sm:$0xff] %v2063
        %2256 = vst [vmem:[#allocation2 + $0xd8] sm:$0xff] %v2064
        %2257 = vst [vmem:[#allocation2 + $0xe0] sm:$0xff] %v2065
        %2258 = vst [vmem:[#allocation2 + $0xe8] sm:$0xff] %v2066
        %2259 = vst [vmem:[#allocation2 + $0xf0] sm:$0xff] %v2067
        %2260 = vst [vmem:[#allocation2 + $0xf8] sm:$0xff] %v2068
        %2261 = vst [vmem:[#allocation2 + $0x100] sm:$0xff] %v2069
        %2262 = vst [vmem:[#allocation2 + $0x108] sm:$0xff] %v2070
        %2263 = vst [vmem:[#allocation2 + $0x110] sm:$0xff] %v2071
        %2264 = vst [vmem:[#allocation2 + $0x118] sm:$0xff] %v2072
        %2265 = vst [vmem:[#allocation2 + $0x120] sm:$0xff] %v2073
        %2266 = vst [vmem:[#allocation2 + $0x128] sm:$0xff] %v2074
        %2267 = vst [vmem:[#allocation2 + $0x130] sm:$0xff] %v2075
        %2268 = vst [vmem:[#allocation2 + $0x138] sm:$0xff] %v2076
        %2269 = vst [vmem:[#allocation2 + $0x140] sm:$0xff] %v2077
        %2270 = vst [vmem:[#allocation2 + $0x148] sm:$0xff] %v2078
        %2271 = vst [vmem:[#allocation2 + $0x150] sm:$0xff] %v2079
        %2272 = vst [vmem:[#allocation2 + $0x158] sm:$0xff] %v2080
        %2273 = vst [vmem:[#allocation2 + $0x160] sm:$0xff] %v2081
        %2274 = vst [vmem:[#allocation2 + $0x168] sm:$0xff] %v2082
        %2275 = vst [vmem:[#allocation2 + $0x170] sm:$0xff] %v2083
        %2276 = vst [vmem:[#allocation2 + $0x178] sm:$0xff] %v2084
        %2277 = vst [vmem:[#allocation2 + $0x180] sm:$0xff] %v2085
        %2278 = vst [vmem:[#allocation2 + $0x188] sm:$0xff] %v2086
        %2279 = vst [vmem:[#allocation2 + $0x190] sm:$0xff] %v2087
        %2280 = vst [vmem:[#allocation2 + $0x198] sm:$0xff] %v2088
        %2281 = vst [vmem:[#allocation2 + $0x1a0] sm:$0xff] %v2089
        %2282 = vst [vmem:[#allocation2 + $0x1a8] sm:$0xff] %v2090
        %2283 = vst [vmem:[#allocation2 + $0x1b0] sm:$0xff] %v2091
        %2284 = vst [vmem:[#allocation2 + $0x1b8] sm:$0xff] %v2092
        %2285 = vst [vmem:[#allocation2 + $0x1c0] sm:$0xff] %v2093
        %2286 = vst [vmem:[#allocation2 + $0x1c8] sm:$0xff] %v2094
        %2287 = vst [vmem:[#allocation2 + $0x1d0] sm:$0xff] %v2095
        %2288 = vst [vmem:[#allocation2 + $0x1d8] sm:$0xff] %v2096
        %2289 = vst [vmem:[#allocation2 + $0x1e0] sm:$0xff] %v2097
        %2290 = vst [vmem:[#allocation2 + $0x1e8] sm:$0xff] %v2098
        %2291 = vst [vmem:[#allocation2 + $0x1f0] sm:$0xff] %v2099
        %2292 = vst [vmem:[#allocation2 + $0x1f8] sm:$0xff] %v2100
        %2293 = vst [vmem:[#allocation2 + $0x200] sm:$0xff] %v2101
        %2294 = vst [vmem:[#allocation2 + $0x208] sm:$0xff] %v2102
        %2295 = vst [vmem:[#allocation2 + $0x210] sm:$0xff] %v2103
        %2296 = vst [vmem:[#allocation2 + $0x218] sm:$0xff] %v2104
        %2297 = vst [vmem:[#allocation2 + $0x220] sm:$0xff] %v2105
        %2298 = vst [vmem:[#allocation2 + $0x228] sm:$0xff] %v2106
        %2299 = vst [vmem:[#allocation2 + $0x230] sm:$0xff] %v2107
        %2300 = vst [vmem:[#allocation2 + $0x238] sm:$0xff] %v2108
        %2301 = vst [vmem:[#allocation2 + $0x240] sm:$0xff] %v2109
        %2302 = vst [vmem:[#allocation2 + $0x248] sm:$0xff] %v2110
        %2303 = vst [vmem:[#allocation2 + $0x250] sm:$0xff] %v2111
        %2304 = vst [vmem:[#allocation2 + $0x258] sm:$0xff] %v2112
        %2305 = vst [vmem:[#allocation2 + $0x260] sm:$0xff] %v2113
        %2306 = vst [vmem:[#allocation2 + $0x268] sm:$0xff] %v2114
        %2307 = vst [vmem:[#allocation2 + $0x270] sm:$0xff] %v2115
        %2308 = vst [vmem:[#allocation2 + $0x278] sm:$0xff] %v2116
        %2309 = vst [vmem:[#allocation2 + $0x280] sm:$0xff] %v2117
        %2310 = vst [vmem:[#allocation2 + $0x288] sm:$0xff] %v2118
        %2311 = vst [vmem:[#allocation2 + $0x290] sm:$0xff] %v2119
        %2312 = vst [vmem:[#allocation2 + $0x298] sm:$0xff] %v2120
        %2313 = vst [vmem:[#allocation2 + $0x2a0] sm:$0xff] %v2121
        %2314 = vst [vmem:[#allocation2 + $0x2a8] sm:$0xff] %v2122
        %2315 = vst [vmem:[#allocation2 + $0x2b0] sm:$0xff] %v2123
        %2316 = vst [vmem:[#allocation2 + $0x2b8] sm:$0xff] %v2124
        %2317 = vst [vmem:[#allocation2 + $0x2c0] sm:$0xff] %v2125
        %2318 = vst [vmem:[#allocation2 + $0x2c8] sm:$0xff] %v2126
        %2319 = vst [vmem:[#allocation2 + $0x2d0] sm:$0xff] %v2127
        %2320 = vst [vmem:[#allocation2 + $0x2d8] sm:$0xff] %v2128
        %2321 = vst [vmem:[#allocation2 + $0x2e0] sm:$0xff] %v2129
        %2322 = vst [vmem:[#allocation2 + $0x2e8] sm:$0xff] %v2130
        %2323 = vst [vmem:[#allocation2 + $0x2f0] sm:$0xff] %v2131
        %2324 = vst [vmem:[#allocation2 + $0x2f8] sm:$0xff] %v2132
        %2325 = vst [vmem:[#allocation2 + $0x300] sm:$0xff] %v2133
        %2326 = vst [vmem:[#allocation2 + $0x308] sm:$0xff] %v2134
        %2327 = vst [vmem:[#allocation2 + $0x310] sm:$0xff] %v2135
        %2328 = vst [vmem:[#allocation2 + $0x318] sm:$0xff] %v2136
        %2329 = vst [vmem:[#allocation2 + $0x320] sm:$0xff] %v2137
        %2330 = vst [vmem:[#allocation2 + $0x328] sm:$0xff] %v2138
        %2331 = vst [vmem:[#allocation2 + $0x330] sm:$0xff] %v2139
        %2332 = vst [vmem:[#allocation2 + $0x338] sm:$0xff] %v2140
        %2333 = vst [vmem:[#allocation2 + $0x340] sm:$0xff] %v2141
        %2334 = vst [vmem:[#allocation2 + $0x348] sm:$0xff] %v2142
        %2335 = vst [vmem:[#allocation2 + $0x350] sm:$0xff] %v2143
        %2336 = vst [vmem:[#allocation2 + $0x358] sm:$0xff] %v2144
        %2337 = vst [vmem:[#allocation2 + $0x360] sm:$0xff] %v2145
        %2338 = vst [vmem:[#allocation2 + $0x368] sm:$0xff] %v2146
        %2339 = vst [vmem:[#allocation2 + $0x370] sm:$0xff] %v2147
        %2340 = vst [vmem:[#allocation2 + $0x378] sm:$0xff] %v2148
        %2341 = vst [vmem:[#allocation2 + $0x380] sm:$0xff] %v2149
        %2342 = vst [vmem:[#allocation2 + $0x388] sm:$0xff] %v2150
        %2343 = vst [vmem:[#allocation2 + $0x390] sm:$0xff] %v2151
        %2344 = vst [vmem:[#allocation2 + $0x398] sm:$0xff] %v2152
        %2345 = vst [vmem:[#allocation2 + $0x3a0] sm:$0xff] %v2153
        %2346 = vst [vmem:[#allocation2 + $0x3a8] sm:$0xff] %v2154
        %2347 = vst [vmem:[#allocation2 + $0x3b0] sm:$0xff] %v2155
        %2348 = vst [vmem:[#allocation2 + $0x3b8] sm:$0xff] %v2156
        %2349 = vst [vmem:[#allocation2 + $0x3c0] sm:$0xff] %v2157
        %2350 = vst [vmem:[#allocation2 + $0x3c8] sm:$0xff] %v2158
        %2351 = vst [vmem:[#allocation2 + $0x3d0] sm:$0xff] %v2159
        %2352 = vst [vmem:[#allocation2 + $0x3d8] sm:$0xff] %v2160
        %2353 = vst [vmem:[#allocation2 + $0x3e0] sm:$0xff] %v2161
        %2354 = vst [vmem:[#allocation2 + $0x3e8] sm:$0xff] %v2162
        %2355 = vst [vmem:[#allocation2 + $0x3f0] sm:$0xff] %v2163
        %2356 = vst [vmem:[#allocation2 + $0x3f8] sm:$0xff] %v2164
        %2357 = vst [vmem:[#allocation2 + $0x400] sm:$0xff] %v2165
        %2358 = vst [vmem:[#allocation2 + $0x408] sm:$0xff] %v2166
        %2359 = vst [vmem:[#allocation2 + $0x410] sm:$0xff] %v2167
        %2360 = vst [vmem:[#allocation2 + $0x418] sm:$0xff] %v2168
        %2361 = vst [vmem:[#allocation2 + $0x420] sm:$0xff] %v2169
        %2362 = vst [vmem:[#allocation2 + $0x428] sm:$0xff] %v2170
        %2363 = vst [vmem:[#allocation2 + $0x430] sm:$0xff] %v2171
        %2364 = vst [vmem:[#allocation2 + $0x438] sm:$0xff] %v2172
        %2365 = vst [vmem:[#allocation2 + $0x440] sm:$0xff] %v2173
        %2366 = vst [vmem:[#allocation2 + $0x448] sm:$0xff] %v2174
        %2367 = vst [vmem:[#allocation2 + $0x450] sm:$0xff] %v2175
        %2368 = vst [vmem:[#allocation2 + $0x458] sm:$0xff] %v2176
        %2369 = vst [vmem:[#allocation2 + $0x460] sm:$0xff] %v2177
        %2370 = vst [vmem:[#allocation2 + $0x468] sm:$0xff] %v2178
        %2371 = vst [vmem:[#allocation2 + $0x470] sm:$0xff] %v2179
        %2372 = vst [vmem:[#allocation2 + $0x478] sm:$0xff] %v2180
        %2373 = vst [vmem:[#allocation2 + $0x480] sm:$0xff] %v2181
        %2374 = vst [vmem:[#allocation2 + $0x488] sm:$0xff] %v2182
        %2375 = vst [vmem:[#allocation2 + $0x490] sm:$0xff] %v2183
        %2376 = vst [vmem:[#allocation2 + $0x498] sm:$0xff] %v2184
        %2377 = vst [vmem:[#allocation2 + $0x4a0] sm:$0xff] %v2185
        %2378 = vst [vmem:[#allocation2 + $0x4a8] sm:$0xff] %v2186
        %2379 = vst [vmem:[#allocation2 + $0x4b0] sm:$0xff] %v2187
        %2380 = vst [vmem:[#allocation2 + $0x4b8] sm:$0xff] %v2188
        %2381 = vst [vmem:[#allocation2 + $0x4c0] sm:$0xff] %v2189
        %2382 = vst [vmem:[#allocation2 + $0x4c8] sm:$0xff] %v2190
        %2383 = vst [vmem:[#allocation2 + $0x4d0] sm:$0xff] %v2191
        %2384 = vst [vmem:[#allocation2 + $0x4d8] sm:$0xff] %v2192
        %2385 = vst [vmem:[#allocation2 + $0x4e0] sm:$0xff] %v2193
        %2386 = vst [vmem:[#allocation2 + $0x4e8] sm:$0xff] %v2194
        %2387 = vst [vmem:[#allocation2 + $0x4f0] sm:$0xff] %v2195
        %2388 = vst [vmem:[#allocation2 + $0x4f8] sm:$0xff] %v2196
        %2389 = vst [vmem:[#allocation2 + $0x500] sm:$0xff] %v2197
        %2390 = vst [vmem:[#allocation2 + $0x508] sm:$0xff] %v2198
        %2391 = vst [vmem:[#allocation2 + $0x510] sm:$0xff] %v2199
        %2392 = vst [vmem:[#allocation2 + $0x518] sm:$0xff] %v2200
        %2393 = vst [vmem:[#allocation2 + $0x520] sm:$0xff] %v2201
        %2394 = vst [vmem:[#allocation2 + $0x528] sm:$0xff] %v2202
        %2395 = vst [vmem:[#allocation2 + $0x530] sm:$0xff] %v2203
        %2396 = vst [vmem:[#allocation2 + $0x538] sm:$0xff] %v2204
        %2397 = vst [vmem:[#allocation2 + $0x540] sm:$0xff] %v2205
        %2398 = vst [vmem:[#allocation2 + $0x548] sm:$0xff] %v2206
        %2399 = vst [vmem:[#allocation2 + $0x550] sm:$0xff] %v2207
        %2400 = vst [vmem:[#allocation2 + $0x558] sm:$0xff] %v2208
        %2401 = vst [vmem:[#allocation2 + $0x560] sm:$0xff] %v2209
        %2402 = vst [vmem:[#allocation2 + $0x568] sm:$0xff] %v2210
        %2403 = vst [vmem:[#allocation2 + $0x570] sm:$0xff] %v2211
        %2404 = vst [vmem:[#allocation2 + $0x578] sm:$0xff] %v2212
        %2405 = vst [vmem:[#allocation2 + $0x580] sm:$0xff] %v2213
        %2406 = vst [vmem:[#allocation2 + $0x588] sm:$0xff] %v2214
        %2407 = vst [vmem:[#allocation2 + $0x590] sm:$0xff] %v2215
        %2408 = vst [vmem:[#allocation2 + $0x598] sm:$0xff] %v2216
        %2409 = vst [vmem:[#allocation2 + $0x5a0] sm:$0xff] %v2217
        %2410 = vst [vmem:[#allocation2 + $0x5a8] sm:$0xff] %v2218
        %2411 = vst [vmem:[#allocation2 + $0x5b0] sm:$0xff] %v2219
        %2412 = vst [vmem:[#allocation2 + $0x5b8] sm:$0xff] %v2220
        %2413 = vst [vmem:[#allocation2 + $0x5c0] sm:$0xff] %v2221
        %2414 = vst [vmem:[#allocation2 + $0x5c8] sm:$0xff] %v2222
        %2415 = vst [vmem:[#allocation2 + $0x5d0] sm:$0xff] %v2223
        %2416 = vst [vmem:[#allocation2 + $0x5d8] sm:$0xff] %v2224
        %2417 = vst [vmem:[#allocation2 + $0x5e0] sm:$0xff] %v2225
        %2418 = vst [vmem:[#allocation2 + $0x5e8] sm:$0xff] %v2226
        %2419 = vst [vmem:[#allocation2 + $0x5f0] sm:$0xff] %v2227
        %2420 = vst [vmem:[#allocation2 + $0x5f8] sm:$0xff] %v2228
        // Predicated region
        $region49: #{tpu_custom_call.1} parent=31 // pred_check
          %p2421 = pneg %p303
        $region50: #{tpu_custom_call.1} parent=31 // pred_check_branch
          %2423 = sbr.rel (%p2421) target = $region52
        $region51: #{tpu_custom_call.1} parent=31 // pred_region
          %v2424 = vld [vmem:[#allocation2] sm:$0xff]
          %v2425 = vld [vmem:[#allocation2 + $0x8] sm:$0xff]
          %v2426 = vld [vmem:[#allocation2 + $0x10] sm:$0xff]
          %v2427 = vld [vmem:[#allocation2 + $0x18] sm:$0xff]
          %v2428 = vld [vmem:[#allocation2 + $0x20] sm:$0xff]
          %v2429 = vld [vmem:[#allocation2 + $0x28] sm:$0xff]
          %v2430 = vld [vmem:[#allocation2 + $0x30] sm:$0xff]
          %v2431 = vld [vmem:[#allocation2 + $0x38] sm:$0xff]
          %v2432 = vld [vmem:[#allocation2 + $0x40] sm:$0xff]
          %v2433 = vld [vmem:[#allocation2 + $0x48] sm:$0xff]
          %v2434 = vld [vmem:[#allocation2 + $0x50] sm:$0xff]
          %v2435 = vld [vmem:[#allocation2 + $0x58] sm:$0xff]
          %v2436 = vld [vmem:[#allocation2 + $0x60] sm:$0xff]
          %v2437 = vld [vmem:[#allocation2 + $0x68] sm:$0xff]
          %v2438 = vld [vmem:[#allocation2 + $0x70] sm:$0xff]
          %v2439 = vld [vmem:[#allocation2 + $0x78] sm:$0xff]
          %v2440 = vld [vmem:[#allocation2 + $0x80] sm:$0xff]
          %v2441 = vld [vmem:[#allocation2 + $0x88] sm:$0xff]
          %v2442 = vld [vmem:[#allocation2 + $0x90] sm:$0xff]
          %v2443 = vld [vmem:[#allocation2 + $0x98] sm:$0xff]
          %v2444 = vld [vmem:[#allocation2 + $0xa0] sm:$0xff]
          %v2445 = vld [vmem:[#allocation2 + $0xa8] sm:$0xff]
          %v2446 = vld [vmem:[#allocation2 + $0xb0] sm:$0xff]
          %v2447 = vld [vmem:[#allocation2 + $0xb8] sm:$0xff]
          %v2448 = vld [vmem:[#allocation2 + $0xc0] sm:$0xff]
          %v2449 = vld [vmem:[#allocation2 + $0xc8] sm:$0xff]
          %v2450 = vld [vmem:[#allocation2 + $0xd0] sm:$0xff]
          %v2451 = vld [vmem:[#allocation2 + $0xd8] sm:$0xff]
          %v2452 = vld [vmem:[#allocation2 + $0xe0] sm:$0xff]
          %v2453 = vld [vmem:[#allocation2 + $0xe8] sm:$0xff]
          %v2454 = vld [vmem:[#allocation2 + $0xf0] sm:$0xff]
          %v2455 = vld [vmem:[#allocation2 + $0xf8] sm:$0xff]
          %v2456 = vld [vmem:[#allocation2 + $0x100] sm:$0xff]
          %v2457 = vld [vmem:[#allocation2 + $0x108] sm:$0xff]
          %v2458 = vld [vmem:[#allocation2 + $0x110] sm:$0xff]
          %v2459 = vld [vmem:[#allocation2 + $0x118] sm:$0xff]
          %v2460 = vld [vmem:[#allocation2 + $0x120] sm:$0xff]
          %v2461 = vld [vmem:[#allocation2 + $0x128] sm:$0xff]
          %v2462 = vld [vmem:[#allocation2 + $0x130] sm:$0xff]
          %v2463 = vld [vmem:[#allocation2 + $0x138] sm:$0xff]
          %v2464 = vld [vmem:[#allocation2 + $0x140] sm:$0xff]
          %v2465 = vld [vmem:[#allocation2 + $0x148] sm:$0xff]
          %v2466 = vld [vmem:[#allocation2 + $0x150] sm:$0xff]
          %v2467 = vld [vmem:[#allocation2 + $0x158] sm:$0xff]
          %v2468 = vld [vmem:[#allocation2 + $0x160] sm:$0xff]
          %v2469 = vld [vmem:[#allocation2 + $0x168] sm:$0xff]
          %v2470 = vld [vmem:[#allocation2 + $0x170] sm:$0xff]
          %v2471 = vld [vmem:[#allocation2 + $0x178] sm:$0xff]
          %v2472 = vld [vmem:[#allocation2 + $0x180] sm:$0xff]
          %v2473 = vld [vmem:[#allocation2 + $0x188] sm:$0xff]
          %v2474 = vld [vmem:[#allocation2 + $0x190] sm:$0xff]
          %v2475 = vld [vmem:[#allocation2 + $0x198] sm:$0xff]
          %v2476 = vld [vmem:[#allocation2 + $0x1a0] sm:$0xff]
          %v2477 = vld [vmem:[#allocation2 + $0x1a8] sm:$0xff]
          %v2478 = vld [vmem:[#allocation2 + $0x1b0] sm:$0xff]
          %v2479 = vld [vmem:[#allocation2 + $0x1b8] sm:$0xff]
          %v2480 = vld [vmem:[#allocation2 + $0x1c0] sm:$0xff]
          %v2481 = vld [vmem:[#allocation2 + $0x1c8] sm:$0xff]
          %v2482 = vld [vmem:[#allocation2 + $0x1d0] sm:$0xff]
          %v2483 = vld [vmem:[#allocation2 + $0x1d8] sm:$0xff]
          %v2484 = vld [vmem:[#allocation2 + $0x1e0] sm:$0xff]
          %v2485 = vld [vmem:[#allocation2 + $0x1e8] sm:$0xff]
          %v2486 = vld [vmem:[#allocation2 + $0x1f0] sm:$0xff]
          %v2487 = vld [vmem:[#allocation2 + $0x1f8] sm:$0xff]
          %v2488 = vld [vmem:[#allocation2 + $0x200] sm:$0xff]
          %v2489 = vld [vmem:[#allocation2 + $0x208] sm:$0xff]
          %v2490 = vld [vmem:[#allocation2 + $0x210] sm:$0xff]
          %v2491 = vld [vmem:[#allocation2 + $0x218] sm:$0xff]
          %v2492 = vld [vmem:[#allocation2 + $0x220] sm:$0xff]
          %v2493 = vld [vmem:[#allocation2 + $0x228] sm:$0xff]
          %v2494 = vld [vmem:[#allocation2 + $0x230] sm:$0xff]
          %v2495 = vld [vmem:[#allocation2 + $0x238] sm:$0xff]
          %v2496 = vld [vmem:[#allocation2 + $0x240] sm:$0xff]
          %v2497 = vld [vmem:[#allocation2 + $0x248] sm:$0xff]
          %v2498 = vld [vmem:[#allocation2 + $0x250] sm:$0xff]
          %v2499 = vld [vmem:[#allocation2 + $0x258] sm:$0xff]
          %v2500 = vld [vmem:[#allocation2 + $0x260] sm:$0xff]
          %v2501 = vld [vmem:[#allocation2 + $0x268] sm:$0xff]
          %v2502 = vld [vmem:[#allocation2 + $0x270] sm:$0xff]
          %v2503 = vld [vmem:[#allocation2 + $0x278] sm:$0xff]
          %v2504 = vld [vmem:[#allocation2 + $0x280] sm:$0xff]
          %v2505 = vld [vmem:[#allocation2 + $0x288] sm:$0xff]
          %v2506 = vld [vmem:[#allocation2 + $0x290] sm:$0xff]
          %v2507 = vld [vmem:[#allocation2 + $0x298] sm:$0xff]
          %v2508 = vld [vmem:[#allocation2 + $0x2a0] sm:$0xff]
          %v2509 = vld [vmem:[#allocation2 + $0x2a8] sm:$0xff]
          %v2510 = vld [vmem:[#allocation2 + $0x2b0] sm:$0xff]
          %v2511 = vld [vmem:[#allocation2 + $0x2b8] sm:$0xff]
          %v2512 = vld [vmem:[#allocation2 + $0x2c0] sm:$0xff]
          %v2513 = vld [vmem:[#allocation2 + $0x2c8] sm:$0xff]
          %v2514 = vld [vmem:[#allocation2 + $0x2d0] sm:$0xff]
          %v2515 = vld [vmem:[#allocation2 + $0x2d8] sm:$0xff]
          %v2516 = vld [vmem:[#allocation2 + $0x2e0] sm:$0xff]
          %v2517 = vld [vmem:[#allocation2 + $0x2e8] sm:$0xff]
          %v2518 = vld [vmem:[#allocation2 + $0x2f0] sm:$0xff]
          %v2519 = vld [vmem:[#allocation2 + $0x2f8] sm:$0xff]
          %v2520 = vld [vmem:[#allocation2 + $0x300] sm:$0xff]
          %v2521 = vld [vmem:[#allocation2 + $0x308] sm:$0xff]
          %v2522 = vld [vmem:[#allocation2 + $0x310] sm:$0xff]
          %v2523 = vld [vmem:[#allocation2 + $0x318] sm:$0xff]
          %v2524 = vld [vmem:[#allocation2 + $0x320] sm:$0xff]
          %v2525 = vld [vmem:[#allocation2 + $0x328] sm:$0xff]
          %v2526 = vld [vmem:[#allocation2 + $0x330] sm:$0xff]
          %v2527 = vld [vmem:[#allocation2 + $0x338] sm:$0xff]
          %v2528 = vld [vmem:[#allocation2 + $0x340] sm:$0xff]
          %v2529 = vld [vmem:[#allocation2 + $0x348] sm:$0xff]
          %v2530 = vld [vmem:[#allocation2 + $0x350] sm:$0xff]
          %v2531 = vld [vmem:[#allocation2 + $0x358] sm:$0xff]
          %v2532 = vld [vmem:[#allocation2 + $0x360] sm:$0xff]
          %v2533 = vld [vmem:[#allocation2 + $0x368] sm:$0xff]
          %v2534 = vld [vmem:[#allocation2 + $0x370] sm:$0xff]
          %v2535 = vld [vmem:[#allocation2 + $0x378] sm:$0xff]
          %v2536 = vld [vmem:[#allocation2 + $0x380] sm:$0xff]
          %v2537 = vld [vmem:[#allocation2 + $0x388] sm:$0xff]
          %v2538 = vld [vmem:[#allocation2 + $0x390] sm:$0xff]
          %v2539 = vld [vmem:[#allocation2 + $0x398] sm:$0xff]
          %v2540 = vld [vmem:[#allocation2 + $0x3a0] sm:$0xff]
          %v2541 = vld [vmem:[#allocation2 + $0x3a8] sm:$0xff]
          %v2542 = vld [vmem:[#allocation2 + $0x3b0] sm:$0xff]
          %v2543 = vld [vmem:[#allocation2 + $0x3b8] sm:$0xff]
          %v2544 = vld [vmem:[#allocation2 + $0x3c0] sm:$0xff]
          %v2545 = vld [vmem:[#allocation2 + $0x3c8] sm:$0xff]
          %v2546 = vld [vmem:[#allocation2 + $0x3d0] sm:$0xff]
          %v2547 = vld [vmem:[#allocation2 + $0x3d8] sm:$0xff]
          %v2548 = vld [vmem:[#allocation2 + $0x3e0] sm:$0xff]
          %v2549 = vld [vmem:[#allocation2 + $0x3e8] sm:$0xff]
          %v2550 = vld [vmem:[#allocation2 + $0x3f0] sm:$0xff]
          %v2551 = vld [vmem:[#allocation2 + $0x3f8] sm:$0xff]
          %v2552 = vld [vmem:[#allocation2 + $0x400] sm:$0xff]
          %v2553 = vld [vmem:[#allocation2 + $0x408] sm:$0xff]
          %v2554 = vld [vmem:[#allocation2 + $0x410] sm:$0xff]
          %v2555 = vld [vmem:[#allocation2 + $0x418] sm:$0xff]
          %v2556 = vld [vmem:[#allocation2 + $0x420] sm:$0xff]
          %v2557 = vld [vmem:[#allocation2 + $0x428] sm:$0xff]
          %v2558 = vld [vmem:[#allocation2 + $0x430] sm:$0xff]
          %v2559 = vld [vmem:[#allocation2 + $0x438] sm:$0xff]
          %v2560 = vld [vmem:[#allocation2 + $0x440] sm:$0xff]
          %v2561 = vld [vmem:[#allocation2 + $0x448] sm:$0xff]
          %v2562 = vld [vmem:[#allocation2 + $0x450] sm:$0xff]
          %v2563 = vld [vmem:[#allocation2 + $0x458] sm:$0xff]
          %v2564 = vld [vmem:[#allocation2 + $0x460] sm:$0xff]
          %v2565 = vld [vmem:[#allocation2 + $0x468] sm:$0xff]
          %v2566 = vld [vmem:[#allocation2 + $0x470] sm:$0xff]
          %v2567 = vld [vmem:[#allocation2 + $0x478] sm:$0xff]
          %v2568 = vld [vmem:[#allocation2 + $0x480] sm:$0xff]
          %v2569 = vld [vmem:[#allocation2 + $0x488] sm:$0xff]
          %v2570 = vld [vmem:[#allocation2 + $0x490] sm:$0xff]
          %v2571 = vld [vmem:[#allocation2 + $0x498] sm:$0xff]
          %v2572 = vld [vmem:[#allocation2 + $0x4a0] sm:$0xff]
          %v2573 = vld [vmem:[#allocation2 + $0x4a8] sm:$0xff]
          %v2574 = vld [vmem:[#allocation2 + $0x4b0] sm:$0xff]
          %v2575 = vld [vmem:[#allocation2 + $0x4b8] sm:$0xff]
          %v2576 = vld [vmem:[#allocation2 + $0x4c0] sm:$0xff]
          %v2577 = vld [vmem:[#allocation2 + $0x4c8] sm:$0xff]
          %v2578 = vld [vmem:[#allocation2 + $0x4d0] sm:$0xff]
          %v2579 = vld [vmem:[#allocation2 + $0x4d8] sm:$0xff]
          %v2580 = vld [vmem:[#allocation2 + $0x4e0] sm:$0xff]
          %v2581 = vld [vmem:[#allocation2 + $0x4e8] sm:$0xff]
          %v2582 = vld [vmem:[#allocation2 + $0x4f0] sm:$0xff]
          %v2583 = vld [vmem:[#allocation2 + $0x4f8] sm:$0xff]
          %v2584 = vld [vmem:[#allocation2 + $0x500] sm:$0xff]
          %v2585 = vld [vmem:[#allocation2 + $0x508] sm:$0xff]
          %v2586 = vld [vmem:[#allocation2 + $0x510] sm:$0xff]
          %v2587 = vld [vmem:[#allocation2 + $0x518] sm:$0xff]
          %v2588 = vld [vmem:[#allocation2 + $0x520] sm:$0xff]
          %v2589 = vld [vmem:[#allocation2 + $0x528] sm:$0xff]
          %v2590 = vld [vmem:[#allocation2 + $0x530] sm:$0xff]
          %v2591 = vld [vmem:[#allocation2 + $0x538] sm:$0xff]
          %v2592 = vld [vmem:[#allocation2 + $0x540] sm:$0xff]
          %v2593 = vld [vmem:[#allocation2 + $0x548] sm:$0xff]
          %v2594 = vld [vmem:[#allocation2 + $0x550] sm:$0xff]
          %v2595 = vld [vmem:[#allocation2 + $0x558] sm:$0xff]
          %v2596 = vld [vmem:[#allocation2 + $0x560] sm:$0xff]
          %v2597 = vld [vmem:[#allocation2 + $0x568] sm:$0xff]
          %v2598 = vld [vmem:[#allocation2 + $0x570] sm:$0xff]
          %v2599 = vld [vmem:[#allocation2 + $0x578] sm:$0xff]
          %v2600 = vld [vmem:[#allocation2 + $0x580] sm:$0xff]
          %v2601 = vld [vmem:[#allocation2 + $0x588] sm:$0xff]
          %v2602 = vld [vmem:[#allocation2 + $0x590] sm:$0xff]
          %v2603 = vld [vmem:[#allocation2 + $0x598] sm:$0xff]
          %v2604 = vld [vmem:[#allocation2 + $0x5a0] sm:$0xff]
          %v2605 = vld [vmem:[#allocation2 + $0x5a8] sm:$0xff]
          %v2606 = vld [vmem:[#allocation2 + $0x5b0] sm:$0xff]
          %v2607 = vld [vmem:[#allocation2 + $0x5b8] sm:$0xff]
          %v2608 = vld [vmem:[#allocation2 + $0x5c0] sm:$0xff]
          %v2609 = vld [vmem:[#allocation2 + $0x5c8] sm:$0xff]
          %v2610 = vld [vmem:[#allocation2 + $0x5d0] sm:$0xff]
          %v2611 = vld [vmem:[#allocation2 + $0x5d8] sm:$0xff]
          %v2612 = vld [vmem:[#allocation2 + $0x5e0] sm:$0xff]
          %v2613 = vld [vmem:[#allocation2 + $0x5e8] sm:$0xff]
          %v2614 = vld [vmem:[#allocation2 + $0x5f0] sm:$0xff]
          %v2615 = vld [vmem:[#allocation2 + $0x5f8] sm:$0xff]
          %v2616 = vld [vmem:[%s262] sm:$0x7]
          %v2618 = vlaneseq
          %v2619 = vshrl.u32 %v2618, 7
          %v2620 = vsub.s32 0, %v2619
          %v2621 = vrot.slane %v2616, %v2620
          %v2622 = vlaneseq
          %v2623 = vshrl.u32 %v2622, 7
          %v2624 = vsub.s32 1, %v2623
          %v2625 = vrot.slane %v2616, %v2624
          %v2626 = vlaneseq
          %v2627 = vshrl.u32 %v2626, 7
          %v2628 = vsub.s32 2, %v2627
          %v2629 = vrot.slane %v2616, %v2628
          %v2633 = vadd.f32 %v2424, %v2621
          %v2634 = vadd.f32 %v2425, %v2625
          %v2635 = vadd.f32 %v2426, %v2629
          %v2636 = vadd.f32 %v2427, %v2621
          %v2637 = vadd.f32 %v2428, %v2625
          %v2638 = vadd.f32 %v2429, %v2629
          %v2639 = vadd.f32 %v2430, %v2621
          %v2640 = vadd.f32 %v2431, %v2625
          %v2641 = vadd.f32 %v2432, %v2629
          %v2642 = vadd.f32 %v2433, %v2621
          %v2643 = vadd.f32 %v2434, %v2625
          %v2644 = vadd.f32 %v2435, %v2629
          %v2645 = vadd.f32 %v2436, %v2621
          %v2646 = vadd.f32 %v2437, %v2625
          %v2647 = vadd.f32 %v2438, %v2629
          %v2648 = vadd.f32 %v2439, %v2621
          %v2649 = vadd.f32 %v2440, %v2625
          %v2650 = vadd.f32 %v2441, %v2629
          %v2651 = vadd.f32 %v2442, %v2621
          %v2652 = vadd.f32 %v2443, %v2625
          %v2653 = vadd.f32 %v2444, %v2629
          %v2654 = vadd.f32 %v2445, %v2621
          %v2655 = vadd.f32 %v2446, %v2625
          %v2656 = vadd.f32 %v2447, %v2629
          %v2657 = vadd.f32 %v2448, %v2621
          %v2658 = vadd.f32 %v2449, %v2625
          %v2659 = vadd.f32 %v2450, %v2629
          %v2660 = vadd.f32 %v2451, %v2621
          %v2661 = vadd.f32 %v2452, %v2625
          %v2662 = vadd.f32 %v2453, %v2629
          %v2663 = vadd.f32 %v2454, %v2621
          %v2664 = vadd.f32 %v2455, %v2625
          %v2665 = vadd.f32 %v2456, %v2629
          %v2666 = vadd.f32 %v2457, %v2621
          %v2667 = vadd.f32 %v2458, %v2625
          %v2668 = vadd.f32 %v2459, %v2629
          %v2669 = vadd.f32 %v2460, %v2621
          %v2670 = vadd.f32 %v2461, %v2625
          %v2671 = vadd.f32 %v2462, %v2629
          %v2672 = vadd.f32 %v2463, %v2621
          %v2673 = vadd.f32 %v2464, %v2625
          %v2674 = vadd.f32 %v2465, %v2629
          %v2675 = vadd.f32 %v2466, %v2621
          %v2676 = vadd.f32 %v2467, %v2625
          %v2677 = vadd.f32 %v2468, %v2629
          %v2678 = vadd.f32 %v2469, %v2621
          %v2679 = vadd.f32 %v2470, %v2625
          %v2680 = vadd.f32 %v2471, %v2629
          %v2681 = vadd.f32 %v2472, %v2621
          %v2682 = vadd.f32 %v2473, %v2625
          %v2683 = vadd.f32 %v2474, %v2629
          %v2684 = vadd.f32 %v2475, %v2621
          %v2685 = vadd.f32 %v2476, %v2625
          %v2686 = vadd.f32 %v2477, %v2629
          %v2687 = vadd.f32 %v2478, %v2621
          %v2688 = vadd.f32 %v2479, %v2625
          %v2689 = vadd.f32 %v2480, %v2629
          %v2690 = vadd.f32 %v2481, %v2621
          %v2691 = vadd.f32 %v2482, %v2625
          %v2692 = vadd.f32 %v2483, %v2629
          %v2693 = vadd.f32 %v2484, %v2621
          %v2694 = vadd.f32 %v2485, %v2625
          %v2695 = vadd.f32 %v2486, %v2629
          %v2696 = vadd.f32 %v2487, %v2621
          %v2697 = vadd.f32 %v2488, %v2625
          %v2698 = vadd.f32 %v2489, %v2629
          %v2699 = vadd.f32 %v2490, %v2621
          %v2700 = vadd.f32 %v2491, %v2625
          %v2701 = vadd.f32 %v2492, %v2629
          %v2702 = vadd.f32 %v2493, %v2621
          %v2703 = vadd.f32 %v2494, %v2625
          %v2704 = vadd.f32 %v2495, %v2629
          %v2705 = vadd.f32 %v2496, %v2621
          %v2706 = vadd.f32 %v2497, %v2625
          %v2707 = vadd.f32 %v2498, %v2629
          %v2708 = vadd.f32 %v2499, %v2621
          %v2709 = vadd.f32 %v2500, %v2625
          %v2710 = vadd.f32 %v2501, %v2629
          %v2711 = vadd.f32 %v2502, %v2621
          %v2712 = vadd.f32 %v2503, %v2625
          %v2713 = vadd.f32 %v2504, %v2629
          %v2714 = vadd.f32 %v2505, %v2621
          %v2715 = vadd.f32 %v2506, %v2625
          %v2716 = vadd.f32 %v2507, %v2629
          %v2717 = vadd.f32 %v2508, %v2621
          %v2718 = vadd.f32 %v2509, %v2625
          %v2719 = vadd.f32 %v2510, %v2629
          %v2720 = vadd.f32 %v2511, %v2621
          %v2721 = vadd.f32 %v2512, %v2625
          %v2722 = vadd.f32 %v2513, %v2629
          %v2723 = vadd.f32 %v2514, %v2621
          %v2724 = vadd.f32 %v2515, %v2625
          %v2725 = vadd.f32 %v2516, %v2629
          %v2726 = vadd.f32 %v2517, %v2621
          %v2727 = vadd.f32 %v2518, %v2625
          %v2728 = vadd.f32 %v2519, %v2629
          %v2729 = vadd.f32 %v2520, %v2621
          %v2730 = vadd.f32 %v2521, %v2625
          %v2731 = vadd.f32 %v2522, %v2629
          %v2732 = vadd.f32 %v2523, %v2621
          %v2733 = vadd.f32 %v2524, %v2625
          %v2734 = vadd.f32 %v2525, %v2629
          %v2735 = vadd.f32 %v2526, %v2621
          %v2736 = vadd.f32 %v2527, %v2625
          %v2737 = vadd.f32 %v2528, %v2629
          %v2738 = vadd.f32 %v2529, %v2621
          %v2739 = vadd.f32 %v2530, %v2625
          %v2740 = vadd.f32 %v2531, %v2629
          %v2741 = vadd.f32 %v2532, %v2621
          %v2742 = vadd.f32 %v2533, %v2625
          %v2743 = vadd.f32 %v2534, %v2629
          %v2744 = vadd.f32 %v2535, %v2621
          %v2745 = vadd.f32 %v2536, %v2625
          %v2746 = vadd.f32 %v2537, %v2629
          %v2747 = vadd.f32 %v2538, %v2621
          %v2748 = vadd.f32 %v2539, %v2625
          %v2749 = vadd.f32 %v2540, %v2629
          %v2750 = vadd.f32 %v2541, %v2621
          %v2751 = vadd.f32 %v2542, %v2625
          %v2752 = vadd.f32 %v2543, %v2629
          %v2753 = vadd.f32 %v2544, %v2621
          %v2754 = vadd.f32 %v2545, %v2625
          %v2755 = vadd.f32 %v2546, %v2629
          %v2756 = vadd.f32 %v2547, %v2621
          %v2757 = vadd.f32 %v2548, %v2625
          %v2758 = vadd.f32 %v2549, %v2629
          %v2759 = vadd.f32 %v2550, %v2621
          %v2760 = vadd.f32 %v2551, %v2625
          %v2761 = vadd.f32 %v2552, %v2629
          %v2762 = vadd.f32 %v2553, %v2621
          %v2763 = vadd.f32 %v2554, %v2625
          %v2764 = vadd.f32 %v2555, %v2629
          %v2765 = vadd.f32 %v2556, %v2621
          %v2766 = vadd.f32 %v2557, %v2625
          %v2767 = vadd.f32 %v2558, %v2629
          %v2768 = vadd.f32 %v2559, %v2621
          %v2769 = vadd.f32 %v2560, %v2625
          %v2770 = vadd.f32 %v2561, %v2629
          %v2771 = vadd.f32 %v2562, %v2621
          %v2772 = vadd.f32 %v2563, %v2625
          %v2773 = vadd.f32 %v2564, %v2629
          %v2774 = vadd.f32 %v2565, %v2621
          %v2775 = vadd.f32 %v2566, %v2625
          %v2776 = vadd.f32 %v2567, %v2629
          %v2777 = vadd.f32 %v2568, %v2621
          %v2778 = vadd.f32 %v2569, %v2625
          %v2779 = vadd.f32 %v2570, %v2629
          %v2780 = vadd.f32 %v2571, %v2621
          %v2781 = vadd.f32 %v2572, %v2625
          %v2782 = vadd.f32 %v2573, %v2629
          %v2783 = vadd.f32 %v2574, %v2621
          %v2784 = vadd.f32 %v2575, %v2625
          %v2785 = vadd.f32 %v2576, %v2629
          %v2786 = vadd.f32 %v2577, %v2621
          %v2787 = vadd.f32 %v2578, %v2625
          %v2788 = vadd.f32 %v2579, %v2629
          %v2789 = vadd.f32 %v2580, %v2621
          %v2790 = vadd.f32 %v2581, %v2625
          %v2791 = vadd.f32 %v2582, %v2629
          %v2792 = vadd.f32 %v2583, %v2621
          %v2793 = vadd.f32 %v2584, %v2625
          %v2794 = vadd.f32 %v2585, %v2629
          %v2795 = vadd.f32 %v2586, %v2621
          %v2796 = vadd.f32 %v2587, %v2625
          %v2797 = vadd.f32 %v2588, %v2629
          %v2798 = vadd.f32 %v2589, %v2621
          %v2799 = vadd.f32 %v2590, %v2625
          %v2800 = vadd.f32 %v2591, %v2629
          %v2801 = vadd.f32 %v2592, %v2621
          %v2802 = vadd.f32 %v2593, %v2625
          %v2803 = vadd.f32 %v2594, %v2629
          %v2804 = vadd.f32 %v2595, %v2621
          %v2805 = vadd.f32 %v2596, %v2625
          %v2806 = vadd.f32 %v2597, %v2629
          %v2807 = vadd.f32 %v2598, %v2621
          %v2808 = vadd.f32 %v2599, %v2625
          %v2809 = vadd.f32 %v2600, %v2629
          %v2810 = vadd.f32 %v2601, %v2621
          %v2811 = vadd.f32 %v2602, %v2625
          %v2812 = vadd.f32 %v2603, %v2629
          %v2813 = vadd.f32 %v2604, %v2621
          %v2814 = vadd.f32 %v2605, %v2625
          %v2815 = vadd.f32 %v2606, %v2629
          %v2816 = vadd.f32 %v2607, %v2621
          %v2817 = vadd.f32 %v2608, %v2625
          %v2818 = vadd.f32 %v2609, %v2629
          %v2819 = vadd.f32 %v2610, %v2621
          %v2820 = vadd.f32 %v2611, %v2625
          %v2821 = vadd.f32 %v2612, %v2629
          %v2822 = vadd.f32 %v2613, %v2621
          %v2823 = vadd.f32 %v2614, %v2625
          %v2824 = vadd.f32 %v2615, %v2629
          %v2825 = vpack.c.bf16 %v2636, %v2633
          %v2826 = vpack.c.bf16 %v2637, %v2634
          %v2827 = vpack.c.bf16 %v2638, %v2635
          %v2828 = vpack.c.bf16 %v2642, %v2639
          %v2829 = vpack.c.bf16 %v2643, %v2640
          %v2830 = vpack.c.bf16 %v2644, %v2641
          %v2831 = vpack.c.bf16 %v2648, %v2645
          %v2832 = vpack.c.bf16 %v2649, %v2646
          %v2833 = vpack.c.bf16 %v2650, %v2647
          %v2834 = vpack.c.bf16 %v2654, %v2651
          %v2835 = vpack.c.bf16 %v2655, %v2652
          %v2836 = vpack.c.bf16 %v2656, %v2653
          %v2837 = vpack.c.bf16 %v2660, %v2657
          %v2838 = vpack.c.bf16 %v2661, %v2658
          %v2839 = vpack.c.bf16 %v2662, %v2659
          %v2840 = vpack.c.bf16 %v2666, %v2663
          %v2841 = vpack.c.bf16 %v2667, %v2664
          %v2842 = vpack.c.bf16 %v2668, %v2665
          %v2843 = vpack.c.bf16 %v2672, %v2669
          %v2844 = vpack.c.bf16 %v2673, %v2670
          %v2845 = vpack.c.bf16 %v2674, %v2671
          %v2846 = vpack.c.bf16 %v2678, %v2675
          %v2847 = vpack.c.bf16 %v2679, %v2676
          %v2848 = vpack.c.bf16 %v2680, %v2677
          %v2849 = vpack.c.bf16 %v2684, %v2681
          %v2850 = vpack.c.bf16 %v2685, %v2682
          %v2851 = vpack.c.bf16 %v2686, %v2683
          %v2852 = vpack.c.bf16 %v2690, %v2687
          %v2853 = vpack.c.bf16 %v2691, %v2688
          %v2854 = vpack.c.bf16 %v2692, %v2689
          %v2855 = vpack.c.bf16 %v2696, %v2693
          %v2856 = vpack.c.bf16 %v2697, %v2694
          %v2857 = vpack.c.bf16 %v2698, %v2695
          %v2858 = vpack.c.bf16 %v2702, %v2699
          %v2859 = vpack.c.bf16 %v2703, %v2700
          %v2860 = vpack.c.bf16 %v2704, %v2701
          %v2861 = vpack.c.bf16 %v2708, %v2705
          %v2862 = vpack.c.bf16 %v2709, %v2706
          %v2863 = vpack.c.bf16 %v2710, %v2707
          %v2864 = vpack.c.bf16 %v2714, %v2711
          %v2865 = vpack.c.bf16 %v2715, %v2712
          %v2866 = vpack.c.bf16 %v2716, %v2713
          %v2867 = vpack.c.bf16 %v2720, %v2717
          %v2868 = vpack.c.bf16 %v2721, %v2718
          %v2869 = vpack.c.bf16 %v2722, %v2719
          %v2870 = vpack.c.bf16 %v2726, %v2723
          %v2871 = vpack.c.bf16 %v2727, %v2724
          %v2872 = vpack.c.bf16 %v2728, %v2725
          %v2873 = vpack.c.bf16 %v2732, %v2729
          %v2874 = vpack.c.bf16 %v2733, %v2730
          %v2875 = vpack.c.bf16 %v2734, %v2731
          %v2876 = vpack.c.bf16 %v2738, %v2735
          %v2877 = vpack.c.bf16 %v2739, %v2736
          %v2878 = vpack.c.bf16 %v2740, %v2737
          %v2879 = vpack.c.bf16 %v2744, %v2741
          %v2880 = vpack.c.bf16 %v2745, %v2742
          %v2881 = vpack.c.bf16 %v2746, %v2743
          %v2882 = vpack.c.bf16 %v2750, %v2747
          %v2883 = vpack.c.bf16 %v2751, %v2748
          %v2884 = vpack.c.bf16 %v2752, %v2749
          %v2885 = vpack.c.bf16 %v2756, %v2753
          %v2886 = vpack.c.bf16 %v2757, %v2754
          %v2887 = vpack.c.bf16 %v2758, %v2755
          %v2888 = vpack.c.bf16 %v2762, %v2759
          %v2889 = vpack.c.bf16 %v2763, %v2760
          %v2890 = vpack.c.bf16 %v2764, %v2761
          %v2891 = vpack.c.bf16 %v2768, %v2765
          %v2892 = vpack.c.bf16 %v2769, %v2766
          %v2893 = vpack.c.bf16 %v2770, %v2767
          %v2894 = vpack.c.bf16 %v2774, %v2771
          %v2895 = vpack.c.bf16 %v2775, %v2772
          %v2896 = vpack.c.bf16 %v2776, %v2773
          %v2897 = vpack.c.bf16 %v2780, %v2777
          %v2898 = vpack.c.bf16 %v2781, %v2778
          %v2899 = vpack.c.bf16 %v2782, %v2779
          %v2900 = vpack.c.bf16 %v2786, %v2783
          %v2901 = vpack.c.bf16 %v2787, %v2784
          %v2902 = vpack.c.bf16 %v2788, %v2785
          %v2903 = vpack.c.bf16 %v2792, %v2789
          %v2904 = vpack.c.bf16 %v2793, %v2790
          %v2905 = vpack.c.bf16 %v2794, %v2791
          %v2906 = vpack.c.bf16 %v2798, %v2795
          %v2907 = vpack.c.bf16 %v2799, %v2796
          %v2908 = vpack.c.bf16 %v2800, %v2797
          %v2909 = vpack.c.bf16 %v2804, %v2801
          %v2910 = vpack.c.bf16 %v2805, %v2802
          %v2911 = vpack.c.bf16 %v2806, %v2803
          %v2912 = vpack.c.bf16 %v2810, %v2807
          %v2913 = vpack.c.bf16 %v2811, %v2808
          %v2914 = vpack.c.bf16 %v2812, %v2809
          %v2915 = vpack.c.bf16 %v2816, %v2813
          %v2916 = vpack.c.bf16 %v2817, %v2814
          %v2917 = vpack.c.bf16 %v2818, %v2815
          %v2918 = vpack.c.bf16 %v2822, %v2819
          %v2919 = vpack.c.bf16 %v2823, %v2820
          %v2920 = vpack.c.bf16 %v2824, %v2821
          %v3017 = vunpack.c.l.b16 %v2825
          %v3018 = vunpack.c.l.b16 %v2826
          %v3019 = vunpack.c.l.b16 %v2827
          %v3020 = vunpack.c.h.b16 %v2825
          %v3021 = vunpack.c.h.b16 %v2826
          %v3022 = vunpack.c.h.b16 %v2827
          %v3023 = vunpack.c.l.b16 %v2828
          %v3024 = vunpack.c.l.b16 %v2829
          %v3025 = vunpack.c.l.b16 %v2830
          %v3026 = vunpack.c.h.b16 %v2828
          %v3027 = vunpack.c.h.b16 %v2829
          %v3028 = vunpack.c.h.b16 %v2830
          %v3029 = vunpack.c.l.b16 %v2831
          %v3030 = vunpack.c.l.b16 %v2832
          %v3031 = vunpack.c.l.b16 %v2833
          %v3032 = vunpack.c.h.b16 %v2831
          %v3033 = vunpack.c.h.b16 %v2832
          %v3034 = vunpack.c.h.b16 %v2833
          %v3035 = vunpack.c.l.b16 %v2834
          %v3036 = vunpack.c.l.b16 %v2835
          %v3037 = vunpack.c.l.b16 %v2836
          %v3038 = vunpack.c.h.b16 %v2834
          %v3039 = vunpack.c.h.b16 %v2835
          %v3040 = vunpack.c.h.b16 %v2836
          %v3041 = vunpack.c.l.b16 %v2837
          %v3042 = vunpack.c.l.b16 %v2838
          %v3043 = vunpack.c.l.b16 %v2839
          %v3044 = vunpack.c.h.b16 %v2837
          %v3045 = vunpack.c.h.b16 %v2838
          %v3046 = vunpack.c.h.b16 %v2839
          %v3047 = vunpack.c.l.b16 %v2840
          %v3048 = vunpack.c.l.b16 %v2841
          %v3049 = vunpack.c.l.b16 %v2842
          %v3050 = vunpack.c.h.b16 %v2840
          %v3051 = vunpack.c.h.b16 %v2841
          %v3052 = vunpack.c.h.b16 %v2842
          %v3053 = vunpack.c.l.b16 %v2843
          %v3054 = vunpack.c.l.b16 %v2844
          %v3055 = vunpack.c.l.b16 %v2845
          %v3056 = vunpack.c.h.b16 %v2843
          %v3057 = vunpack.c.h.b16 %v2844
          %v3058 = vunpack.c.h.b16 %v2845
          %v3059 = vunpack.c.l.b16 %v2846
          %v3060 = vunpack.c.l.b16 %v2847
          %v3061 = vunpack.c.l.b16 %v2848
          %v3062 = vunpack.c.h.b16 %v2846
          %v3063 = vunpack.c.h.b16 %v2847
          %v3064 = vunpack.c.h.b16 %v2848
          %v3065 = vunpack.c.l.b16 %v2849
          %v3066 = vunpack.c.l.b16 %v2850
          %v3067 = vunpack.c.l.b16 %v2851
          %v3068 = vunpack.c.h.b16 %v2849
          %v3069 = vunpack.c.h.b16 %v2850
          %v3070 = vunpack.c.h.b16 %v2851
          %v3071 = vunpack.c.l.b16 %v2852
          %v3072 = vunpack.c.l.b16 %v2853
          %v3073 = vunpack.c.l.b16 %v2854
          %v3074 = vunpack.c.h.b16 %v2852
          %v3075 = vunpack.c.h.b16 %v2853
          %v3076 = vunpack.c.h.b16 %v2854
          %v3077 = vunpack.c.l.b16 %v2855
          %v3078 = vunpack.c.l.b16 %v2856
          %v3079 = vunpack.c.l.b16 %v2857
          %v3080 = vunpack.c.h.b16 %v2855
          %v3081 = vunpack.c.h.b16 %v2856
          %v3082 = vunpack.c.h.b16 %v2857
          %v3083 = vunpack.c.l.b16 %v2858
          %v3084 = vunpack.c.l.b16 %v2859
          %v3085 = vunpack.c.l.b16 %v2860
          %v3086 = vunpack.c.h.b16 %v2858
          %v3087 = vunpack.c.h.b16 %v2859
          %v3088 = vunpack.c.h.b16 %v2860
          %v3089 = vunpack.c.l.b16 %v2861
          %v3090 = vunpack.c.l.b16 %v2862
          %v3091 = vunpack.c.l.b16 %v2863
          %v3092 = vunpack.c.h.b16 %v2861
          %v3093 = vunpack.c.h.b16 %v2862
          %v3094 = vunpack.c.h.b16 %v2863
          %v3095 = vunpack.c.l.b16 %v2864
          %v3096 = vunpack.c.l.b16 %v2865
          %v3097 = vunpack.c.l.b16 %v2866
          %v3098 = vunpack.c.h.b16 %v2864
          %v3099 = vunpack.c.h.b16 %v2865
          %v3100 = vunpack.c.h.b16 %v2866
          %v3101 = vunpack.c.l.b16 %v2867
          %v3102 = vunpack.c.l.b16 %v2868
          %v3103 = vunpack.c.l.b16 %v2869
          %v3104 = vunpack.c.h.b16 %v2867
          %v3105 = vunpack.c.h.b16 %v2868
          %v3106 = vunpack.c.h.b16 %v2869
          %v3107 = vunpack.c.l.b16 %v2870
          %v3108 = vunpack.c.l.b16 %v2871
          %v3109 = vunpack.c.l.b16 %v2872
          %v3110 = vunpack.c.h.b16 %v2870
          %v3111 = vunpack.c.h.b16 %v2871
          %v3112 = vunpack.c.h.b16 %v2872
          %v3113 = vunpack.c.l.b16 %v2873
          %v3114 = vunpack.c.l.b16 %v2874
          %v3115 = vunpack.c.l.b16 %v2875
          %v3116 = vunpack.c.h.b16 %v2873
          %v3117 = vunpack.c.h.b16 %v2874
          %v3118 = vunpack.c.h.b16 %v2875
          %v3119 = vunpack.c.l.b16 %v2876
          %v3120 = vunpack.c.l.b16 %v2877
          %v3121 = vunpack.c.l.b16 %v2878
          %v3122 = vunpack.c.h.b16 %v2876
          %v3123 = vunpack.c.h.b16 %v2877
          %v3124 = vunpack.c.h.b16 %v2878
          %v3125 = vunpack.c.l.b16 %v2879
          %v3126 = vunpack.c.l.b16 %v2880
          %v3127 = vunpack.c.l.b16 %v2881
          %v3128 = vunpack.c.h.b16 %v2879
          %v3129 = vunpack.c.h.b16 %v2880
          %v3130 = vunpack.c.h.b16 %v2881
          %v3131 = vunpack.c.l.b16 %v2882
          %v3132 = vunpack.c.l.b16 %v2883
          %v3133 = vunpack.c.l.b16 %v2884
          %v3134 = vunpack.c.h.b16 %v2882
          %v3135 = vunpack.c.h.b16 %v2883
          %v3136 = vunpack.c.h.b16 %v2884
          %v3137 = vunpack.c.l.b16 %v2885
          %v3138 = vunpack.c.l.b16 %v2886
          %v3139 = vunpack.c.l.b16 %v2887
          %v3140 = vunpack.c.h.b16 %v2885
          %v3141 = vunpack.c.h.b16 %v2886
          %v3142 = vunpack.c.h.b16 %v2887
          %v3143 = vunpack.c.l.b16 %v2888
          %v3144 = vunpack.c.l.b16 %v2889
          %v3145 = vunpack.c.l.b16 %v2890
          %v3146 = vunpack.c.h.b16 %v2888
          %v3147 = vunpack.c.h.b16 %v2889
          %v3148 = vunpack.c.h.b16 %v2890
          %v3149 = vunpack.c.l.b16 %v2891
          %v3150 = vunpack.c.l.b16 %v2892
          %v3151 = vunpack.c.l.b16 %v2893
          %v3152 = vunpack.c.h.b16 %v2891
          %v3153 = vunpack.c.h.b16 %v2892
          %v3154 = vunpack.c.h.b16 %v2893
          %v3155 = vunpack.c.l.b16 %v2894
          %v3156 = vunpack.c.l.b16 %v2895
          %v3157 = vunpack.c.l.b16 %v2896
          %v3158 = vunpack.c.h.b16 %v2894
          %v3159 = vunpack.c.h.b16 %v2895
          %v3160 = vunpack.c.h.b16 %v2896
          %v3161 = vunpack.c.l.b16 %v2897
          %v3162 = vunpack.c.l.b16 %v2898
          %v3163 = vunpack.c.l.b16 %v2899
          %v3164 = vunpack.c.h.b16 %v2897
          %v3165 = vunpack.c.h.b16 %v2898
          %v3166 = vunpack.c.h.b16 %v2899
          %v3167 = vunpack.c.l.b16 %v2900
          %v3168 = vunpack.c.l.b16 %v2901
          %v3169 = vunpack.c.l.b16 %v2902
          %v3170 = vunpack.c.h.b16 %v2900
          %v3171 = vunpack.c.h.b16 %v2901
          %v3172 = vunpack.c.h.b16 %v2902
          %v3173 = vunpack.c.l.b16 %v2903
          %v3174 = vunpack.c.l.b16 %v2904
          %v3175 = vunpack.c.l.b16 %v2905
          %v3176 = vunpack.c.h.b16 %v2903
          %v3177 = vunpack.c.h.b16 %v2904
          %v3178 = vunpack.c.h.b16 %v2905
          %v3179 = vunpack.c.l.b16 %v2906
          %v3180 = vunpack.c.l.b16 %v2907
          %v3181 = vunpack.c.l.b16 %v2908
          %v3182 = vunpack.c.h.b16 %v2906
          %v3183 = vunpack.c.h.b16 %v2907
          %v3184 = vunpack.c.h.b16 %v2908
          %v3185 = vunpack.c.l.b16 %v2909
          %v3186 = vunpack.c.l.b16 %v2910
          %v3187 = vunpack.c.l.b16 %v2911
          %v3188 = vunpack.c.h.b16 %v2909
          %v3189 = vunpack.c.h.b16 %v2910
          %v3190 = vunpack.c.h.b16 %v2911
          %v3191 = vunpack.c.l.b16 %v2912
          %v3192 = vunpack.c.l.b16 %v2913
          %v3193 = vunpack.c.l.b16 %v2914
          %v3194 = vunpack.c.h.b16 %v2912
          %v3195 = vunpack.c.h.b16 %v2913
          %v3196 = vunpack.c.h.b16 %v2914
          %v3197 = vunpack.c.l.b16 %v2915
          %v3198 = vunpack.c.l.b16 %v2916
          %v3199 = vunpack.c.l.b16 %v2917
          %v3200 = vunpack.c.h.b16 %v2915
          %v3201 = vunpack.c.h.b16 %v2916
          %v3202 = vunpack.c.h.b16 %v2917
          %v3203 = vunpack.c.l.b16 %v2918
          %v3204 = vunpack.c.l.b16 %v2919
          %v3205 = vunpack.c.l.b16 %v2920
          %v3206 = vunpack.c.h.b16 %v2918
          %v3207 = vunpack.c.h.b16 %v2919
          %v3208 = vunpack.c.h.b16 %v2920
          %v3209 = vpack.c.b16 %v3018, %v3017
          %v3210 = vpack.c.b16 %v3019, %v3019
          %v3211 = vpack.c.b16 %v3021, %v3020
          %v3212 = vpack.c.b16 %v3022, %v3022
          %v3213 = vpack.c.b16 %v3024, %v3023
          %v3214 = vpack.c.b16 %v3025, %v3025
          %v3215 = vpack.c.b16 %v3027, %v3026
          %v3216 = vpack.c.b16 %v3028, %v3028
          %v3217 = vpack.c.b16 %v3030, %v3029
          %v3218 = vpack.c.b16 %v3031, %v3031
          %v3219 = vpack.c.b16 %v3033, %v3032
          %v3220 = vpack.c.b16 %v3034, %v3034
          %v3221 = vpack.c.b16 %v3036, %v3035
          %v3222 = vpack.c.b16 %v3037, %v3037
          %v3223 = vpack.c.b16 %v3039, %v3038
          %v3224 = vpack.c.b16 %v3040, %v3040
          %v3225 = vpack.c.b16 %v3042, %v3041
          %v3226 = vpack.c.b16 %v3043, %v3043
          %v3227 = vpack.c.b16 %v3045, %v3044
          %v3228 = vpack.c.b16 %v3046, %v3046
          %v3229 = vpack.c.b16 %v3048, %v3047
          %v3230 = vpack.c.b16 %v3049, %v3049
          %v3231 = vpack.c.b16 %v3051, %v3050
          %v3232 = vpack.c.b16 %v3052, %v3052
          %v3233 = vpack.c.b16 %v3054, %v3053
          %v3234 = vpack.c.b16 %v3055, %v3055
          %v3235 = vpack.c.b16 %v3057, %v3056
          %v3236 = vpack.c.b16 %v3058, %v3058
          %v3237 = vpack.c.b16 %v3060, %v3059
          %v3238 = vpack.c.b16 %v3061, %v3061
          %v3239 = vpack.c.b16 %v3063, %v3062
          %v3240 = vpack.c.b16 %v3064, %v3064
          %v3241 = vpack.c.b16 %v3066, %v3065
          %v3242 = vpack.c.b16 %v3067, %v3067
          %v3243 = vpack.c.b16 %v3069, %v3068
          %v3244 = vpack.c.b16 %v3070, %v3070
          %v3245 = vpack.c.b16 %v3072, %v3071
          %v3246 = vpack.c.b16 %v3073, %v3073
          %v3247 = vpack.c.b16 %v3075, %v3074
          %v3248 = vpack.c.b16 %v3076, %v3076
          %v3249 = vpack.c.b16 %v3078, %v3077
          %v3250 = vpack.c.b16 %v3079, %v3079
          %v3251 = vpack.c.b16 %v3081, %v3080
          %v3252 = vpack.c.b16 %v3082, %v3082
          %v3253 = vpack.c.b16 %v3084, %v3083
          %v3254 = vpack.c.b16 %v3085, %v3085
          %v3255 = vpack.c.b16 %v3087, %v3086
          %v3256 = vpack.c.b16 %v3088, %v3088
          %v3257 = vpack.c.b16 %v3090, %v3089
          %v3258 = vpack.c.b16 %v3091, %v3091
          %v3259 = vpack.c.b16 %v3093, %v3092
          %v3260 = vpack.c.b16 %v3094, %v3094
          %v3261 = vpack.c.b16 %v3096, %v3095
          %v3262 = vpack.c.b16 %v3097, %v3097
          %v3263 = vpack.c.b16 %v3099, %v3098
          %v3264 = vpack.c.b16 %v3100, %v3100
          %v3265 = vpack.c.b16 %v3102, %v3101
          %v3266 = vpack.c.b16 %v3103, %v3103
          %v3267 = vpack.c.b16 %v3105, %v3104
          %v3268 = vpack.c.b16 %v3106, %v3106
          %v3269 = vpack.c.b16 %v3108, %v3107
          %v3270 = vpack.c.b16 %v3109, %v3109
          %v3271 = vpack.c.b16 %v3111, %v3110
          %v3272 = vpack.c.b16 %v3112, %v3112
          %v3273 = vpack.c.b16 %v3114, %v3113
          %v3274 = vpack.c.b16 %v3115, %v3115
          %v3275 = vpack.c.b16 %v3117, %v3116
          %v3276 = vpack.c.b16 %v3118, %v3118
          %v3277 = vpack.c.b16 %v3120, %v3119
          %v3278 = vpack.c.b16 %v3121, %v3121
          %v3279 = vpack.c.b16 %v3123, %v3122
          %v3280 = vpack.c.b16 %v3124, %v3124
          %v3281 = vpack.c.b16 %v3126, %v3125
          %v3282 = vpack.c.b16 %v3127, %v3127
          %v3283 = vpack.c.b16 %v3129, %v3128
          %v3284 = vpack.c.b16 %v3130, %v3130
          %v3285 = vpack.c.b16 %v3132, %v3131
          %v3286 = vpack.c.b16 %v3133, %v3133
          %v3287 = vpack.c.b16 %v3135, %v3134
          %v3288 = vpack.c.b16 %v3136, %v3136
          %v3289 = vpack.c.b16 %v3138, %v3137
          %v3290 = vpack.c.b16 %v3139, %v3139
          %v3291 = vpack.c.b16 %v3141, %v3140
          %v3292 = vpack.c.b16 %v3142, %v3142
          %v3293 = vpack.c.b16 %v3144, %v3143
          %v3294 = vpack.c.b16 %v3145, %v3145
          %v3295 = vpack.c.b16 %v3147, %v3146
          %v3296 = vpack.c.b16 %v3148, %v3148
          %v3297 = vpack.c.b16 %v3150, %v3149
          %v3298 = vpack.c.b16 %v3151, %v3151
          %v3299 = vpack.c.b16 %v3153, %v3152
          %v3300 = vpack.c.b16 %v3154, %v3154
          %v3301 = vpack.c.b16 %v3156, %v3155
          %v3302 = vpack.c.b16 %v3157, %v3157
          %v3303 = vpack.c.b16 %v3159, %v3158
          %v3304 = vpack.c.b16 %v3160, %v3160
          %v3305 = vpack.c.b16 %v3162, %v3161
          %v3306 = vpack.c.b16 %v3163, %v3163
          %v3307 = vpack.c.b16 %v3165, %v3164
          %v3308 = vpack.c.b16 %v3166, %v3166
          %v3309 = vpack.c.b16 %v3168, %v3167
          %v3310 = vpack.c.b16 %v3169, %v3169
          %v3311 = vpack.c.b16 %v3171, %v3170
          %v3312 = vpack.c.b16 %v3172, %v3172
          %v3313 = vpack.c.b16 %v3174, %v3173
          %v3314 = vpack.c.b16 %v3175, %v3175
          %v3315 = vpack.c.b16 %v3177, %v3176
          %v3316 = vpack.c.b16 %v3178, %v3178
          %v3317 = vpack.c.b16 %v3180, %v3179
          %v3318 = vpack.c.b16 %v3181, %v3181
          %v3319 = vpack.c.b16 %v3183, %v3182
          %v3320 = vpack.c.b16 %v3184, %v3184
          %v3321 = vpack.c.b16 %v3186, %v3185
          %v3322 = vpack.c.b16 %v3187, %v3187
          %v3323 = vpack.c.b16 %v3189, %v3188
          %v3324 = vpack.c.b16 %v3190, %v3190
          %v3325 = vpack.c.b16 %v3192, %v3191
          %v3326 = vpack.c.b16 %v3193, %v3193
          %v3327 = vpack.c.b16 %v3195, %v3194
          %v3328 = vpack.c.b16 %v3196, %v3196
          %v3329 = vpack.c.b16 %v3198, %v3197
          %v3330 = vpack.c.b16 %v3199, %v3199
          %v3331 = vpack.c.b16 %v3201, %v3200
          %v3332 = vpack.c.b16 %v3202, %v3202
          %v3333 = vpack.c.b16 %v3204, %v3203
          %v3334 = vpack.c.b16 %v3205, %v3205
          %v3335 = vpack.c.b16 %v3207, %v3206
          %v3336 = vpack.c.b16 %v3208, %v3208
          %3465 = vst [vmem:[%s294] sm:$0xff] %v3209
          %3466 = vst [vmem:[%s294 + $0x8] sm:$0xf] %v3210
          %3467 = vst [vmem:[%s294 + $0xc] sm:$0xff] %v3211
          %3468 = vst [vmem:[%s294 + $0x14] sm:$0xf] %v3212
          %3469 = vst [vmem:[%s294 + $0x18] sm:$0xff] %v3213
          %3470 = vst [vmem:[%s294 + $0x20] sm:$0xf] %v3214
          %3471 = vst [vmem:[%s294 + $0x24] sm:$0xff] %v3215
          %3472 = vst [vmem:[%s294 + $0x2c] sm:$0xf] %v3216
          %3473 = vst [vmem:[%s294 + $0x30] sm:$0xff] %v3217
          %3474 = vst [vmem:[%s294 + $0x38] sm:$0xf] %v3218
          %3475 = vst [vmem:[%s294 + $0x3c] sm:$0xff] %v3219
          %3476 = vst [vmem:[%s294 + $0x44] sm:$0xf] %v3220
          %3477 = vst [vmem:[%s294 + $0x48] sm:$0xff] %v3221
          %3478 = vst [vmem:[%s294 + $0x50] sm:$0xf] %v3222
          %3479 = vst [vmem:[%s294 + $0x54] sm:$0xff] %v3223
          %3480 = vst [vmem:[%s294 + $0x5c] sm:$0xf] %v3224
          %3481 = vst [vmem:[%s294 + $0x60] sm:$0xff] %v3225
          %3482 = vst [vmem:[%s294 + $0x68] sm:$0xf] %v3226
          %3483 = vst [vmem:[%s294 + $0x6c] sm:$0xff] %v3227
          %3484 = vst [vmem:[%s294 + $0x74] sm:$0xf] %v3228
          %3485 = vst [vmem:[%s294 + $0x78] sm:$0xff] %v3229
          %3486 = vst [vmem:[%s294 + $0x80] sm:$0xf] %v3230
          %3487 = vst [vmem:[%s294 + $0x84] sm:$0xff] %v3231
          %3488 = vst [vmem:[%s294 + $0x8c] sm:$0xf] %v3232
          %3489 = vst [vmem:[%s294 + $0x90] sm:$0xff] %v3233
          %3490 = vst [vmem:[%s294 + $0x98] sm:$0xf] %v3234
          %3491 = vst [vmem:[%s294 + $0x9c] sm:$0xff] %v3235
          %3492 = vst [vmem:[%s294 + $0xa4] sm:$0xf] %v3236
          %3493 = vst [vmem:[%s294 + $0xa8] sm:$0xff] %v3237
          %3494 = vst [vmem:[%s294 + $0xb0] sm:$0xf] %v3238
          %3495 = vst [vmem:[%s294 + $0xb4] sm:$0xff] %v3239
          %3496 = vst [vmem:[%s294 + $0xbc] sm:$0xf] %v3240
          %3497 = vst [vmem:[%s294 + $0xc0] sm:$0xff] %v3241
          %3498 = vst [vmem:[%s294 + $0xc8] sm:$0xf] %v3242
          %3499 = vst [vmem:[%s294 + $0xcc] sm:$0xff] %v3243
          %3500 = vst [vmem:[%s294 + $0xd4] sm:$0xf] %v3244
          %3501 = vst [vmem:[%s294 + $0xd8] sm:$0xff] %v3245
          %3502 = vst [vmem:[%s294 + $0xe0] sm:$0xf] %v3246
          %3503 = vst [vmem:[%s294 + $0xe4] sm:$0xff] %v3247
          %3504 = vst [vmem:[%s294 + $0xec] sm:$0xf] %v3248
          %3505 = vst [vmem:[%s294 + $0xf0] sm:$0xff] %v3249
          %3506 = vst [vmem:[%s294 + $0xf8] sm:$0xf] %v3250
          %3507 = vst [vmem:[%s294 + $0xfc] sm:$0xff] %v3251
          %3508 = vst [vmem:[%s294 + $0x104] sm:$0xf] %v3252
          %3509 = vst [vmem:[%s294 + $0x108] sm:$0xff] %v3253
          %3510 = vst [vmem:[%s294 + $0x110] sm:$0xf] %v3254
          %3511 = vst [vmem:[%s294 + $0x114] sm:$0xff] %v3255
          %3512 = vst [vmem:[%s294 + $0x11c] sm:$0xf] %v3256
          %3513 = vst [vmem:[%s294 + $0x120] sm:$0xff] %v3257
          %3514 = vst [vmem:[%s294 + $0x128] sm:$0xf] %v3258
          %3515 = vst [vmem:[%s294 + $0x12c] sm:$0xff] %v3259
          %3516 = vst [vmem:[%s294 + $0x134] sm:$0xf] %v3260
          %3517 = vst [vmem:[%s294 + $0x138] sm:$0xff] %v3261
          %3518 = vst [vmem:[%s294 + $0x140] sm:$0xf] %v3262
          %3519 = vst [vmem:[%s294 + $0x144] sm:$0xff] %v3263
          %3520 = vst [vmem:[%s294 + $0x14c] sm:$0xf] %v3264
          %3521 = vst [vmem:[%s294 + $0x150] sm:$0xff] %v3265
          %3522 = vst [vmem:[%s294 + $0x158] sm:$0xf] %v3266
          %3523 = vst [vmem:[%s294 + $0x15c] sm:$0xff] %v3267
          %3524 = vst [vmem:[%s294 + $0x164] sm:$0xf] %v3268
          %3525 = vst [vmem:[%s294 + $0x168] sm:$0xff] %v3269
          %3526 = vst [vmem:[%s294 + $0x170] sm:$0xf] %v3270
          %3527 = vst [vmem:[%s294 + $0x174] sm:$0xff] %v3271
          %3528 = vst [vmem:[%s294 + $0x17c] sm:$0xf] %v3272
          %3529 = vst [vmem:[%s294 + $0x180] sm:$0xff] %v3273
          %3530 = vst [vmem:[%s294 + $0x188] sm:$0xf] %v3274
          %3531 = vst [vmem:[%s294 + $0x18c] sm:$0xff] %v3275
          %3532 = vst [vmem:[%s294 + $0x194] sm:$0xf] %v3276
          %3533 = vst [vmem:[%s294 + $0x198] sm:$0xff] %v3277
          %3534 = vst [vmem:[%s294 + $0x1a0] sm:$0xf] %v3278
          %3535 = vst [vmem:[%s294 + $0x1a4] sm:$0xff] %v3279
          %3536 = vst [vmem:[%s294 + $0x1ac] sm:$0xf] %v3280
          %3537 = vst [vmem:[%s294 + $0x1b0] sm:$0xff] %v3281
          %3538 = vst [vmem:[%s294 + $0x1b8] sm:$0xf] %v3282
          %3539 = vst [vmem:[%s294 + $0x1bc] sm:$0xff] %v3283
          %3540 = vst [vmem:[%s294 + $0x1c4] sm:$0xf] %v3284
          %3541 = vst [vmem:[%s294 + $0x1c8] sm:$0xff] %v3285
          %3542 = vst [vmem:[%s294 + $0x1d0] sm:$0xf] %v3286
          %3543 = vst [vmem:[%s294 + $0x1d4] sm:$0xff] %v3287
          %3544 = vst [vmem:[%s294 + $0x1dc] sm:$0xf] %v3288
          %3545 = vst [vmem:[%s294 + $0x1e0] sm:$0xff] %v3289
          %3546 = vst [vmem:[%s294 + $0x1e8] sm:$0xf] %v3290
          %3547 = vst [vmem:[%s294 + $0x1ec] sm:$0xff] %v3291
          %3548 = vst [vmem:[%s294 + $0x1f4] sm:$0xf] %v3292
          %3549 = vst [vmem:[%s294 + $0x1f8] sm:$0xff] %v3293
          %3550 = vst [vmem:[%s294 + $0x200] sm:$0xf] %v3294
          %3551 = vst [vmem:[%s294 + $0x204] sm:$0xff] %v3295
          %3552 = vst [vmem:[%s294 + $0x20c] sm:$0xf] %v3296
          %3553 = vst [vmem:[%s294 + $0x210] sm:$0xff] %v3297
          %3554 = vst [vmem:[%s294 + $0x218] sm:$0xf] %v3298
          %3555 = vst [vmem:[%s294 + $0x21c] sm:$0xff] %v3299
          %3556 = vst [vmem:[%s294 + $0x224] sm:$0xf] %v3300
          %3557 = vst [vmem:[%s294 + $0x228] sm:$0xff] %v3301
          %3558 = vst [vmem:[%s294 + $0x230] sm:$0xf] %v3302
          %3559 = vst [vmem:[%s294 + $0x234] sm:$0xff] %v3303
          %3560 = vst [vmem:[%s294 + $0x23c] sm:$0xf] %v3304
          %3561 = vst [vmem:[%s294 + $0x240] sm:$0xff] %v3305
          %3562 = vst [vmem:[%s294 + $0x248] sm:$0xf] %v3306
          %3563 = vst [vmem:[%s294 + $0x24c] sm:$0xff] %v3307
          %3564 = vst [vmem:[%s294 + $0x254] sm:$0xf] %v3308
          %3565 = vst [vmem:[%s294 + $0x258] sm:$0xff] %v3309
          %3566 = vst [vmem:[%s294 + $0x260] sm:$0xf] %v3310
          %3567 = vst [vmem:[%s294 + $0x264] sm:$0xff] %v3311
          %3568 = vst [vmem:[%s294 + $0x26c] sm:$0xf] %v3312
          %3569 = vst [vmem:[%s294 + $0x270] sm:$0xff] %v3313
          %3570 = vst [vmem:[%s294 + $0x278] sm:$0xf] %v3314
          %3571 = vst [vmem:[%s294 + $0x27c] sm:$0xff] %v3315
          %3572 = vst [vmem:[%s294 + $0x284] sm:$0xf] %v3316
          %3573 = vst [vmem:[%s294 + $0x288] sm:$0xff] %v3317
          %3574 = vst [vmem:[%s294 + $0x290] sm:$0xf] %v3318
          %3575 = vst [vmem:[%s294 + $0x294] sm:$0xff] %v3319
          %3576 = vst [vmem:[%s294 + $0x29c] sm:$0xf] %v3320
          %3577 = vst [vmem:[%s294 + $0x2a0] sm:$0xff] %v3321
          %3578 = vst [vmem:[%s294 + $0x2a8] sm:$0xf] %v3322
          %3579 = vst [vmem:[%s294 + $0x2ac] sm:$0xff] %v3323
          %3580 = vst [vmem:[%s294 + $0x2b4] sm:$0xf] %v3324
          %3581 = vst [vmem:[%s294 + $0x2b8] sm:$0xff] %v3325
          %3582 = vst [vmem:[%s294 + $0x2c0] sm:$0xf] %v3326
          %3583 = vst [vmem:[%s294 + $0x2c4] sm:$0xff] %v3327
          %3584 = vst [vmem:[%s294 + $0x2cc] sm:$0xf] %v3328
          %3585 = vst [vmem:[%s294 + $0x2d0] sm:$0xff] %v3329
          %3586 = vst [vmem:[%s294 + $0x2d8] sm:$0xf] %v3330
          %3587 = vst [vmem:[%s294 + $0x2dc] sm:$0xff] %v3331
          %3588 = vst [vmem:[%s294 + $0x2e4] sm:$0xf] %v3332
          %3589 = vst [vmem:[%s294 + $0x2e8] sm:$0xff] %v3333
          %3590 = vst [vmem:[%s294 + $0x2f0] sm:$0xf] %v3334
          %3591 = vst [vmem:[%s294 + $0x2f4] sm:$0xff] %v3335
          %3592 = vst [vmem:[%s294 + $0x2fc] sm:$0xf] %v3336
        $region52: #{tpu_custom_call.1} parent=31 // pred_fallthru
          _
        %s3593 = sand.u32 %s134, 1
        %s3594 = scalar_lea.sflag [#allocation5], %s3593
        %s3595 = sand.u32 %s134, 1
        %s3596 = smul.addr %s3595, 768
        %s3597 = scalar_lea.vmem [#allocation9], %s3596
        // Predicated region
        $region53: #{tpu_custom_call.1} parent=31 // pred_check
          %p3598 = pneg %p144
        $region54: #{tpu_custom_call.1} parent=31 // pred_check_branch
          %3600 = sbr.rel (%p3598) target = $region56
        $region55: #{tpu_custom_call.1} parent=31 // pred_region
          %s3601 = smul.u32 64, %s28
          %s3602 = smul.u32 3, %s29
          %s3604 = ssub.s32 12288, 12288
          %3605 = vsyncadd %s3594, %s3604
          %s3606 = smul.addr %s3601, 6
          %s3607 = sadd.s32 %s3602, %s3606
          %s3608 = smul.addr %s3607, 64
          %s3609 = scalar_lea.hbm %s3, %s3608
          %s3610 = sshll.u32 %s3597, 4
          %s3611 = int_to_ptr.vmem [resolvable:$true] %s3610
          %3616 = dma.vmem_to_hbm [thread:$0]  %s3611, 12288, %s3609, %s3594, 192, 384, 12
        $region56: #{tpu_custom_call.1} parent=31 // pred_fallthru
          _
      $region32: #{tpu_custom_call.1} parent=5 // pred_fallthru
        _
      %p3617 = scmp.le.s32.totalorder 2, %s18
      // Predicated region
      $region57: #{tpu_custom_call.1} parent=5 // pred_check
        %p3618 = pneg %p3617
      $region58: #{tpu_custom_call.1} parent=5 // pred_check_branch
        %3620 = sbr.rel (%p3618) target = $region60
      $region59: #{tpu_custom_call.1} parent=5 // pred_region
        %s3621 = ssub.s32 %s18, 2
        // Predicated region
        $region61: #{tpu_custom_call.1} parent=59 // pred_check
          %p3622 = pneg %p150
        $region62: #{tpu_custom_call.1} parent=59 // pred_check_branch
          %3624 = sbr.rel (%p3622) target = $region64
        $region63: #{tpu_custom_call.1} parent=59 // pred_region
          %s3625 = sand.u32 %s135, 1
          %s3626 = scalar_lea.sflag [#allocation5], %s3625
          %s3627 = sand.u32 %s135, 1
          %s3628 = smul.addr %s3627, 768
          %s3629 = scalar_lea.vmem [#allocation9], %s3628
          %3630 = dma.done %s3626, 12288
        $region64: #{tpu_custom_call.1} parent=59 // pred_fallthru
          _
      $region60: #{tpu_custom_call.1} parent=5 // pred_fallthru
        _
    $region6: #{tpu_custom_call.1} parent=1 // loop_footer
      %s22 = sadd.s32 1, %s18
    $region7: #{tpu_custom_call.1} parent=1 // loop_footer_branch
      %17 = sbr.rel target = $region3
    $region8: #{tpu_custom_call.1} parent=1 // loop_exit
      _
    %3631 = vsyncpa [#allocation4], 1
    %s3632 = scalar_lea.sflag [#allocation4], 1
    %3633 = vsyncpa %s3632, 1
    %3634 = vsyncpa [#allocation7], 1
    %s3635 = scalar_lea.sflag [#allocation7], 1
    %3636 = vsyncpa %s3635, 1
    %3637 = vsyncpa [#allocation5], 1
    %s3638 = scalar_lea.sflag [#allocation5], 1
    %3639 = vsyncpa %s3638, 1

</llo_original>
